<compile_context>
chip_gen: v5e
topology: v5e:2x2
jax: 0.10.0
libtpu: 0.0.40
codegen_flags: <defaults>
</compile_context>

<pallas_src>
from functools import partial

import jax
import jax.numpy as jnp
from jax import lax
from jax.experimental import pallas as pl
from jax.experimental.pallas import tpu as pltpu

# ------------------------- small test configuration -------------------------
BATCH = 2
CHANNELS = 16          # model_dim analogue
SAMPLES = 256          # n_samples analogue
N_ATOMS = 8
ATOM_SIZE = 64
N_TO_KEEP = 512        # hard-coded in Model.forward: sparsify(x, n_to_keep=512)
DILATIONS = (1, 2, 4, 8, 16, 32, 64, 128, 256, 512, 1024, 1)
N_ROOMS = 4
LEAK = 0.2
KSIZE = 7


# ------------------------------ in-kernel util -------------------------------
def _shift_time(x, offset, t, lane_idx):
    """y[..., i] = x[..., i + offset], zero outside [0, t).

    XLU roll + one VPU mask; offset is a Python int, so branches are trace-time.
    """
    if offset == 0:
        return x
    if offset >= t or offset <= -t:
        return jnp.zeros_like(x)
    rolled = pltpu.roll(x, shift=(-offset) % t, axis=x.ndim - 1)
    if offset > 0:                       # pulled from the right: zero the tail
        return jnp.where(lane_idx < (t - offset), rolled, 0.0)
    return jnp.where(lane_idx >= (-offset), rolled, 0.0)  # zero the head


# -------- kernel 1: to_channels + encoder + summary mean + to_atoms ----------
# TODO(synk): AntiCausalStack source not provided; standard semantics implemented:
# per dilation a k=2 anti-causal (right-padded) dilated conv, leaky_relu(0.2),
# residual add; the stack output is the sum of per-block outputs.
def _frontend_kernel(x_ref, wc_ref, bc_ref, we_ref, be_ref, wa_ref, ba_ref,
                     sum_ref, feat_ref, *, c, a, t, k, dilations):
    x = x_ref[0]                                          # (1, t)
    lane1 = lax.broadcasted_iota(jnp.int32, (1, t), 1)    # hoisted masks
    lanec = lax.broadcasted_iota(jnp.int32, (c, t), 1)
    half = k // 2

    # --- to_channels: Conv1d(1, c, 7, pad=3); cin=1 -> 7 VPU outer-product FMAs
    wc = wc_ref[...]                                      # (c, k)
    h = jnp.zeros((c, t), jnp.float32)
    for j in range(k):
        xs = _shift_time(x, j - half, t, lane1)           # (1, t)
        h = h + wc[:, j:j + 1] * xs                       # (c,1)*(1,t) -> (c,t)
    h = h + bc_ref[...]                                   # (c, 1) bias

    # --- AntiCausalStack: one fused (c,2c)@(2c,t) matmul per dilation block ---
    total = jnp.zeros((c, t), jnp.float32)
    for i, d in enumerate(dilations):
        if d >= t:
            # the +d tap reads entirely past the end (zero padding) -> tap-0 only
            y = jnp.dot(we_ref[i][:, :c], h, preferred_element_type=jnp.float32)
        else:
            shifted = _shift_time(h, d, t, lanec)         # h[:, j + d], zero past end
            xin = jnp.concatenate([h, shifted], axis=0)   # (2c, t)
            y = jnp.dot(we_ref[i], xin, preferred_element_type=jnp.float32)
        y = y + be_ref[i]
        y = jnp.where(y > 0, y, LEAK * y)                 # leaky_relu(0.2)
        h = h + y                                         # residual
        total = total + h                                 # skip-sum stack output

    # --- summary = mean over time, computed in-kernel (skips an HBM round-trip)
    sum_ref[0] = jnp.sum(total, axis=-1, keepdims=True) * (1.0 / t)   # (c, 1)

    # --- to_atoms: Conv1d(c, a, 7, pad=3) via im2col, single (a,7c)@(7c,t) dot ---
    taps = [_shift_time(total, j - half, t, lanec) for j in range(k)]
    stack = jnp.concatenate(taps, axis=0)                 # (7c, t), row = j*c + ch
    feats = jnp.dot(wa_ref[...], stack, preferred_element_type=jnp.float32)
    feat_ref[0] = feats + ba_ref[...]                     # (a, 1) bias


def frontend(x, p):
    bsz, _, t = x.shape
    c, a, k = CHANNELS, N_ATOMS, KSIZE
    nl = len(DILATIONS)
    wc = p["to_channels_w"].reshape(c, k)                                   # (c,1,7) -> (c,7)
    bc = p["to_channels_b"].reshape(c, 1)
    we = jnp.concatenate([p["enc_w"][..., 0], p["enc_w"][..., 1]], axis=-1)  # (L,c,2c)
    be = p["enc_b"]                                                          # (L,c,1)
    wa = jnp.transpose(p["to_atoms_w"], (0, 2, 1)).reshape(a, k * c)         # (a,7c), col = j*c + ch
    ba = p["to_atoms_b"].reshape(a, 1)
    kernel = partial(_frontend_kernel, c=c, a=a, t=t, k=k, dilations=tuple(DILATIONS))
    summary, feats = pl.pallas_call(
        kernel,
        out_shape=(jax.ShapeDtypeStruct((bsz, c, 1), jnp.float32),
                   jax.ShapeDtypeStruct((bsz, a, t), jnp.float32)),
        grid=(bsz,),
        in_specs=[
            pl.BlockSpec((1, 1, t), lambda i: (i, 0, 0)),
            pl.BlockSpec((c, k), lambda i: (0, 0)),
            pl.BlockSpec((c, 1), lambda i: (0, 0)),
            pl.BlockSpec((nl, c, 2 * c), lambda i: (0, 0, 0)),
            pl.BlockSpec((nl, c, 1), lambda i: (0, 0, 0)),
            pl.BlockSpec((a, k * c), lambda i: (0, 0)),
            pl.BlockSpec((a, 1), lambda i: (0, 0)),
        ],
        out_specs=(pl.BlockSpec((1, c, 1), lambda i: (i, 0, 0)),
                   pl.BlockSpec((1, a, t), lambda i: (i, 0, 0))),
        compiler_params=pltpu.CompilerParams(dimension_semantics=("parallel",)),
    )(x, wc, bc, we, be, wa, ba)
    return summary, feats


# -------------- kernel 2: sparsify + relu + atom synthesis (fused) -----------
def _sparse_synth_kernel(th_ref, f_ref, d_ref, sparse_ref, dry_ref, *, a, t, asize):
    th = th_ref[pl.program_id(0)]                 # per-batch k-th largest value (SMEM scalar)
    f = f_ref[0]                                  # (a, t)
    sp = jnp.maximum(jnp.where(f >= th, f, 0.0), 0.0)   # sparsify + relu
    sparse_ref[0] = sp

    # q[kk, j] = sum_a atoms[a, kk] * sp[a, j]           (asize, t) on the MXU
    q = lax.dot_general(d_ref[...], sp, dimension_numbers=(((0,), (0,)), ((), ())),
                        preferred_element_type=jnp.float32)
    # Align q[kk, j] -> lane j + kk with ONE per-sublane strided roll, zero the
    # wrapped lanes, then a sublane (XLU) reduce: dry[j] = sum_kk q[kk, j - kk].
    aligned = pltpu.roll(q, shift=0, axis=1, stride=1, stride_axis=0)
    row = lax.broadcasted_iota(jnp.int32, (asize, t), 0)
    col = lax.broadcasted_iota(jnp.int32, (asize, t), 1)
    aligned = jnp.where(col >= row, aligned, 0.0)
    dry_ref[0] = jnp.sum(aligned, axis=0, keepdims=True)  # (1, t)


def sparse_synth(feats, thresh, atoms):
    bsz, a, t = feats.shape
    asize = atoms.shape[1]
    kernel = partial(_sparse_synth_kernel, a=a, t=t, asize=asize)
    sparse, dry = pl.pallas_call(
        kernel,
        out_shape=(jax.ShapeDtypeStruct((bsz, a, t), jnp.float32),
                   jax.ShapeDtypeStruct((bsz, 1, t), jnp.float32)),
        grid_spec=pltpu.PrefetchScalarGridSpec(
            num_scalar_prefetch=1,                       # thresholds -> SMEM
            grid=(bsz,),
            in_specs=[
                pl.BlockSpec((1, a, t), lambda i, th: (i, 0, 0)),
                pl.BlockSpec((a, asize), lambda i, th: (0, 0)),
            ],
            out_specs=(pl.BlockSpec((1, a, t), lambda i, th: (i, 0, 0)),
                       pl.BlockSpec((1, 1, t), lambda i, th: (i, 0, 0))),
        ),
        compiler_params=pltpu.CompilerParams(dimension_semantics=("parallel",)),
    )(thresh, feats, atoms)
    return sparse, dry


# ------------------------ ReverbGenerator (approx, JAX) ----------------------
def _leaky(x):
    return jnp.where(x > 0, x, LEAK * x)


def _layer_norm(x, g, b, eps=1e-5):
    mu = jnp.mean(x, axis=-1, keepdims=True)
    var = jnp.mean((x - mu) ** 2, axis=-1, keepdims=True)
    return (x - mu) / jnp.sqrt(var + eps) * g + b


def reverb_forward(summary, dry, p):
    # TODO(synk): ReverbGenerator source not provided; standard semantics approximated:
    # LayerNorm(summary) -> small MLPs -> hard one-hot room choice + 2-way dry/wet
    # softmax mix; wet = fft_convolve(dry, chosen impulse response). Stays in JAX.
    h = _layer_norm(summary, p["ln_g"], p["ln_b"])
    hr = _leaky(h @ p["room_w0"] + p["room_b0"])
    hr = _leaky(hr @ p["room_w1"] + p["room_b1"])
    room_logits = hr @ p["room_w2"] + p["room_b2"]
    choice = jax.nn.one_hot(jnp.argmax(room_logits, -1), room_logits.shape[-1],
                            dtype=jnp.float32)                 # hard_choice=True
    ir = choice @ p["rooms"]                                    # (B, T)

    hm = _leaky(h @ p["mix_w0"] + p["mix_b0"])
    hm = _leaky(hm @ p["mix_w1"] + p["mix_b1"])
    mix = jax.nn.softmax(hm @ p["mix_w2"] + p["mix_b2"], -1)    # (B, 2) dry/wet

    n = dry.shape[-1]
    # TODO(synk): FFT has no Pallas TPU primitive; frequency-domain conv in plain JAX.
    dry_f = jnp.fft.rfft(jnp.pad(dry[:, 0, :], ((0, 0), (0, n))), axis=-1)
    ir_f = jnp.fft.rfft(jnp.pad(ir, ((0, 0), (0, n))), axis=-1)
    wet = jnp.fft.irfft(dry_f * ir_f, n=2 * n, axis=-1)[..., :n]
    out = dry[:, 0, :] * mix[:, 0:1] + wet * mix[:, 1:2]
    return out[:, None, :]


# ------------------------------ parameters ----------------------------------
def init_params(key):
    ks = jax.random.split(key, 12)
    u = lambda k, shape, s: jax.random.uniform(k, shape, jnp.float32, -s, s)
    p = {}
    # weight_norm(Conv1d): w = g * v/||v||; at init g = ||v|| so effective w == v.
    # exp.init_weights(weight_init=0.1) -> uniform(-0.1, 0.1) weights, zero biases.
    p["to_channels_w"] = u(ks[0], (CHANNELS, 1, KSIZE), 0.1)
    p["to_channels_b"] = jnp.zeros((CHANNELS,), jnp.float32)
    nl = len(DILATIONS)
    p["enc_w"] = u(ks[1], (nl, CHANNELS, CHANNELS, 2), 0.1)
    p["enc_b"] = jnp.zeros((nl, CHANNELS, 1), jnp.float32)
    p["d"] = u(ks[2], (N_ATOMS, ATOM_SIZE), 0.01)
    p["to_atoms_w"] = u(ks[3], (N_ATOMS, CHANNELS, KSIZE), 0.1)
    p["to_atoms_b"] = jnp.zeros((N_ATOMS,), jnp.float32)
    # reverb generator (approximate)
    p["ln_g"] = jnp.ones((CHANNELS,), jnp.float32)
    p["ln_b"] = jnp.zeros((CHANNELS,), jnp.float32)
    p["room_w0"] = u(ks[4], (CHANNELS, CHANNELS), 0.1); p["room_b0"] = jnp.zeros((CHANNELS,))
    p["room_w1"] = u(ks[5], (CHANNELS, CHANNELS), 0.1); p["room_b1"] = jnp.zeros((CHANNELS,))
    p["room_w2"] = u(ks[6], (CHANNELS, N_ROOMS), 0.1);  p["room_b2"] = jnp.zeros((N_ROOMS,))
    p["mix_w0"] = u(ks[7], (CHANNELS, CHANNELS), 0.1);  p["mix_b0"] = jnp.zeros((CHANNELS,))
    p["mix_w1"] = u(ks[8], (CHANNELS, CHANNELS), 0.1);  p["mix_b1"] = jnp.zeros((CHANNELS,))
    p["mix_w2"] = u(ks[9], (CHANNELS, 2), 0.1);         p["mix_b2"] = jnp.zeros((2,))
    # synthetic decaying-noise room impulse responses
    tt = jnp.arange(SAMPLES, dtype=jnp.float32)
    decays = jnp.linspace(10.0, 60.0, N_ROOMS)[:, None]
    noise = jax.random.normal(ks[10], (N_ROOMS, SAMPLES), jnp.float32)
    rooms = noise * jnp.exp(-tt[None, :] / decays)
    p["rooms"] = rooms / (jnp.linalg.norm(rooms, axis=-1, keepdims=True) + 1e-8)
    return p


# -------------------------------- forward -----------------------------------
def model_forward(x, p):
    # x: (batch, 1, samples)
    summary3, feats = frontend(x, p)                   # fused conv + encoder + summary + to_atoms
    summary = summary3[:, :, 0]                        # (B, C)
    flat = feats.reshape(feats.shape[0], -1)
    kk = min(N_TO_KEEP, flat.shape[-1])
    # TODO(synk): top-k selection has no clean Pallas TPU equivalent; the per-batch
    # k-th-largest threshold uses lax.top_k in plain JAX; ties may keep >k entries.
    thresh = lax.top_k(flat, kk)[0][:, -1]             # (B,)
    atoms = p["d"] / (jnp.linalg.norm(p["d"], axis=-1, keepdims=True) + 1e-8)  # unit_norm
    sparse_features, dry = sparse_synth(feats, thresh, atoms)   # (B,A,T), (B,1,T)
    final = reverb_forward(summary, dry, p)                     # (B, 1, T)
    return final, sparse_features


if __name__ == "__main__":
    key = jax.random.PRNGKey(0)
    pk, xk = jax.random.split(key)
    params = init_params(pk)
    x = jax.random.normal(xk, (BATCH, 1, SAMPLES), jnp.float32)

    final, sparse = jax.jit(model_forward)(x, params)
    jax.block_until_ready((final, sparse))

    assert final.shape == (BATCH, 1, SAMPLES)
    assert sparse.shape == (BATCH, N_ATOMS, SAMPLES)
    assert jnp.all(jnp.isfinite(final)) and jnp.all(jnp.isfinite(sparse))
    print("KERNEL_OK")
</pallas_src>

<mosaic_0001>
module attributes {stable_mosaic.version = 11 : i64} {
  func.func @_frontend_kernel(%arg0: i32, %arg1: memref<1x1x256xf32, #tpu.memory_space<vmem>>, %arg2: memref<16x7xf32, #tpu.memory_space<vmem>>, %arg3: memref<16x1xf32, #tpu.memory_space<vmem>>, %arg4: memref<12x16x32xf32, #tpu.memory_space<vmem>>, %arg5: memref<12x16x1xf32, #tpu.memory_space<vmem>>, %arg6: memref<8x112xf32, #tpu.memory_space<vmem>>, %arg7: memref<8x1xf32, #tpu.memory_space<vmem>>, %arg8: memref<1x16x1xf32, #tpu.memory_space<vmem>>, %arg9: memref<1x8x256xf32, #tpu.memory_space<vmem>>) attributes {dimension_semantics = [#tpu.dimension_semantics<parallel>], iteration_bounds = array<i64: 2>, scalar_prefetch = 0 : i64, scratch_operands = 0 : i64, tpu.core_type = #tpu.core_type<tc>, window_params = [{transform_indices = @transform_0, window_bounds = array<i64: 1, 1, 256>}, {pipeline_mode = #tpu.pipeline_mode<synchronous>, transform_indices = @transform_1, window_bounds = array<i64: 16, 7>}, {pipeline_mode = #tpu.pipeline_mode<synchronous>, transform_indices = @transform_2, window_bounds = array<i64: 16, 1>}, {pipeline_mode = #tpu.pipeline_mode<synchronous>, transform_indices = @transform_3, window_bounds = array<i64: 12, 16, 32>}, {pipeline_mode = #tpu.pipeline_mode<synchronous>, transform_indices = @transform_4, window_bounds = array<i64: 12, 16, 1>}, {pipeline_mode = #tpu.pipeline_mode<synchronous>, transform_indices = @transform_5, window_bounds = array<i64: 8, 112>}, {pipeline_mode = #tpu.pipeline_mode<synchronous>, transform_indices = @transform_6, window_bounds = array<i64: 8, 1>}, {transform_indices = @transform_7, window_bounds = array<i64: 1, 16, 1>}, {transform_indices = @transform_8, window_bounds = array<i64: 1, 8, 256>}]} {
    %c0 = arith.constant 0 : index
    %c0_0 = arith.constant 0 : index
    %c0_1 = arith.constant 0 : index
    %0 = vector.load %arg1[%c0, %c0_0, %c0_1] : memref<1x1x256xf32, #tpu.memory_space<vmem>>, vector<1x1x256xf32>
    %1 = vector.shape_cast %0 : vector<1x1x256xf32> to vector<1x256xf32>
    %2 = tpu.iota {dimensions = array<i32: 1>} : vector<1x256xi32>
    %3 = tpu.iota {dimensions = array<i32: 1>} : vector<16x256xi32>
    %c0_2 = arith.constant 0 : index
    %c0_3 = arith.constant 0 : index
    %4 = vector.load %arg2[%c0_2, %c0_3] : memref<16x7xf32, #tpu.memory_space<vmem>>, vector<16x7xf32>
    %cst = arith.constant 0.000000e+00 : f32
    %5 = vector.broadcast %cst : f32 to vector<16x256xf32>
    %c3_i32 = arith.constant 3 : i32
    %6 = tpu.dynamic_rotate %1 by %c3_i32 dim 1 : vector<1x256xf32>, i32 -> vector<1x256xf32>
    %c3_i32_4 = arith.constant 3 : i32
    %7 = vector.broadcast %c3_i32_4 : i32 to vector<1x256xi32>
    %8 = arith.cmpi sge, %2, %7 : vector<1x256xi32>
    %cst_5 = arith.constant 0.000000e+00 : f32
    %9 = vector.broadcast %cst_5 : f32 to vector<1x256xf32>
    %10 = arith.select %8, %6, %9 : vector<1x256xi1>, vector<1x256xf32>
    %11 = vector.extract_strided_slice %4 {offsets = [0, 0], sizes = [16, 1], strides = [1, 1]} : vector<16x7xf32> to vector<16x1xf32>
    %12 = vector.broadcast %11 : vector<16x1xf32> to vector<16x256xf32>
    %13 = vector.broadcast %10 : vector<1x256xf32> to vector<16x256xf32>
    %14 = arith.mulf %12, %13 : vector<16x256xf32>
    %15 = arith.addf %5, %14 : vector<16x256xf32>
    %c2_i32 = arith.constant 2 : i32
    %16 = tpu.dynamic_rotate %1 by %c2_i32 dim 1 : vector<1x256xf32>, i32 -> vector<1x256xf32>
    %c2_i32_6 = arith.constant 2 : i32
    %17 = vector.broadcast %c2_i32_6 : i32 to vector<1x256xi32>
    %18 = arith.cmpi sge, %2, %17 : vector<1x256xi32>
    %cst_7 = arith.constant 0.000000e+00 : f32
    %19 = vector.broadcast %cst_7 : f32 to vector<1x256xf32>
    %20 = arith.select %18, %16, %19 : vector<1x256xi1>, vector<1x256xf32>
    %21 = vector.extract_strided_slice %4 {offsets = [0, 1], sizes = [16, 1], strides = [1, 1]} : vector<16x7xf32> to vector<16x1xf32>
    %22 = vector.broadcast %21 : vector<16x1xf32> to vector<16x256xf32>
    %23 = vector.broadcast %20 : vector<1x256xf32> to vector<16x256xf32>
    %24 = arith.mulf %22, %23 : vector<16x256xf32>
    %25 = arith.addf %15, %24 : vector<16x256xf32>
    %c1_i32 = arith.constant 1 : i32
    %26 = tpu.dynamic_rotate %1 by %c1_i32 dim 1 : vector<1x256xf32>, i32 -> vector<1x256xf32>
    %c1_i32_8 = arith.constant 1 : i32
    %27 = vector.broadcast %c1_i32_8 : i32 to vector<1x256xi32>
    %28 = arith.cmpi sge, %2, %27 : vector<1x256xi32>
    %cst_9 = arith.constant 0.000000e+00 : f32
    %29 = vector.broadcast %cst_9 : f32 to vector<1x256xf32>
    %30 = arith.select %28, %26, %29 : vector<1x256xi1>, vector<1x256xf32>
    %31 = vector.extract_strided_slice %4 {offsets = [0, 2], sizes = [16, 1], strides = [1, 1]} : vector<16x7xf32> to vector<16x1xf32>
    %32 = vector.broadcast %31 : vector<16x1xf32> to vector<16x256xf32>
    %33 = vector.broadcast %30 : vector<1x256xf32> to vector<16x256xf32>
    %34 = arith.mulf %32, %33 : vector<16x256xf32>
    %35 = arith.addf %25, %34 : vector<16x256xf32>
    %36 = vector.extract_strided_slice %4 {offsets = [0, 3], sizes = [16, 1], strides = [1, 1]} : vector<16x7xf32> to vector<16x1xf32>
    %37 = vector.broadcast %36 : vector<16x1xf32> to vector<16x256xf32>
    %38 = vector.broadcast %1 : vector<1x256xf32> to vector<16x256xf32>
    %39 = arith.mulf %37, %38 : vector<16x256xf32>
    %40 = arith.addf %35, %39 : vector<16x256xf32>
    %c255_i32 = arith.constant 255 : i32
    %41 = tpu.dynamic_rotate %1 by %c255_i32 dim 1 : vector<1x256xf32>, i32 -> vector<1x256xf32>
    %c255_i32_10 = arith.constant 255 : i32
    %42 = vector.broadcast %c255_i32_10 : i32 to vector<1x256xi32>
    %43 = arith.cmpi slt, %2, %42 : vector<1x256xi32>
    %cst_11 = arith.constant 0.000000e+00 : f32
    %44 = vector.broadcast %cst_11 : f32 to vector<1x256xf32>
    %45 = arith.select %43, %41, %44 : vector<1x256xi1>, vector<1x256xf32>
    %46 = vector.extract_strided_slice %4 {offsets = [0, 4], sizes = [16, 1], strides = [1, 1]} : vector<16x7xf32> to vector<16x1xf32>
    %47 = vector.broadcast %46 : vector<16x1xf32> to vector<16x256xf32>
    %48 = vector.broadcast %45 : vector<1x256xf32> to vector<16x256xf32>
    %49 = arith.mulf %47, %48 : vector<16x256xf32>
    %50 = arith.addf %40, %49 : vector<16x256xf32>
    %c254_i32 = arith.constant 254 : i32
    %51 = tpu.dynamic_rotate %1 by %c254_i32 dim 1 : vector<1x256xf32>, i32 -> vector<1x256xf32>
    %c254_i32_12 = arith.constant 254 : i32
    %52 = vector.broadcast %c254_i32_12 : i32 to vector<1x256xi32>
    %53 = arith.cmpi slt, %2, %52 : vector<1x256xi32>
    %cst_13 = arith.constant 0.000000e+00 : f32
    %54 = vector.broadcast %cst_13 : f32 to vector<1x256xf32>
    %55 = arith.select %53, %51, %54 : vector<1x256xi1>, vector<1x256xf32>
    %56 = vector.extract_strided_slice %4 {offsets = [0, 5], sizes = [16, 1], strides = [1, 1]} : vector<16x7xf32> to vector<16x1xf32>
    %57 = vector.broadcast %56 : vector<16x1xf32> to vector<16x256xf32>
    %58 = vector.broadcast %55 : vector<1x256xf32> to vector<16x256xf32>
    %59 = arith.mulf %57, %58 : vector<16x256xf32>
    %60 = arith.addf %50, %59 : vector<16x256xf32>
    %c253_i32 = arith.constant 253 : i32
    %61 = tpu.dynamic_rotate %1 by %c253_i32 dim 1 : vector<1x256xf32>, i32 -> vector<1x256xf32>
    %c253_i32_14 = arith.constant 253 : i32
    %62 = vector.broadcast %c253_i32_14 : i32 to vector<1x256xi32>
    %63 = arith.cmpi slt, %2, %62 : vector<1x256xi32>
    %cst_15 = arith.constant 0.000000e+00 : f32
    %64 = vector.broadcast %cst_15 : f32 to vector<1x256xf32>
    %65 = arith.select %63, %61, %64 : vector<1x256xi1>, vector<1x256xf32>
    %66 = vector.extract_strided_slice %4 {offsets = [0, 6], sizes = [16, 1], strides = [1, 1]} : vector<16x7xf32> to vector<16x1xf32>
    %67 = vector.broadcast %66 : vector<16x1xf32> to vector<16x256xf32>
    %68 = vector.broadcast %65 : vector<1x256xf32> to vector<16x256xf32>
    %69 = arith.mulf %67, %68 : vector<16x256xf32>
    %70 = arith.addf %60, %69 : vector<16x256xf32>
    %c0_16 = arith.constant 0 : index
    %c0_17 = arith.constant 0 : index
    %71 = vector.load %arg3[%c0_16, %c0_17] : memref<16x1xf32, #tpu.memory_space<vmem>>, vector<16x1xf32>
    %72 = vector.broadcast %71 : vector<16x1xf32> to vector<16x256xf32>
    %73 = arith.addf %70, %72 : vector<16x256xf32>
    %cst_18 = arith.constant 0.000000e+00 : f32
    %74 = vector.broadcast %cst_18 : f32 to vector<16x256xf32>
    %c255_i32_19 = arith.constant 255 : i32
    %75 = tpu.dynamic_rotate %73 by %c255_i32_19 dim 1 : vector<16x256xf32>, i32 -> vector<16x256xf32>
    %c255_i32_20 = arith.constant 255 : i32
    %76 = vector.broadcast %c255_i32_20 : i32 to vector<16x256xi32>
    %77 = arith.cmpi slt, %3, %76 : vector<16x256xi32>
    %cst_21 = arith.constant 0.000000e+00 : f32
    %78 = vector.broadcast %cst_21 : f32 to vector<16x256xf32>
    %79 = arith.select %77, %75, %78 : vector<16x256xi1>, vector<16x256xf32>
    %80 = tpu.concatenate %73, %79 in 0 : vector<16x256xf32>, vector<16x256xf32> -> vector<32x256xf32>
    %c0_22 = arith.constant 0 : index
    %c0_23 = arith.constant 0 : index
    %c0_24 = arith.constant 0 : index
    %81 = vector.load %arg4[%c0_22, %c0_23, %c0_24] : memref<12x16x32xf32, #tpu.memory_space<vmem>>, vector<1x16x32xf32>
    %82 = vector.shape_cast %81 : vector<1x16x32xf32> to vector<16x32xf32>
    %cst_25 = arith.constant dense<0.000000e+00> : vector<16x256xf32>
    %83 = tpu.matmul %82, %80, %cst_25 {dimension_numbers = #tpu.dot_dimension_numbers<[1], [0], [0], [1], [0, 0, 1, 1], [], []>} : vector<16x32xf32>, vector<32x256xf32>, vector<16x256xf32> -> vector<16x256xf32>
    %c0_26 = arith.constant 0 : index
    %c0_27 = arith.constant 0 : index
    %c0_28 = arith.constant 0 : index
    %84 = vector.load %arg5[%c0_26, %c0_27, %c0_28] : memref<12x16x1xf32, #tpu.memory_space<vmem>>, vector<1x16x1xf32>
    %85 = vector.shape_cast %84 : vector<1x16x1xf32> to vector<16x1xf32>
    %86 = vector.broadcast %85 : vector<16x1xf32> to vector<16x256xf32>
    %87 = arith.addf %83, %86 : vector<16x256xf32>
    %cst_29 = arith.constant 0.000000e+00 : f32
    %88 = vector.broadcast %cst_29 : f32 to vector<16x256xf32>
    %89 = arith.cmpf ogt, %87, %88 : vector<16x256xf32>
    %cst_30 = arith.constant 2.000000e-01 : f32
    %90 = vector.broadcast %cst_30 : f32 to vector<16x256xf32>
    %91 = arith.mulf %90, %87 : vector<16x256xf32>
    %92 = arith.select %89, %87, %91 : vector<16x256xi1>, vector<16x256xf32>
    %93 = arith.addf %73, %92 : vector<16x256xf32>
    %94 = arith.addf %74, %93 : vector<16x256xf32>
    %c254_i32_31 = arith.constant 254 : i32
    %95 = tpu.dynamic_rotate %93 by %c254_i32_31 dim 1 : vector<16x256xf32>, i32 -> vector<16x256xf32>
    %c254_i32_32 = arith.constant 254 : i32
    %96 = vector.broadcast %c254_i32_32 : i32 to vector<16x256xi32>
    %97 = arith.cmpi slt, %3, %96 : vector<16x256xi32>
    %cst_33 = arith.constant 0.000000e+00 : f32
    %98 = vector.broadcast %cst_33 : f32 to vector<16x256xf32>
    %99 = arith.select %97, %95, %98 : vector<16x256xi1>, vector<16x256xf32>
    %100 = tpu.concatenate %93, %99 in 0 : vector<16x256xf32>, vector<16x256xf32> -> vector<32x256xf32>
    %c1 = arith.constant 1 : index
    %c0_34 = arith.constant 0 : index
    %c0_35 = arith.constant 0 : index
    %101 = vector.load %arg4[%c1, %c0_34, %c0_35] : memref<12x16x32xf32, #tpu.memory_space<vmem>>, vector<1x16x32xf32>
    %102 = vector.shape_cast %101 : vector<1x16x32xf32> to vector<16x32xf32>
    %cst_36 = arith.constant dense<0.000000e+00> : vector<16x256xf32>
    %103 = tpu.matmul %102, %100, %cst_36 {dimension_numbers = #tpu.dot_dimension_numbers<[1], [0], [0], [1], [0, 0, 1, 1], [], []>} : vector<16x32xf32>, vector<32x256xf32>, vector<16x256xf32> -> vector<16x256xf32>
    %c1_37 = arith.constant 1 : index
    %c0_38 = arith.constant 0 : index
    %c0_39 = arith.constant 0 : index
    %104 = vector.load %arg5[%c1_37, %c0_38, %c0_39] : memref<12x16x1xf32, #tpu.memory_space<vmem>>, vector<1x16x1xf32>
    %105 = vector.shape_cast %104 : vector<1x16x1xf32> to vector<16x1xf32>
    %106 = vector.broadcast %105 : vector<16x1xf32> to vector<16x256xf32>
    %107 = arith.addf %103, %106 : vector<16x256xf32>
    %cst_40 = arith.constant 0.000000e+00 : f32
    %108 = vector.broadcast %cst_40 : f32 to vector<16x256xf32>
    %109 = arith.cmpf ogt, %107, %108 : vector<16x256xf32>
    %cst_41 = arith.constant 2.000000e-01 : f32
    %110 = vector.broadcast %cst_41 : f32 to vector<16x256xf32>
    %111 = arith.mulf %110, %107 : vector<16x256xf32>
    %112 = arith.select %109, %107, %111 : vector<16x256xi1>, vector<16x256xf32>
    %113 = arith.addf %93, %112 : vector<16x256xf32>
    %114 = arith.addf %94, %113 : vector<16x256xf32>
    %c252_i32 = arith.constant 252 : i32
    %115 = tpu.dynamic_rotate %113 by %c252_i32 dim 1 : vector<16x256xf32>, i32 -> vector<16x256xf32>
    %c252_i32_42 = arith.constant 252 : i32
    %116 = vector.broadcast %c252_i32_42 : i32 to vector<16x256xi32>
    %117 = arith.cmpi slt, %3, %116 : vector<16x256xi32>
    %cst_43 = arith.constant 0.000000e+00 : f32
    %118 = vector.broadcast %cst_43 : f32 to vector<16x256xf32>
    %119 = arith.select %117, %115, %118 : vector<16x256xi1>, vector<16x256xf32>
    %120 = tpu.concatenate %113, %119 in 0 : vector<16x256xf32>, vector<16x256xf32> -> vector<32x256xf32>
    %c2 = arith.constant 2 : index
    %c0_44 = arith.constant 0 : index
    %c0_45 = arith.constant 0 : index
    %121 = vector.load %arg4[%c2, %c0_44, %c0_45] : memref<12x16x32xf32, #tpu.memory_space<vmem>>, vector<1x16x32xf32>
    %122 = vector.shape_cast %121 : vector<1x16x32xf32> to vector<16x32xf32>
    %cst_46 = arith.constant dense<0.000000e+00> : vector<16x256xf32>
    %123 = tpu.matmul %122, %120, %cst_46 {dimension_numbers = #tpu.dot_dimension_numbers<[1], [0], [0], [1], [0, 0, 1, 1], [], []>} : vector<16x32xf32>, vector<32x256xf32>, vector<16x256xf32> -> vector<16x256xf32>
    %c2_47 = arith.constant 2 : index
    %c0_48 = arith.constant 0 : index
    %c0_49 = arith.constant 0 : index
    %124 = vector.load %arg5[%c2_47, %c0_48, %c0_49] : memref<12x16x1xf32, #tpu.memory_space<vmem>>, vector<1x16x1xf32>
    %125 = vector.shape_cast %124 : vector<1x16x1xf32> to vector<16x1xf32>
    %126 = vector.broadcast %125 : vector<16x1xf32> to vector<16x256xf32>
    %127 = arith.addf %123, %126 : vector<16x256xf32>
    %cst_50 = arith.constant 0.000000e+00 : f32
    %128 = vector.broadcast %cst_50 : f32 to vector<16x256xf32>
    %129 = arith.cmpf ogt, %127, %128 : vector<16x256xf32>
    %cst_51 = arith.constant 2.000000e-01 : f32
    %130 = vector.broadcast %cst_51 : f32 to vector<16x256xf32>
    %131 = arith.mulf %130, %127 : vector<16x256xf32>
    %132 = arith.select %129, %127, %131 : vector<16x256xi1>, vector<16x256xf32>
    %133 = arith.addf %113, %132 : vector<16x256xf32>
    %134 = arith.addf %114, %133 : vector<16x256xf32>
    %c248_i32 = arith.constant 248 : i32
    %135 = tpu.dynamic_rotate %133 by %c248_i32 dim 1 : vector<16x256xf32>, i32 -> vector<16x256xf32>
    %c248_i32_52 = arith.constant 248 : i32
    %136 = vector.broadcast %c248_i32_52 : i32 to vector<16x256xi32>
    %137 = arith.cmpi slt, %3, %136 : vector<16x256xi32>
    %cst_53 = arith.constant 0.000000e+00 : f32
    %138 = vector.broadcast %cst_53 : f32 to vector<16x256xf32>
    %139 = arith.select %137, %135, %138 : vector<16x256xi1>, vector<16x256xf32>
    %140 = tpu.concatenate %133, %139 in 0 : vector<16x256xf32>, vector<16x256xf32> -> vector<32x256xf32>
    %c3 = arith.constant 3 : index
    %c0_54 = arith.constant 0 : index
    %c0_55 = arith.constant 0 : index
    %141 = vector.load %arg4[%c3, %c0_54, %c0_55] : memref<12x16x32xf32, #tpu.memory_space<vmem>>, vector<1x16x32xf32>
    %142 = vector.shape_cast %141 : vector<1x16x32xf32> to vector<16x32xf32>
    %cst_56 = arith.constant dense<0.000000e+00> : vector<16x256xf32>
    %143 = tpu.matmul %142, %140, %cst_56 {dimension_numbers = #tpu.dot_dimension_numbers<[1], [0], [0], [1], [0, 0, 1, 1], [], []>} : vector<16x32xf32>, vector<32x256xf32>, vector<16x256xf32> -> vector<16x256xf32>
    %c3_57 = arith.constant 3 : index
    %c0_58 = arith.constant 0 : index
    %c0_59 = arith.constant 0 : index
    %144 = vector.load %arg5[%c3_57, %c0_58, %c0_59] : memref<12x16x1xf32, #tpu.memory_space<vmem>>, vector<1x16x1xf32>
    %145 = vector.shape_cast %144 : vector<1x16x1xf32> to vector<16x1xf32>
    %146 = vector.broadcast %145 : vector<16x1xf32> to vector<16x256xf32>
    %147 = arith.addf %143, %146 : vector<16x256xf32>
    %cst_60 = arith.constant 0.000000e+00 : f32
    %148 = vector.broadcast %cst_60 : f32 to vector<16x256xf32>
    %149 = arith.cmpf ogt, %147, %148 : vector<16x256xf32>
    %cst_61 = arith.constant 2.000000e-01 : f32
    %150 = vector.broadcast %cst_61 : f32 to vector<16x256xf32>
    %151 = arith.mulf %150, %147 : vector<16x256xf32>
    %152 = arith.select %149, %147, %151 : vector<16x256xi1>, vector<16x256xf32>
    %153 = arith.addf %133, %152 : vector<16x256xf32>
    %154 = arith.addf %134, %153 : vector<16x256xf32>
    %c240_i32 = arith.constant 240 : i32
    %155 = tpu.dynamic_rotate %153 by %c240_i32 dim 1 : vector<16x256xf32>, i32 -> vector<16x256xf32>
    %c240_i32_62 = arith.constant 240 : i32
    %156 = vector.broadcast %c240_i32_62 : i32 to vector<16x256xi32>
    %157 = arith.cmpi slt, %3, %156 : vector<16x256xi32>
    %cst_63 = arith.constant 0.000000e+00 : f32
    %158 = vector.broadcast %cst_63 : f32 to vector<16x256xf32>
    %159 = arith.select %157, %155, %158 : vector<16x256xi1>, vector<16x256xf32>
    %160 = tpu.concatenate %153, %159 in 0 : vector<16x256xf32>, vector<16x256xf32> -> vector<32x256xf32>
    %c4 = arith.constant 4 : index
    %c0_64 = arith.constant 0 : index
    %c0_65 = arith.constant 0 : index
    %161 = vector.load %arg4[%c4, %c0_64, %c0_65] : memref<12x16x32xf32, #tpu.memory_space<vmem>>, vector<1x16x32xf32>
    %162 = vector.shape_cast %161 : vector<1x16x32xf32> to vector<16x32xf32>
    %cst_66 = arith.constant dense<0.000000e+00> : vector<16x256xf32>
    %163 = tpu.matmul %162, %160, %cst_66 {dimension_numbers = #tpu.dot_dimension_numbers<[1], [0], [0], [1], [0, 0, 1, 1], [], []>} : vector<16x32xf32>, vector<32x256xf32>, vector<16x256xf32> -> vector<16x256xf32>
    %c4_67 = arith.constant 4 : index
    %c0_68 = arith.constant 0 : index
    %c0_69 = arith.constant 0 : index
    %164 = vector.load %arg5[%c4_67, %c0_68, %c0_69] : memref<12x16x1xf32, #tpu.memory_space<vmem>>, vector<1x16x1xf32>
    %165 = vector.shape_cast %164 : vector<1x16x1xf32> to vector<16x1xf32>
    %166 = vector.broadcast %165 : vector<16x1xf32> to vector<16x256xf32>
    %167 = arith.addf %163, %166 : vector<16x256xf32>
    %cst_70 = arith.constant 0.000000e+00 : f32
    %168 = vector.broadcast %cst_70 : f32 to vector<16x256xf32>
    %169 = arith.cmpf ogt, %167, %168 : vector<16x256xf32>
    %cst_71 = arith.constant 2.000000e-01 : f32
    %170 = vector.broadcast %cst_71 : f32 to vector<16x256xf32>
    %171 = arith.mulf %170, %167 : vector<16x256xf32>
    %172 = arith.select %169, %167, %171 : vector<16x256xi1>, vector<16x256xf32>
    %173 = arith.addf %153, %172 : vector<16x256xf32>
    %174 = arith.addf %154, %173 : vector<16x256xf32>
    %c224_i32 = arith.constant 224 : i32
    %175 = tpu.dynamic_rotate %173 by %c224_i32 dim 1 : vector<16x256xf32>, i32 -> vector<16x256xf32>
    %c224_i32_72 = arith.constant 224 : i32
    %176 = vector.broadcast %c224_i32_72 : i32 to vector<16x256xi32>
    %177 = arith.cmpi slt, %3, %176 : vector<16x256xi32>
    %cst_73 = arith.constant 0.000000e+00 : f32
    %178 = vector.broadcast %cst_73 : f32 to vector<16x256xf32>
    %179 = arith.select %177, %175, %178 : vector<16x256xi1>, vector<16x256xf32>
    %180 = tpu.concatenate %173, %179 in 0 : vector<16x256xf32>, vector<16x256xf32> -> vector<32x256xf32>
    %c5 = arith.constant 5 : index
    %c0_74 = arith.constant 0 : index
    %c0_75 = arith.constant 0 : index
    %181 = vector.load %arg4[%c5, %c0_74, %c0_75] : memref<12x16x32xf32, #tpu.memory_space<vmem>>, vector<1x16x32xf32>
    %182 = vector.shape_cast %181 : vector<1x16x32xf32> to vector<16x32xf32>
    %cst_76 = arith.constant dense<0.000000e+00> : vector<16x256xf32>
    %183 = tpu.matmul %182, %180, %cst_76 {dimension_numbers = #tpu.dot_dimension_numbers<[1], [0], [0], [1], [0, 0, 1, 1], [], []>} : vector<16x32xf32>, vector<32x256xf32>, vector<16x256xf32> -> vector<16x256xf32>
    %c5_77 = arith.constant 5 : index
    %c0_78 = arith.constant 0 : index
    %c0_79 = arith.constant 0 : index
    %184 = vector.load %arg5[%c5_77, %c0_78, %c0_79] : memref<12x16x1xf32, #tpu.memory_space<vmem>>, vector<1x16x1xf32>
    %185 = vector.shape_cast %184 : vector<1x16x1xf32> to vector<16x1xf32>
    %186 = vector.broadcast %185 : vector<16x1xf32> to vector<16x256xf32>
    %187 = arith.addf %183, %186 : vector<16x256xf32>
    %cst_80 = arith.constant 0.000000e+00 : f32
    %188 = vector.broadcast %cst_80 : f32 to vector<16x256xf32>
    %189 = arith.cmpf ogt, %187, %188 : vector<16x256xf32>
    %cst_81 = arith.constant 2.000000e-01 : f32
    %190 = vector.broadcast %cst_81 : f32 to vector<16x256xf32>
    %191 = arith.mulf %190, %187 : vector<16x256xf32>
    %192 = arith.select %189, %187, %191 : vector<16x256xi1>, vector<16x256xf32>
    %193 = arith.addf %173, %192 : vector<16x256xf32>
    %194 = arith.addf %174, %193 : vector<16x256xf32>
    %c192_i32 = arith.constant 192 : i32
    %195 = tpu.dynamic_rotate %193 by %c192_i32 dim 1 : vector<16x256xf32>, i32 -> vector<16x256xf32>
    %c192_i32_82 = arith.constant 192 : i32
    %196 = vector.broadcast %c192_i32_82 : i32 to vector<16x256xi32>
    %197 = arith.cmpi slt, %3, %196 : vector<16x256xi32>
    %cst_83 = arith.constant 0.000000e+00 : f32
    %198 = vector.broadcast %cst_83 : f32 to vector<16x256xf32>
    %199 = arith.select %197, %195, %198 : vector<16x256xi1>, vector<16x256xf32>
    %200 = tpu.concatenate %193, %199 in 0 : vector<16x256xf32>, vector<16x256xf32> -> vector<32x256xf32>
    %c6 = arith.constant 6 : index
    %c0_84 = arith.constant 0 : index
    %c0_85 = arith.constant 0 : index
    %201 = vector.load %arg4[%c6, %c0_84, %c0_85] : memref<12x16x32xf32, #tpu.memory_space<vmem>>, vector<1x16x32xf32>
    %202 = vector.shape_cast %201 : vector<1x16x32xf32> to vector<16x32xf32>
    %cst_86 = arith.constant dense<0.000000e+00> : vector<16x256xf32>
    %203 = tpu.matmul %202, %200, %cst_86 {dimension_numbers = #tpu.dot_dimension_numbers<[1], [0], [0], [1], [0, 0, 1, 1], [], []>} : vector<16x32xf32>, vector<32x256xf32>, vector<16x256xf32> -> vector<16x256xf32>
    %c6_87 = arith.constant 6 : index
    %c0_88 = arith.constant 0 : index
    %c0_89 = arith.constant 0 : index
    %204 = vector.load %arg5[%c6_87, %c0_88, %c0_89] : memref<12x16x1xf32, #tpu.memory_space<vmem>>, vector<1x16x1xf32>
    %205 = vector.shape_cast %204 : vector<1x16x1xf32> to vector<16x1xf32>
    %206 = vector.broadcast %205 : vector<16x1xf32> to vector<16x256xf32>
    %207 = arith.addf %203, %206 : vector<16x256xf32>
    %cst_90 = arith.constant 0.000000e+00 : f32
    %208 = vector.broadcast %cst_90 : f32 to vector<16x256xf32>
    %209 = arith.cmpf ogt, %207, %208 : vector<16x256xf32>
    %cst_91 = arith.constant 2.000000e-01 : f32
    %210 = vector.broadcast %cst_91 : f32 to vector<16x256xf32>
    %211 = arith.mulf %210, %207 : vector<16x256xf32>
    %212 = arith.select %209, %207, %211 : vector<16x256xi1>, vector<16x256xf32>
    %213 = arith.addf %193, %212 : vector<16x256xf32>
    %214 = arith.addf %194, %213 : vector<16x256xf32>
    %c128_i32 = arith.constant 128 : i32
    %215 = tpu.dynamic_rotate %213 by %c128_i32 dim 1 : vector<16x256xf32>, i32 -> vector<16x256xf32>
    %c128_i32_92 = arith.constant 128 : i32
    %216 = vector.broadcast %c128_i32_92 : i32 to vector<16x256xi32>
    %217 = arith.cmpi slt, %3, %216 : vector<16x256xi32>
    %cst_93 = arith.constant 0.000000e+00 : f32
    %218 = vector.broadcast %cst_93 : f32 to vector<16x256xf32>
    %219 = arith.select %217, %215, %218 : vector<16x256xi1>, vector<16x256xf32>
    %220 = tpu.concatenate %213, %219 in 0 : vector<16x256xf32>, vector<16x256xf32> -> vector<32x256xf32>
    %c7 = arith.constant 7 : index
    %c0_94 = arith.constant 0 : index
    %c0_95 = arith.constant 0 : index
    %221 = vector.load %arg4[%c7, %c0_94, %c0_95] : memref<12x16x32xf32, #tpu.memory_space<vmem>>, vector<1x16x32xf32>
    %222 = vector.shape_cast %221 : vector<1x16x32xf32> to vector<16x32xf32>
    %cst_96 = arith.constant dense<0.000000e+00> : vector<16x256xf32>
    %223 = tpu.matmul %222, %220, %cst_96 {dimension_numbers = #tpu.dot_dimension_numbers<[1], [0], [0], [1], [0, 0, 1, 1], [], []>} : vector<16x32xf32>, vector<32x256xf32>, vector<16x256xf32> -> vector<16x256xf32>
    %c7_97 = arith.constant 7 : index
    %c0_98 = arith.constant 0 : index
    %c0_99 = arith.constant 0 : index
    %224 = vector.load %arg5[%c7_97, %c0_98, %c0_99] : memref<12x16x1xf32, #tpu.memory_space<vmem>>, vector<1x16x1xf32>
    %225 = vector.shape_cast %224 : vector<1x16x1xf32> to vector<16x1xf32>
    %226 = vector.broadcast %225 : vector<16x1xf32> to vector<16x256xf32>
    %227 = arith.addf %223, %226 : vector<16x256xf32>
    %cst_100 = arith.constant 0.000000e+00 : f32
    %228 = vector.broadcast %cst_100 : f32 to vector<16x256xf32>
    %229 = arith.cmpf ogt, %227, %228 : vector<16x256xf32>
    %cst_101 = arith.constant 2.000000e-01 : f32
    %230 = vector.broadcast %cst_101 : f32 to vector<16x256xf32>
    %231 = arith.mulf %230, %227 : vector<16x256xf32>
    %232 = arith.select %229, %227, %231 : vector<16x256xi1>, vector<16x256xf32>
    %233 = arith.addf %213, %232 : vector<16x256xf32>
    %234 = arith.addf %214, %233 : vector<16x256xf32>
    %c8 = arith.constant 8 : index
    %c0_102 = arith.constant 0 : index
    %c0_103 = arith.constant 0 : index
    %235 = vector.load %arg4[%c8, %c0_102, %c0_103] : memref<12x16x32xf32, #tpu.memory_space<vmem>>, vector<1x16x32xf32>
    %236 = vector.shape_cast %235 : vector<1x16x32xf32> to vector<16x32xf32>
    %237 = vector.extract_strided_slice %236 {offsets = [0, 0], sizes = [16, 16], strides = [1, 1]} : vector<16x32xf32> to vector<16x16xf32>
    %cst_104 = arith.constant dense<0.000000e+00> : vector<16x256xf32>
    %238 = tpu.matmul %237, %233, %cst_104 {dimension_numbers = #tpu.dot_dimension_numbers<[1], [0], [0], [1], [0, 0, 1, 1], [], []>} : vector<16x16xf32>, vector<16x256xf32>, vector<16x256xf32> -> vector<16x256xf32>
    %c8_105 = arith.constant 8 : index
    %c0_106 = arith.constant 0 : index
    %c0_107 = arith.constant 0 : index
    %239 = vector.load %arg5[%c8_105, %c0_106, %c0_107] : memref<12x16x1xf32, #tpu.memory_space<vmem>>, vector<1x16x1xf32>
    %240 = vector.shape_cast %239 : vector<1x16x1xf32> to vector<16x1xf32>
    %241 = vector.broadcast %240 : vector<16x1xf32> to vector<16x256xf32>
    %242 = arith.addf %238, %241 : vector<16x256xf32>
    %cst_108 = arith.constant 0.000000e+00 : f32
    %243 = vector.broadcast %cst_108 : f32 to vector<16x256xf32>
    %244 = arith.cmpf ogt, %242, %243 : vector<16x256xf32>
    %cst_109 = arith.constant 2.000000e-01 : f32
    %245 = vector.broadcast %cst_109 : f32 to vector<16x256xf32>
    %246 = arith.mulf %245, %242 : vector<16x256xf32>
    %247 = arith.select %244, %242, %246 : vector<16x256xi1>, vector<16x256xf32>
    %248 = arith.addf %233, %247 : vector<16x256xf32>
    %249 = arith.addf %234, %248 : vector<16x256xf32>
    %c9 = arith.constant 9 : index
    %c0_110 = arith.constant 0 : index
    %c0_111 = arith.constant 0 : index
    %250 = vector.load %arg4[%c9, %c0_110, %c0_111] : memref<12x16x32xf32, #tpu.memory_space<vmem>>, vector<1x16x32xf32>
    %251 = vector.shape_cast %250 : vector<1x16x32xf32> to vector<16x32xf32>
    %252 = vector.extract_strided_slice %251 {offsets = [0, 0], sizes = [16, 16], strides = [1, 1]} : vector<16x32xf32> to vector<16x16xf32>
    %cst_112 = arith.constant dense<0.000000e+00> : vector<16x256xf32>
    %253 = tpu.matmul %252, %248, %cst_112 {dimension_numbers = #tpu.dot_dimension_numbers<[1], [0], [0], [1], [0, 0, 1, 1], [], []>} : vector<16x16xf32>, vector<16x256xf32>, vector<16x256xf32> -> vector<16x256xf32>
    %c9_113 = arith.constant 9 : index
    %c0_114 = arith.constant 0 : index
    %c0_115 = arith.constant 0 : index
    %254 = vector.load %arg5[%c9_113, %c0_114, %c0_115] : memref<12x16x1xf32, #tpu.memory_space<vmem>>, vector<1x16x1xf32>
    %255 = vector.shape_cast %254 : vector<1x16x1xf32> to vector<16x1xf32>
    %256 = vector.broadcast %255 : vector<16x1xf32> to vector<16x256xf32>
    %257 = arith.addf %253, %256 : vector<16x256xf32>
    %cst_116 = arith.constant 0.000000e+00 : f32
    %258 = vector.broadcast %cst_116 : f32 to vector<16x256xf32>
    %259 = arith.cmpf ogt, %257, %258 : vector<16x256xf32>
    %cst_117 = arith.constant 2.000000e-01 : f32
    %260 = vector.broadcast %cst_117 : f32 to vector<16x256xf32>
    %261 = arith.mulf %260, %257 : vector<16x256xf32>
    %262 = arith.select %259, %257, %261 : vector<16x256xi1>, vector<16x256xf32>
    %263 = arith.addf %248, %262 : vector<16x256xf32>
    %264 = arith.addf %249, %263 : vector<16x256xf32>
    %c10 = arith.constant 10 : index
    %c0_118 = arith.constant 0 : index
    %c0_119 = arith.constant 0 : index
    %265 = vector.load %arg4[%c10, %c0_118, %c0_119] : memref<12x16x32xf32, #tpu.memory_space<vmem>>, vector<1x16x32xf32>
    %266 = vector.shape_cast %265 : vector<1x16x32xf32> to vector<16x32xf32>
    %267 = vector.extract_strided_slice %266 {offsets = [0, 0], sizes = [16, 16], strides = [1, 1]} : vector<16x32xf32> to vector<16x16xf32>
    %cst_120 = arith.constant dense<0.000000e+00> : vector<16x256xf32>
    %268 = tpu.matmul %267, %263, %cst_120 {dimension_numbers = #tpu.dot_dimension_numbers<[1], [0], [0], [1], [0, 0, 1, 1], [], []>} : vector<16x16xf32>, vector<16x256xf32>, vector<16x256xf32> -> vector<16x256xf32>
    %c10_121 = arith.constant 10 : index
    %c0_122 = arith.constant 0 : index
    %c0_123 = arith.constant 0 : index
    %269 = vector.load %arg5[%c10_121, %c0_122, %c0_123] : memref<12x16x1xf32, #tpu.memory_space<vmem>>, vector<1x16x1xf32>
    %270 = vector.shape_cast %269 : vector<1x16x1xf32> to vector<16x1xf32>
    %271 = vector.broadcast %270 : vector<16x1xf32> to vector<16x256xf32>
    %272 = arith.addf %268, %271 : vector<16x256xf32>
    %cst_124 = arith.constant 0.000000e+00 : f32
    %273 = vector.broadcast %cst_124 : f32 to vector<16x256xf32>
    %274 = arith.cmpf ogt, %272, %273 : vector<16x256xf32>
    %cst_125 = arith.constant 2.000000e-01 : f32
    %275 = vector.broadcast %cst_125 : f32 to vector<16x256xf32>
    %276 = arith.mulf %275, %272 : vector<16x256xf32>
    %277 = arith.select %274, %272, %276 : vector<16x256xi1>, vector<16x256xf32>
    %278 = arith.addf %263, %277 : vector<16x256xf32>
    %279 = arith.addf %264, %278 : vector<16x256xf32>
    %c255_i32_126 = arith.constant 255 : i32
    %280 = tpu.dynamic_rotate %278 by %c255_i32_126 dim 1 : vector<16x256xf32>, i32 -> vector<16x256xf32>
    %c255_i32_127 = arith.constant 255 : i32
    %281 = vector.broadcast %c255_i32_127 : i32 to vector<16x256xi32>
    %282 = arith.cmpi slt, %3, %281 : vector<16x256xi32>
    %cst_128 = arith.constant 0.000000e+00 : f32
    %283 = vector.broadcast %cst_128 : f32 to vector<16x256xf32>
    %284 = arith.select %282, %280, %283 : vector<16x256xi1>, vector<16x256xf32>
    %285 = tpu.concatenate %278, %284 in 0 : vector<16x256xf32>, vector<16x256xf32> -> vector<32x256xf32>
    %c11 = arith.constant 11 : index
    %c0_129 = arith.constant 0 : index
    %c0_130 = arith.constant 0 : index
    %286 = vector.load %arg4[%c11, %c0_129, %c0_130] : memref<12x16x32xf32, #tpu.memory_space<vmem>>, vector<1x16x32xf32>
    %287 = vector.shape_cast %286 : vector<1x16x32xf32> to vector<16x32xf32>
    %cst_131 = arith.constant dense<0.000000e+00> : vector<16x256xf32>
    %288 = tpu.matmul %287, %285, %cst_131 {dimension_numbers = #tpu.dot_dimension_numbers<[1], [0], [0], [1], [0, 0, 1, 1], [], []>} : vector<16x32xf32>, vector<32x256xf32>, vector<16x256xf32> -> vector<16x256xf32>
    %c11_132 = arith.constant 11 : index
    %c0_133 = arith.constant 0 : index
    %c0_134 = arith.constant 0 : index
    %289 = vector.load %arg5[%c11_132, %c0_133, %c0_134] : memref<12x16x1xf32, #tpu.memory_space<vmem>>, vector<1x16x1xf32>
    %290 = vector.shape_cast %289 : vector<1x16x1xf32> to vector<16x1xf32>
    %291 = vector.broadcast %290 : vector<16x1xf32> to vector<16x256xf32>
    %292 = arith.addf %288, %291 : vector<16x256xf32>
    %cst_135 = arith.constant 0.000000e+00 : f32
    %293 = vector.broadcast %cst_135 : f32 to vector<16x256xf32>
    %294 = arith.cmpf ogt, %292, %293 : vector<16x256xf32>
    %cst_136 = arith.constant 2.000000e-01 : f32
    %295 = vector.broadcast %cst_136 : f32 to vector<16x256xf32>
    %296 = arith.mulf %295, %292 : vector<16x256xf32>
    %297 = arith.select %294, %292, %296 : vector<16x256xi1>, vector<16x256xf32>
    %298 = arith.addf %278, %297 : vector<16x256xf32>
    %299 = arith.addf %279, %298 : vector<16x256xf32>
    %cst_137 = arith.constant dense<0.000000e+00> : vector<16xf32>
    %300 = vector.multi_reduction <add>, %299, %cst_137 [1] : vector<16x256xf32> to vector<16xf32>
    %301 = vector.shape_cast %300 : vector<16xf32> to vector<16x1xf32>
    %cst_138 = arith.constant 3.906250e-03 : f32
    %302 = vector.broadcast %cst_138 : f32 to vector<16x1xf32>
    %303 = arith.mulf %301, %302 : vector<16x1xf32>
    %c0_139 = arith.constant 0 : index
    %c0_140 = arith.constant 0 : index
    %c0_141 = arith.constant 0 : index
    %304 = vector.load %arg8[%c0_139, %c0_140, %c0_141] : memref<1x16x1xf32, #tpu.memory_space<vmem>>, vector<1x16x1xf32>
    %305 = vector.shape_cast %304 : vector<1x16x1xf32> to vector<16x1xf32>
    %306 = vector.shape_cast %303 : vector<16x1xf32> to vector<1x16x1xf32>
    tpu.vector_store %arg8[%c0_139, %c0_140, %c0_141], %306 {strides = array<i32>} : memref<1x16x1xf32, #tpu.memory_space<vmem>>, vector<1x16x1xf32>,
    %c3_i32_142 = arith.constant 3 : i32
    %307 = tpu.dynamic_rotate %299 by %c3_i32_142 dim 1 : vector<16x256xf32>, i32 -> vector<16x256xf32>
    %c3_i32_143 = arith.constant 3 : i32
    %308 = vector.broadcast %c3_i32_143 : i32 to vector<16x256xi32>
    %309 = arith.cmpi sge, %3, %308 : vector<16x256xi32>
    %cst_144 = arith.constant 0.000000e+00 : f32
    %310 = vector.broadcast %cst_144 : f32 to vector<16x256xf32>
    %311 = arith.select %309, %307, %310 : vector<16x256xi1>, vector<16x256xf32>
    %c2_i32_145 = arith.constant 2 : i32
    %312 = tpu.dynamic_rotate %299 by %c2_i32_145 dim 1 : vector<16x256xf32>, i32 -> vector<16x256xf32>
    %c2_i32_146 = arith.constant 2 : i32
    %313 = vector.broadcast %c2_i32_146 : i32 to vector<16x256xi32>
    %314 = arith.cmpi sge, %3, %313 : vector<16x256xi32>
    %cst_147 = arith.constant 0.000000e+00 : f32
    %315 = vector.broadcast %cst_147 : f32 to vector<16x256xf32>
    %316 = arith.select %314, %312, %315 : vector<16x256xi1>, vector<16x256xf32>
    %c1_i32_148 = arith.constant 1 : i32
    %317 = tpu.dynamic_rotate %299 by %c1_i32_148 dim 1 : vector<16x256xf32>, i32 -> vector<16x256xf32>
    %c1_i32_149 = arith.constant 1 : i32
    %318 = vector.broadcast %c1_i32_149 : i32 to vector<16x256xi32>
    %319 = arith.cmpi sge, %3, %318 : vector<16x256xi32>
    %cst_150 = arith.constant 0.000000e+00 : f32
    %320 = vector.broadcast %cst_150 : f32 to vector<16x256xf32>
    %321 = arith.select %319, %317, %320 : vector<16x256xi1>, vector<16x256xf32>
    %c255_i32_151 = arith.constant 255 : i32
    %322 = tpu.dynamic_rotate %299 by %c255_i32_151 dim 1 : vector<16x256xf32>, i32 -> vector<16x256xf32>
    %c255_i32_152 = arith.constant 255 : i32
    %323 = vector.broadcast %c255_i32_152 : i32 to vector<16x256xi32>
    %324 = arith.cmpi slt, %3, %323 : vector<16x256xi32>
    %cst_153 = arith.constant 0.000000e+00 : f32
    %325 = vector.broadcast %cst_153 : f32 to vector<16x256xf32>
    %326 = arith.select %324, %322, %325 : vector<16x256xi1>, vector<16x256xf32>
    %c254_i32_154 = arith.constant 254 : i32
    %327 = tpu.dynamic_rotate %299 by %c254_i32_154 dim 1 : vector<16x256xf32>, i32 -> vector<16x256xf32>
    %c254_i32_155 = arith.constant 254 : i32
    %328 = vector.broadcast %c254_i32_155 : i32 to vector<16x256xi32>
    %329 = arith.cmpi slt, %3, %328 : vector<16x256xi32>
    %cst_156 = arith.constant 0.000000e+00 : f32
    %330 = vector.broadcast %cst_156 : f32 to vector<16x256xf32>
    %331 = arith.select %329, %327, %330 : vector<16x256xi1>, vector<16x256xf32>
    %c253_i32_157 = arith.constant 253 : i32
    %332 = tpu.dynamic_rotate %299 by %c253_i32_157 dim 1 : vector<16x256xf32>, i32 -> vector<16x256xf32>
    %c253_i32_158 = arith.constant 253 : i32
    %333 = vector.broadcast %c253_i32_158 : i32 to vector<16x256xi32>
    %334 = arith.cmpi slt, %3, %333 : vector<16x256xi32>
    %cst_159 = arith.constant 0.000000e+00 : f32
    %335 = vector.broadcast %cst_159 : f32 to vector<16x256xf32>
    %336 = arith.select %334, %332, %335 : vector<16x256xi1>, vector<16x256xf32>
    %337 = tpu.concatenate %311, %316, %321, %299, %326, %331, %336 in 0 : vector<16x256xf32>, vector<16x256xf32>, vector<16x256xf32>, vector<16x256xf32>, vector<16x256xf32>, vector<16x256xf32>, vector<16x256xf32> -> vector<112x256xf32>
    %c0_160 = arith.constant 0 : index
    %c0_161 = arith.constant 0 : index
    %338 = vector.load %arg6[%c0_160, %c0_161] : memref<8x112xf32, #tpu.memory_space<vmem>>, vector<8x112xf32>
    %cst_162 = arith.constant dense<0.000000e+00> : vector<8x256xf32>
    %339 = tpu.matmul %338, %337, %cst_162 {dimension_numbers = #tpu.dot_dimension_numbers<[1], [0], [0], [1], [0, 0, 1, 1], [], []>} : vector<8x112xf32>, vector<112x256xf32>, vector<8x256xf32> -> vector<8x256xf32>
    %c0_163 = arith.constant 0 : index
    %c0_164 = arith.constant 0 : index
    %340 = vector.load %arg7[%c0_163, %c0_164] : memref<8x1xf32, #tpu.memory_space<vmem>>, vector<8x1xf32>
    %341 = vector.broadcast %340 : vector<8x1xf32> to vector<8x256xf32>
    %342 = arith.addf %339, %341 : vector<8x256xf32>
    %c0_165 = arith.constant 0 : index
    %c0_166 = arith.constant 0 : index
    %c0_167 = arith.constant 0 : index
    %343 = vector.load %arg9[%c0_165, %c0_166, %c0_167] : memref<1x8x256xf32, #tpu.memory_space<vmem>>, vector<1x8x256xf32>
    %344 = vector.shape_cast %343 : vector<1x8x256xf32> to vector<8x256xf32>
    %345 = vector.shape_cast %342 : vector<8x256xf32> to vector<1x8x256xf32>
    tpu.vector_store %arg9[%c0_165, %c0_166, %c0_167], %345 {strides = array<i32>} : memref<1x8x256xf32, #tpu.memory_space<vmem>>, vector<1x8x256xf32>,
    return
  }
  func.func @transform_0(%arg0: i32) -> (i32, i32, i32) {
    %c0_i32 = arith.constant 0 : i32
    %c0_i32_0 = arith.constant 0 : i32
    %c0_i32_1 = arith.constant 0 : i32
    return %arg0, %c0_i32, %c0_i32_0 : i32, i32, i32
  }
  func.func @transform_1(%arg0: i32) -> (i32, i32) {
    %c0_i32 = arith.constant 0 : i32
    %c0_i32_0 = arith.constant 0 : i32
    %c0_i32_1 = arith.constant 0 : i32
    return %c0_i32, %c0_i32_0 : i32, i32
  }
  func.func @transform_2(%arg0: i32) -> (i32, i32) {
    %c0_i32 = arith.constant 0 : i32
    %c0_i32_0 = arith.constant 0 : i32
    %c0_i32_1 = arith.constant 0 : i32
    return %c0_i32, %c0_i32_0 : i32, i32
  }
  func.func @transform_3(%arg0: i32) -> (i32, i32, i32) {
    %c0_i32 = arith.constant 0 : i32
    %c0_i32_0 = arith.constant 0 : i32
    %c0_i32_1 = arith.constant 0 : i32
    %c0_i32_2 = arith.constant 0 : i32
    return %c0_i32, %c0_i32_0, %c0_i32_1 : i32, i32, i32
  }
  func.func @transform_4(%arg0: i32) -> (i32, i32, i32) {
    %c0_i32 = arith.constant 0 : i32
    %c0_i32_0 = arith.constant 0 : i32
    %c0_i32_1 = arith.constant 0 : i32
    %c0_i32_2 = arith.constant 0 : i32
    return %c0_i32, %c0_i32_0, %c0_i32_1 : i32, i32, i32
  }
  func.func @transform_5(%arg0: i32) -> (i32, i32) {
    %c0_i32 = arith.constant 0 : i32
    %c0_i32_0 = arith.constant 0 : i32
    %c0_i32_1 = arith.constant 0 : i32
    return %c0_i32, %c0_i32_0 : i32, i32
  }
  func.func @transform_6(%arg0: i32) -> (i32, i32) {
    %c0_i32 = arith.constant 0 : i32
    %c0_i32_0 = arith.constant 0 : i32
    %c0_i32_1 = arith.constant 0 : i32
    return %c0_i32, %c0_i32_0 : i32, i32
  }
  func.func @transform_7(%arg0: i32) -> (i32, i32, i32) {
    %c0_i32 = arith.constant 0 : i32
    %c0_i32_0 = arith.constant 0 : i32
    %c0_i32_1 = arith.constant 0 : i32
    return %arg0, %c0_i32, %c0_i32_0 : i32, i32, i32
  }
  func.func @transform_8(%arg0: i32) -> (i32, i32, i32) {
    %c0_i32 = arith.constant 0 : i32
    %c0_i32_0 = arith.constant 0 : i32
    %c0_i32_1 = arith.constant 0 : i32
    return %arg0, %c0_i32, %c0_i32_0 : i32, i32, i32
  }
}

module attributes {stable_mosaic.version = 11 : i64} {
  func.func @_sparse_synth_kernel(%arg0: i32, %arg1: memref<2xf32, #tpu.memory_space<smem>>, %arg2: memref<1x8x256xf32, #tpu.memory_space<vmem>>, %arg3: memref<8x64xf32, #tpu.memory_space<vmem>>, %arg4: memref<1x8x256xf32, #tpu.memory_space<vmem>>, %arg5: memref<1x1x256xf32, #tpu.memory_space<vmem>>) attributes {dimension_semantics = [#tpu.dimension_semantics<parallel>], iteration_bounds = array<i64: 2>, scalar_prefetch = 1 : i64, scratch_operands = 0 : i64, tpu.core_type = #tpu.core_type<tc>, window_params = [{transform_indices = @transform_0, window_bounds = array<i64: 1, 8, 256>}, {pipeline_mode = #tpu.pipeline_mode<synchronous>, transform_indices = @transform_1, window_bounds = array<i64: 8, 64>}, {transform_indices = @transform_2, window_bounds = array<i64: 1, 8, 256>}, {transform_indices = @transform_3, window_bounds = array<i64: 1, 1, 256>}]} {
    %0 = arith.index_cast %arg0 : i32 to index
    %1 = memref.load %arg1[%0] : memref<2xf32, #tpu.memory_space<smem>>
    %c0 = arith.constant 0 : index
    %c0_0 = arith.constant 0 : index
    %c0_1 = arith.constant 0 : index
    %2 = vector.load %arg2[%c0, %c0_0, %c0_1] : memref<1x8x256xf32, #tpu.memory_space<vmem>>, vector<1x8x256xf32>
    %3 = vector.shape_cast %2 : vector<1x8x256xf32> to vector<8x256xf32>
    %4 = vector.broadcast %1 : f32 to vector<8x256xf32>
    %5 = arith.cmpf oge, %3, %4 : vector<8x256xf32>
    %cst = arith.constant 0.000000e+00 : f32
    %6 = vector.broadcast %cst : f32 to vector<8x256xf32>
    %7 = arith.select %5, %3, %6 : vector<8x256xi1>, vector<8x256xf32>
    %cst_2 = arith.constant 0.000000e+00 : f32
    %8 = vector.broadcast %cst_2 : f32 to vector<8x256xf32>
    %9 = arith.maximumf %7, %8 : vector<8x256xf32>
    %c0_3 = arith.constant 0 : index
    %c0_4 = arith.constant 0 : index
    %c0_5 = arith.constant 0 : index
    %10 = vector.load %arg4[%c0_3, %c0_4, %c0_5] : memref<1x8x256xf32, #tpu.memory_space<vmem>>, vector<1x8x256xf32>
    %11 = vector.shape_cast %10 : vector<1x8x256xf32> to vector<8x256xf32>
    %12 = vector.shape_cast %9 : vector<8x256xf32> to vector<1x8x256xf32>
    tpu.vector_store %arg4[%c0_3, %c0_4, %c0_5], %12 {strides = array<i32>} : memref<1x8x256xf32, #tpu.memory_space<vmem>>, vector<1x8x256xf32>,
    %c0_6 = arith.constant 0 : index
    %c0_7 = arith.constant 0 : index
    %13 = vector.load %arg3[%c0_6, %c0_7] : memref<8x64xf32, #tpu.memory_space<vmem>>, vector<8x64xf32>
    %cst_8 = arith.constant dense<0.000000e+00> : vector<64x256xf32>
    %14 = tpu.matmul %13, %9, %cst_8 {dimension_numbers = #tpu.dot_dimension_numbers<[0], [0], [1], [1], [0, 1, 1, 1], [], []>} : vector<8x64xf32>, vector<8x256xf32>, vector<64x256xf32> -> vector<64x256xf32>
    %c0_i32 = arith.constant 0 : i32
    %15 = tpu.dynamic_rotate %14 by %c0_i32 dim 1 {stride = 1 : si32, stride_dimension = 0 : si32} : vector<64x256xf32>, i32 -> vector<64x256xf32>
    %16 = tpu.iota {dimensions = array<i32: 0>} : vector<64x256xi32>
    %17 = tpu.iota {dimensions = array<i32: 1>} : vector<64x256xi32>
    %18 = arith.cmpi sge, %17, %16 : vector<64x256xi32>
    %cst_9 = arith.constant 0.000000e+00 : f32
    %19 = vector.broadcast %cst_9 : f32 to vector<64x256xf32>
    %20 = arith.select %18, %15, %19 : vector<64x256xi1>, vector<64x256xf32>
    %cst_10 = arith.constant dense<0.000000e+00> : vector<256xf32>
    %21 = vector.multi_reduction <add>, %20, %cst_10 [0] : vector<64x256xf32> to vector<256xf32>
    %22 = vector.shape_cast %21 : vector<256xf32> to vector<1x256xf32>
    %c0_11 = arith.constant 0 : index
    %c0_12 = arith.constant 0 : index
    %c0_13 = arith.constant 0 : index
    %23 = vector.load %arg5[%c0_11, %c0_12, %c0_13] : memref<1x1x256xf32, #tpu.memory_space<vmem>>, vector<1x1x256xf32>
    %24 = vector.shape_cast %23 : vector<1x1x256xf32> to vector<1x256xf32>
    %25 = vector.shape_cast %22 : vector<1x256xf32> to vector<1x1x256xf32>
    tpu.vector_store %arg5[%c0_11, %c0_12, %c0_13], %25 {strides = array<i32>} : memref<1x1x256xf32, #tpu.memory_space<vmem>>, vector<1x1x256xf32>,
    return
  }
  func.func @transform_0(%arg0: i32, %arg1: memref<2xf32, #tpu.memory_space<smem>>) -> (i32, i32, i32) {
    %c0_i32 = arith.constant 0 : i32
    %c0_i32_0 = arith.constant 0 : i32
    %c0_i32_1 = arith.constant 0 : i32
    return %arg0, %c0_i32, %c0_i32_0 : i32, i32, i32
  }
  func.func @transform_1(%arg0: i32, %arg1: memref<2xf32, #tpu.memory_space<smem>>) -> (i32, i32) {
    %c0_i32 = arith.constant 0 : i32
    %c0_i32_0 = arith.constant 0 : i32
    %c0_i32_1 = arith.constant 0 : i32
    return %c0_i32, %c0_i32_0 : i32, i32
  }
  func.func @transform_2(%arg0: i32, %arg1: memref<2xf32, #tpu.memory_space<smem>>) -> (i32, i32, i32) {
    %c0_i32 = arith.constant 0 : i32
    %c0_i32_0 = arith.constant 0 : i32
    %c0_i32_1 = arith.constant 0 : i32
    return %arg0, %c0_i32, %c0_i32_0 : i32, i32, i32
  }
  func.func @transform_3(%arg0: i32, %arg1: memref<2xf32, #tpu.memory_space<smem>>) -> (i32, i32, i32) {
    %c0_i32 = arith.constant 0 : i32
    %c0_i32_0 = arith.constant 0 : i32
    %c0_i32_1 = arith.constant 0 : i32
    return %arg0, %c0_i32, %c0_i32_0 : i32, i32, i32
  }
}

</mosaic_0001>

<llo_original>
// kernel: model_forward.2
$region0: #{model_forward.2}
  #allocation0 [shape = 'u32[]', space=smem, size = 0x4, offset = 0x4, fixed_abs, tag = 'smem constant byte address 0x4 - core index']
  #allocation1 [shape = 'u32[72,128]{1,0:T(1,128)}', space=vmem, size = 0x9000, scoped, tag = 'internal scratch']
  %s0 = inlined_call_operand.vmem [shape: f32[2,1,256], index: 0, kind: input, shape index: {}]
  %s1 = inlined_call_operand.vmem [shape: f32[16,7], index: 1, kind: input, shape index: {}]
  %s2 = inlined_call_operand.vmem [shape: f32[16,1], index: 2, kind: input, shape index: {}]
  %s3 = inlined_call_operand.vmem [shape: f32[12,16,32], index: 3, kind: input, shape index: {}]
  %s4 = inlined_call_operand.vmem [shape: f32[12,16,1], index: 4, kind: input, shape index: {}]
  %s5 = inlined_call_operand.vmem [shape: f32[8,112], index: 5, kind: input, shape index: {}]
  %s6 = inlined_call_operand.vmem [shape: f32[8,1], index: 6, kind: input, shape index: {}]
  %s7 = inlined_call_operand.vmem [shape: f32[2,16,1], index: 7, kind: output, shape index: {0}]
  %s8 = inlined_call_operand.vmem [shape: f32[2,8,256], index: 8, kind: output, shape index: {1}]
  %9 = xla_tuple %s7, %s8
  %s10 = sld [smem:[#allocation0]]
  $region69: #{model_forward.2} parent=0
    _
  %s12 = ssub.s32 1, %s10
  %s13 = scalar_select 0, %s12, %s10
  loop: start=0, step=1, limit=4
  $region2: #{model_forward.2} parent=0 // loop_pre_header
    _
  $region3: #{model_forward.2} parent=0 // loop_header
    %s15 = sphi 0, %s19
    %p16 = scmp.ge.s32.totalorder %s15, 4
    %s25 = sphi 0, %s27
    %s28 = sphi 0, %s25
    %s29 = sphi 0, %s28
    %s45 = sphi 0, %s29
    %s49 = sphi 0, %s49
    %s51 = sphi 0, %s49
    %s52 = sphi 0, %s51
    %s66 = sphi 0, %s52
    %s70 = sphi 0, %s70
    %s72 = sphi 0, %s70
    %s73 = sphi 0, %s72
    %s87 = sphi 0, %s73
    %s91 = sphi 0, %s91
    %s93 = sphi 0, %s91
    %s94 = sphi 0, %s93
    %s108 = sphi 0, %s94
    %s112 = sphi 0, %s112
    %s114 = sphi 0, %s112
    %s115 = sphi 0, %s114
    %s129 = sphi 0, %s115
    %s133 = sphi 0, %s133
    %s135 = sphi 0, %s133
    %s136 = sphi 0, %s135
    %s150 = sphi 0, %s136
    %s154 = sphi 0, %s154
    %s156 = sphi 0, %s154
    %s157 = sphi 0, %s156
    %s171 = sphi 0, %s157
    %s177 = sphi 0, %s179
    %s180 = sphi 0, %s177
    %s181 = sphi 0, %s180
    %s197 = sphi 0, %s181
    %s203 = sphi 0, %s205
    %s206 = sphi 0, %s203
    %s207 = sphi 0, %s206
    %s223 = sphi 0, %s207
  $region4: #{model_forward.2} parent=0 // loop_header_branch
    %18 = sbr.rel (%p16) target = $region8
  $region5: #{model_forward.2} parent=0 // loop_body
    %s20 = ssub.s32 %s15, 1
    %s21 = ssub.s32 %s15, 2
    %s22 = sadd.s32 %s15, 1
    %s23 = ssub.s32 %s15, %s22
    %p24 = scmp.eq.s32.totalorder %s23, 0
    %s26 = sadd.s32 %s25, 1
    %s27 = scalar_select %p24, %s25, %s26
    %p30 = pneg %p24
    %p31 = scmp.eq.s32.totalorder %s15, 1
    %p32 = por %p30, %p31
    %p33 = scmp.ne.s32.totalorder %s25, %s28
    %p34 = scmp.eq.s32.totalorder %s15, 0
    %p35 = por %p33, %p34
    %p36 = scmp.ne.s32.totalorder %s25, %s28
    %p37 = scmp.eq.s32.totalorder %s20, 1
    %p38 = por %p36, %p37
    %p39 = scmp.ne.s32.totalorder %s28, %s29
    %p40 = scmp.eq.s32.totalorder %s20, 0
    %p41 = por %p39, %p40
    %p42 = scmp.ne.s32.totalorder %s28, %s29
    %p43 = scmp.eq.s32.totalorder %s21, 1
    %p44 = por %p42, %p43
    %p46 = scmp.ne.s32.totalorder %s29, %s45
    %p47 = scmp.eq.s32.totalorder %s21, 0
    %p48 = por %p46, %p47
    %s50 = sadd.s32 %s49, 1
    %p53 = scmp.eq.s32.totalorder %s15, 1
    %p54 = scmp.ne.s32.totalorder %s49, %s51
    %p55 = scmp.eq.s32.totalorder %s15, 0
    %p56 = por %p54, %p55
    %p57 = scmp.ne.s32.totalorder %s49, %s51
    %p58 = scmp.eq.s32.totalorder %s20, 1
    %p59 = por %p57, %p58
    %p60 = scmp.ne.s32.totalorder %s51, %s52
    %p61 = scmp.eq.s32.totalorder %s20, 0
    %p62 = por %p60, %p61
    %p63 = scmp.ne.s32.totalorder %s51, %s52
    %p64 = scmp.eq.s32.totalorder %s21, 1
    %p65 = por %p63, %p64
    %p67 = scmp.ne.s32.totalorder %s52, %s66
    %p68 = scmp.eq.s32.totalorder %s21, 0
    %p69 = por %p67, %p68
    %s71 = sadd.s32 %s70, 1
    %p74 = scmp.eq.s32.totalorder %s15, 1
    %p75 = scmp.ne.s32.totalorder %s70, %s72
    %p76 = scmp.eq.s32.totalorder %s15, 0
    %p77 = por %p75, %p76
    %p78 = scmp.ne.s32.totalorder %s70, %s72
    %p79 = scmp.eq.s32.totalorder %s20, 1
    %p80 = por %p78, %p79
    %p81 = scmp.ne.s32.totalorder %s72, %s73
    %p82 = scmp.eq.s32.totalorder %s20, 0
    %p83 = por %p81, %p82
    %p84 = scmp.ne.s32.totalorder %s72, %s73
    %p85 = scmp.eq.s32.totalorder %s21, 1
    %p86 = por %p84, %p85
    %p88 = scmp.ne.s32.totalorder %s73, %s87
    %p89 = scmp.eq.s32.totalorder %s21, 0
    %p90 = por %p88, %p89
    %s92 = sadd.s32 %s91, 1
    %p95 = scmp.eq.s32.totalorder %s15, 1
    %p96 = scmp.ne.s32.totalorder %s91, %s93
    %p97 = scmp.eq.s32.totalorder %s15, 0
    %p98 = por %p96, %p97
    %p99 = scmp.ne.s32.totalorder %s91, %s93
    %p100 = scmp.eq.s32.totalorder %s20, 1
    %p101 = por %p99, %p100
    %p102 = scmp.ne.s32.totalorder %s93, %s94
    %p103 = scmp.eq.s32.totalorder %s20, 0
    %p104 = por %p102, %p103
    %p105 = scmp.ne.s32.totalorder %s93, %s94
    %p106 = scmp.eq.s32.totalorder %s21, 1
    %p107 = por %p105, %p106
    %p109 = scmp.ne.s32.totalorder %s94, %s108
    %p110 = scmp.eq.s32.totalorder %s21, 0
    %p111 = por %p109, %p110
    %s113 = sadd.s32 %s112, 1
    %p116 = scmp.eq.s32.totalorder %s15, 1
    %p117 = scmp.ne.s32.totalorder %s112, %s114
    %p118 = scmp.eq.s32.totalorder %s15, 0
    %p119 = por %p117, %p118
    %p120 = scmp.ne.s32.totalorder %s112, %s114
    %p121 = scmp.eq.s32.totalorder %s20, 1
    %p122 = por %p120, %p121
    %p123 = scmp.ne.s32.totalorder %s114, %s115
    %p124 = scmp.eq.s32.totalorder %s20, 0
    %p125 = por %p123, %p124
    %p126 = scmp.ne.s32.totalorder %s114, %s115
    %p127 = scmp.eq.s32.totalorder %s21, 1
    %p128 = por %p126, %p127
    %p130 = scmp.ne.s32.totalorder %s115, %s129
    %p131 = scmp.eq.s32.totalorder %s21, 0
    %p132 = por %p130, %p131
    %s134 = sadd.s32 %s133, 1
    %p137 = scmp.eq.s32.totalorder %s15, 1
    %p138 = scmp.ne.s32.totalorder %s133, %s135
    %p139 = scmp.eq.s32.totalorder %s15, 0
    %p140 = por %p138, %p139
    %p141 = scmp.ne.s32.totalorder %s133, %s135
    %p142 = scmp.eq.s32.totalorder %s20, 1
    %p143 = por %p141, %p142
    %p144 = scmp.ne.s32.totalorder %s135, %s136
    %p145 = scmp.eq.s32.totalorder %s20, 0
    %p146 = por %p144, %p145
    %p147 = scmp.ne.s32.totalorder %s135, %s136
    %p148 = scmp.eq.s32.totalorder %s21, 1
    %p149 = por %p147, %p148
    %p151 = scmp.ne.s32.totalorder %s136, %s150
    %p152 = scmp.eq.s32.totalorder %s21, 0
    %p153 = por %p151, %p152
    %s155 = sadd.s32 %s154, 1
    %p158 = scmp.eq.s32.totalorder %s15, 1
    %p159 = scmp.ne.s32.totalorder %s154, %s156
    %p160 = scmp.eq.s32.totalorder %s15, 0
    %p161 = por %p159, %p160
    %p162 = scmp.ne.s32.totalorder %s154, %s156
    %p163 = scmp.eq.s32.totalorder %s20, 1
    %p164 = por %p162, %p163
    %p165 = scmp.ne.s32.totalorder %s156, %s157
    %p166 = scmp.eq.s32.totalorder %s20, 0
    %p167 = por %p165, %p166
    %p168 = scmp.ne.s32.totalorder %s156, %s157
    %p169 = scmp.eq.s32.totalorder %s21, 1
    %p170 = por %p168, %p169
    %p172 = scmp.ne.s32.totalorder %s157, %s171
    %p173 = scmp.eq.s32.totalorder %s21, 0
    %p174 = por %p172, %p173
    %s175 = ssub.s32 %s15, %s22
    %p176 = scmp.eq.s32.totalorder %s175, 0
    %s178 = sadd.s32 %s177, 1
    %s179 = scalar_select %p176, %s177, %s178
    %p182 = pneg %p176
    %p183 = scmp.eq.s32.totalorder %s15, 1
    %p184 = por %p182, %p183
    %p185 = scmp.ne.s32.totalorder %s177, %s180
    %p186 = scmp.eq.s32.totalorder %s15, 0
    %p187 = por %p185, %p186
    %p188 = scmp.ne.s32.totalorder %s177, %s180
    %p189 = scmp.eq.s32.totalorder %s20, 1
    %p190 = por %p188, %p189
    %p191 = scmp.ne.s32.totalorder %s180, %s181
    %p192 = scmp.eq.s32.totalorder %s20, 0
    %p193 = por %p191, %p192
    %p194 = scmp.ne.s32.totalorder %s180, %s181
    %p195 = scmp.eq.s32.totalorder %s21, 1
    %p196 = por %p194, %p195
    %p198 = scmp.ne.s32.totalorder %s181, %s197
    %p199 = scmp.eq.s32.totalorder %s21, 0
    %p200 = por %p198, %p199
    %s201 = ssub.s32 %s15, %s22
    %p202 = scmp.eq.s32.totalorder %s201, 0
    %s204 = sadd.s32 %s203, 1
    %s205 = scalar_select %p202, %s203, %s204
    %p208 = pneg %p202
    %p209 = scmp.eq.s32.totalorder %s15, 1
    %p210 = por %p208, %p209
    %p211 = scmp.ne.s32.totalorder %s203, %s206
    %p212 = scmp.eq.s32.totalorder %s15, 0
    %p213 = por %p211, %p212
    %p214 = scmp.ne.s32.totalorder %s203, %s206
    %p215 = scmp.eq.s32.totalorder %s20, 1
    %p216 = por %p214, %p215
    %p217 = scmp.ne.s32.totalorder %s206, %s207
    %p218 = scmp.eq.s32.totalorder %s20, 0
    %p219 = por %p217, %p218
    %p220 = scmp.ne.s32.totalorder %s206, %s207
    %p221 = scmp.eq.s32.totalorder %s21, 1
    %p222 = por %p220, %p221
    %p224 = scmp.ne.s32.totalorder %s207, %s223
    %p225 = scmp.eq.s32.totalorder %s21, 0
    %p226 = por %p224, %p225
    %p227 = scmp.le.s32.totalorder 1, %s15
    %p228 = scmp.lt.s32.totalorder %s15, 3
    %p229 = pnand %p227, %p228
    %p230 = pneg %p229
    // Predicated region
    $region9: #{model_forward.2} parent=5 // pred_check
      _
    $region10: #{model_forward.2} parent=5 // pred_check_branch
      %232 = sbr.rel (%p229) target = $region12
    $region11: #{model_forward.2} parent=5 // pred_region
      %s233 = ssub.s32 %s15, 1
      // Predicated region
      $region13: #{model_forward.2} parent=11 // pred_check
        %p234 = pneg %p62
      $region14: #{model_forward.2} parent=11 // pred_check_branch
        %236 = sbr.rel (%p234) target = $region16
      $region15: #{model_forward.2} parent=11 // pred_region
        _
      $region16: #{model_forward.2} parent=11 // pred_fallthru
        _
      // Predicated region
      $region17: #{model_forward.2} parent=11 // pred_check
        %p237 = pneg %p83
      $region18: #{model_forward.2} parent=11 // pred_check_branch
        %239 = sbr.rel (%p237) target = $region20
      $region19: #{model_forward.2} parent=11 // pred_region
        _
      $region20: #{model_forward.2} parent=11 // pred_fallthru
        _
      // Predicated region
      $region21: #{model_forward.2} parent=11 // pred_check
        %p240 = pneg %p104
      $region22: #{model_forward.2} parent=11 // pred_check_branch
        %242 = sbr.rel (%p240) target = $region24
      $region23: #{model_forward.2} parent=11 // pred_region
        _
      $region24: #{model_forward.2} parent=11 // pred_fallthru
        _
      // Predicated region
      $region25: #{model_forward.2} parent=11 // pred_check
        %p243 = pneg %p125
      $region26: #{model_forward.2} parent=11 // pred_check_branch
        %245 = sbr.rel (%p243) target = $region28
      $region27: #{model_forward.2} parent=11 // pred_region
        _
      $region28: #{model_forward.2} parent=11 // pred_fallthru
        _
      // Predicated region
      $region29: #{model_forward.2} parent=11 // pred_check
        %p246 = pneg %p146
      $region30: #{model_forward.2} parent=11 // pred_check_branch
        %248 = sbr.rel (%p246) target = $region32
      $region31: #{model_forward.2} parent=11 // pred_region
        _
      $region32: #{model_forward.2} parent=11 // pred_fallthru
        _
      // Predicated region
      $region33: #{model_forward.2} parent=11 // pred_check
        %p249 = pneg %p167
      $region34: #{model_forward.2} parent=11 // pred_check_branch
        %251 = sbr.rel (%p249) target = $region36
      $region35: #{model_forward.2} parent=11 // pred_region
        _
      $region36: #{model_forward.2} parent=11 // pred_fallthru
        _
    $region12: #{model_forward.2} parent=5 // pred_fallthru
      _
    %p252 = scmp.lt.s32.totalorder %s15, 2
    // Predicated region
    $region37: #{model_forward.2} parent=5 // pred_check
      %p253 = pneg %p252
    $region38: #{model_forward.2} parent=5 // pred_check_branch
      %255 = sbr.rel (%p253) target = $region40
    $region39: #{model_forward.2} parent=5 // pred_region
      // Predicated region
      $region41: #{model_forward.2} parent=39 // pred_check
        %p256 = pneg %p35
      $region42: #{model_forward.2} parent=39 // pred_check_branch
        %258 = sbr.rel (%p256) target = $region44
      $region43: #{model_forward.2} parent=39 // pred_region
        %p259 = scmp.lt.s32.totalorder %s15, 1
        %s260 = scalar_select %p259, %s15, 1
        %s261 = smul.addr %s260, 2
        %s262 = scalar_lea.vmem %s0, %s261
      $region44: #{model_forward.2} parent=39 // pred_fallthru
        _
    $region40: #{model_forward.2} parent=5 // pred_fallthru
      _
    %p263 = scmp.le.s32.totalorder 1, %s15
    %p264 = scmp.lt.s32.totalorder %s15, 3
    %p265 = pnand %p263, %p264
    %p266 = pneg %p265
    // Predicated region
    $region45: #{model_forward.2} parent=5 // pred_check
      _
    $region46: #{model_forward.2} parent=5 // pred_check_branch
      %268 = sbr.rel (%p265) target = $region48
    $region47: #{model_forward.2} parent=5 // pred_region
      %s269 = ssub.s32 %s15, 1
      %p270 = scmp.lt.s32.totalorder %s20, 1
      %s271 = scalar_select %p270, %s20, 1
      %s272 = smul.addr %s271, 2
      %s273 = scalar_lea.vmem %s0, %s272
      %p274 = pneg %p41
      %p275 = pneg %p38
      %p276 = pneg %p62
      %p277 = pneg %p59
      %p278 = pneg %p83
      %p279 = pneg %p80
      %p280 = pneg %p104
      %p281 = pneg %p101
      %p282 = pneg %p125
      %p283 = pneg %p122
      %p284 = pneg %p146
      %p285 = pneg %p143
      %p286 = pneg %p167
      %p287 = pneg %p164
      %p288 = pneg %p193
      %p289 = pneg %p190
      %p290 = scmp.lt.s32.totalorder %s20, 1
      %s291 = scalar_select %p290, %s20, 1
      %s292 = smul.addr %s291, 2
      %s293 = smul.addr %s292, 8
      %s294 = scalar_lea.vmem %s7, %s293
      %p295 = pneg %p219
      %p296 = pneg %p216
      %p297 = scmp.lt.s32.totalorder %s20, 1
      %s298 = scalar_select %p297, %s20, 1
      %s299 = smul.addr %s298, 2
      %s300 = smul.addr %s299, 8
      %s301 = scalar_lea.vmem %s8, %s300
      %p302 = scmp.lt.s32.totalorder %s20, 1
      %s303 = scalar_select %p302, %s20, 1
      %s304 = smul.addr %s303, 2
      %s305 = scalar_lea.vmem %s0, %s304
      %p306 = scmp.lt.s32.totalorder %s20, 1
      %s307 = scalar_select %p306, %s20, 1
      %s308 = smul.addr %s307, 2
      %s309 = smul.addr %s308, 8
      %s310 = scalar_lea.vmem %s7, %s309
      %p311 = scmp.lt.s32.totalorder %s20, 1
      %s312 = scalar_select %p311, %s20, 1
      %s313 = smul.addr %s312, 2
      %s314 = smul.addr %s313, 8
      %s315 = scalar_lea.vmem %s8, %s314
      %v316 = vld [vmem:[%s305] sm:$0x3]
      %v317 = vlaneseq
      %v318 = vand.u32 %v317, 127
      %v319 = vadd.s32 %v318, 128
      %v320 = vld [vmem:[%s1] sm:$0xff]
      %v321 = vld [vmem:[%s1 + $0x8] sm:$0xff]
      %v323 = vperm.slane %v316, 0
      %v324 = vperm.slane %v316, 1
      %327 = vrot.lane.b32.xlu0 %v323, 3
      %v328 = vpop.permute.xlu0 %327
      %329 = vrot.lane.b32.xlu0 %v324, 3
      %v330 = vpop.permute.xlu0 %329
      %vm331 = vcmp.lt.s32.totalorder %v318, 3
      %v332 = vsel %vm331, %v328, %v330
      %v333 = vsel %vm331, %v330, %v328
      %vm334 = vcmp.ge.s32.totalorder %v318, 3
      %vm335 = vcmp.ge.s32.totalorder %v319, 3
      %v336 = vsel %vm334, %v333, 0.0
      %v337 = vsel %vm335, %v332, 0.0
      %339 = vset.pattern.permute.xlu0 0
      %340 = vperm.xlu0 %339, %v320
      %v341 = vpop.permute.xlu0 %340
      %344 = vset.pattern.permute.xlu0 0
      %345 = vperm.xlu0 %344, %v321
      %v346 = vpop.permute.xlu0 %345
      %v348 = vperm.slane %v336, 0
      %v349 = vperm.slane %v337, 0
      %v350 = vmul.f32 %v341, %v348
      %v351 = vmul.f32 %v341, %v349
      %v352 = vmul.f32 %v346, %v348
      %v353 = vmul.f32 %v346, %v349
      %v354 = vadd.f32 %v350, 0.0
      %v355 = vadd.f32 %v351, 0.0
      %v356 = vadd.f32 %v352, 0.0
      %v357 = vadd.f32 %v353, 0.0
      %358 = vrot.lane.b32.xlu0 %v323, 2
      %v359 = vpop.permute.xlu0 %358
      %360 = vrot.lane.b32.xlu0 %v324, 2
      %v361 = vpop.permute.xlu0 %360
      %vm362 = vcmp.lt.s32.totalorder %v318, 2
      %v363 = vsel %vm362, %v359, %v361
      %v364 = vsel %vm362, %v361, %v359
      %vm365 = vcmp.ge.s32.totalorder %v318, 2
      %vm366 = vcmp.ge.s32.totalorder %v319, 2
      %v367 = vsel %vm365, %v364, 0.0
      %v368 = vsel %vm366, %v363, 0.0
      %369 = vset.pattern.permute.xlu0 1
      %370 = vperm.xlu0 %369, %v320
      %v371 = vpop.permute.xlu0 %370
      %373 = vset.pattern.permute.xlu0 1
      %374 = vperm.xlu0 %373, %v321
      %v375 = vpop.permute.xlu0 %374
      %v377 = vperm.slane %v367, 0
      %v378 = vperm.slane %v368, 0
      %v379 = vmul.f32 %v371, %v377
      %v380 = vmul.f32 %v371, %v378
      %v381 = vmul.f32 %v375, %v377
      %v382 = vmul.f32 %v375, %v378
      %v383 = vadd.f32 %v354, %v379
      %v384 = vadd.f32 %v355, %v380
      %v385 = vadd.f32 %v356, %v381
      %v386 = vadd.f32 %v357, %v382
      %387 = vrot.lane.b32.xlu0 %v323, 1
      %v388 = vpop.permute.xlu0 %387
      %389 = vrot.lane.b32.xlu0 %v324, 1
      %v390 = vpop.permute.xlu0 %389
      %vm391 = vcmp.lt.s32.totalorder %v318, 1
      %v392 = vsel %vm391, %v388, %v390
      %v393 = vsel %vm391, %v390, %v388
      %vm394 = vcmp.ge.s32.totalorder %v318, 1
      %vm395 = vcmp.ge.s32.totalorder %v319, 1
      %v396 = vsel %vm394, %v393, 0.0
      %v397 = vsel %vm395, %v392, 0.0
      %398 = vset.pattern.permute.xlu0 2
      %399 = vperm.xlu0 %398, %v320
      %v400 = vpop.permute.xlu0 %399
      %402 = vset.pattern.permute.xlu0 2
      %403 = vperm.xlu0 %402, %v321
      %v404 = vpop.permute.xlu0 %403
      %v406 = vperm.slane %v396, 0
      %v407 = vperm.slane %v397, 0
      %v408 = vmul.f32 %v400, %v406
      %v409 = vmul.f32 %v400, %v407
      %v410 = vmul.f32 %v404, %v406
      %v411 = vmul.f32 %v404, %v407
      %v412 = vadd.f32 %v383, %v408
      %v413 = vadd.f32 %v384, %v409
      %v414 = vadd.f32 %v385, %v410
      %v415 = vadd.f32 %v386, %v411
      %416 = vset.pattern.permute.xlu0 3
      %417 = vperm.xlu0 %416, %v320
      %v418 = vpop.permute.xlu0 %417
      %420 = vset.pattern.permute.xlu0 3
      %421 = vperm.xlu0 %420, %v321
      %v422 = vpop.permute.xlu0 %421
      %v424 = vmul.f32 %v418, %v323
      %v425 = vmul.f32 %v418, %v324
      %v426 = vmul.f32 %v422, %v323
      %v427 = vmul.f32 %v422, %v324
      %v428 = vadd.f32 %v412, %v424
      %v429 = vadd.f32 %v413, %v425
      %v430 = vadd.f32 %v414, %v426
      %v431 = vadd.f32 %v415, %v427
      %432 = vrot.lane.b32.xlu0 %v323, 127
      %v433 = vpop.permute.xlu0 %432
      %434 = vrot.lane.b32.xlu0 %v324, 127
      %v435 = vpop.permute.xlu0 %434
      %vm436 = vcmp.lt.s32.totalorder %v318, 127
      %v437 = vsel %vm436, %v433, %v435
      %v438 = vsel %vm436, %v435, %v433
      %vm439 = vcmp.lt.s32.totalorder %v318, 255
      %vm440 = vcmp.lt.s32.totalorder %v319, 255
      %v441 = vsel %vm439, %v437, 0.0
      %v442 = vsel %vm440, %v438, 0.0
      %443 = vset.pattern.permute.xlu0 4
      %444 = vperm.xlu0 %443, %v320
      %v445 = vpop.permute.xlu0 %444
      %447 = vset.pattern.permute.xlu0 4
      %448 = vperm.xlu0 %447, %v321
      %v449 = vpop.permute.xlu0 %448
      %v451 = vperm.slane %v441, 0
      %v452 = vperm.slane %v442, 0
      %v453 = vmul.f32 %v445, %v451
      %v454 = vmul.f32 %v445, %v452
      %v455 = vmul.f32 %v449, %v451
      %v456 = vmul.f32 %v449, %v452
      %v457 = vadd.f32 %v428, %v453
      %v458 = vadd.f32 %v429, %v454
      %v459 = vadd.f32 %v430, %v455
      %v460 = vadd.f32 %v431, %v456
      %461 = vrot.lane.b32.xlu0 %v323, 126
      %v462 = vpop.permute.xlu0 %461
      %463 = vrot.lane.b32.xlu0 %v324, 126
      %v464 = vpop.permute.xlu0 %463
      %vm465 = vcmp.lt.s32.totalorder %v318, 126
      %v466 = vsel %vm465, %v462, %v464
      %v467 = vsel %vm465, %v464, %v462
      %vm468 = vcmp.lt.s32.totalorder %v318, 254
      %vm469 = vcmp.lt.s32.totalorder %v319, 254
      %v470 = vsel %vm468, %v466, 0.0
      %v471 = vsel %vm469, %v467, 0.0
      %472 = vset.pattern.permute.xlu0 5
      %473 = vperm.xlu0 %472, %v320
      %v474 = vpop.permute.xlu0 %473
      %476 = vset.pattern.permute.xlu0 5
      %477 = vperm.xlu0 %476, %v321
      %v478 = vpop.permute.xlu0 %477
      %v480 = vperm.slane %v470, 0
      %v481 = vperm.slane %v471, 0
      %v482 = vmul.f32 %v474, %v480
      %v483 = vmul.f32 %v474, %v481
      %v484 = vmul.f32 %v478, %v480
      %v485 = vmul.f32 %v478, %v481
      %v486 = vadd.f32 %v457, %v482
      %v487 = vadd.f32 %v458, %v483
      %v488 = vadd.f32 %v459, %v484
      %v489 = vadd.f32 %v460, %v485
      %490 = vrot.lane.b32.xlu0 %v323, 125
      %v491 = vpop.permute.xlu0 %490
      %492 = vrot.lane.b32.xlu0 %v324, 125
      %v493 = vpop.permute.xlu0 %492
      %vm494 = vcmp.lt.s32.totalorder %v318, 125
      %v495 = vsel %vm494, %v491, %v493
      %v496 = vsel %vm494, %v493, %v491
      %vm497 = vcmp.lt.s32.totalorder %v318, 253
      %vm498 = vcmp.lt.s32.totalorder %v319, 253
      %v499 = vsel %vm497, %v495, 0.0
      %v500 = vsel %vm498, %v496, 0.0
      %501 = vset.pattern.permute.xlu0 6
      %502 = vperm.xlu0 %501, %v320
      %v503 = vpop.permute.xlu0 %502
      %505 = vset.pattern.permute.xlu0 6
      %506 = vperm.xlu0 %505, %v321
      %v507 = vpop.permute.xlu0 %506
      %v509 = vperm.slane %v499, 0
      %v510 = vperm.slane %v500, 0
      %v511 = vmul.f32 %v503, %v509
      %v512 = vmul.f32 %v503, %v510
      %v513 = vmul.f32 %v507, %v509
      %v514 = vmul.f32 %v507, %v510
      %v515 = vadd.f32 %v486, %v511
      %v516 = vadd.f32 %v487, %v512
      %v517 = vadd.f32 %v488, %v513
      %v518 = vadd.f32 %v489, %v514
      %v519 = vld [vmem:[%s2] sm:$0xff]
      %v520 = vld [vmem:[%s2 + $0x8] sm:$0xff]
      %522 = vset.pattern.permute.xlu0 0
      %523 = vperm.xlu0 %522, %v519
      %v524 = vpop.permute.xlu0 %523
      %527 = vset.pattern.permute.xlu0 0
      %528 = vperm.xlu0 %527, %v520
      %v529 = vpop.permute.xlu0 %528
      %v531 = vadd.f32 %v515, %v524
      %v532 = vadd.f32 %v516, %v524
      %v533 = vadd.f32 %v517, %v529
      %v534 = vadd.f32 %v518, %v529
      %535 = vrot.lane.b32.xlu0 %v531, 127
      %v536 = vpop.permute.xlu0 %535
      %537 = vrot.lane.b32.xlu0 %v533, 127
      %v538 = vpop.permute.xlu0 %537
      %539 = vrot.lane.b32.xlu0 %v532, 127
      %v540 = vpop.permute.xlu0 %539
      %541 = vrot.lane.b32.xlu0 %v534, 127
      %v542 = vpop.permute.xlu0 %541
      %v543 = vsel %vm436, %v536, %v540
      %v544 = vsel %vm436, %v538, %v542
      %v545 = vsel %vm436, %v540, %v536
      %v546 = vsel %vm436, %v542, %v538
      %v547 = vsel %vm439, %v543, 0.0
      %v548 = vsel %vm440, %v545, 0.0
      %v549 = vsel %vm439, %v544, 0.0
      %v550 = vsel %vm440, %v546, 0.0
      %v551 = vld [vmem:[%s3] sm:$0xff]
      %v552 = vld [vmem:[%s3 + $0x8] sm:$0xff]
      %v553 = vld [vmem:[%s4] sm:$0xff]
      %v554 = vld [vmem:[%s4 + $0x8] sm:$0xff]
      %556 = vset.pattern.permute.xlu0 0
      %557 = vperm.xlu0 %556, %v553
      %v558 = vpop.permute.xlu0 %557
      %561 = vset.pattern.permute.xlu0 0
      %562 = vperm.xlu0 %561, %v554
      %v563 = vpop.permute.xlu0 %562
      %vm565 = vcmask 261120
      %v567 = vsel %vm565, %v551, 0
      %v570 = vsel %vm565, %v552, 0
      %572 = vmatpush.msra.mxu0 0.0
      %573 = vmatpush.msra.mxu0 0.0
      %574 = vmatpush.msra.mxu0 0.0
      %575 = vmatpush.msra.mxu0 0.0
      %576 = vmatpush.msra.mxu0 0.0
      %577 = vmatpush.msra.mxu0 0.0
      %578 = vmatpush.msra.mxu0 0.0
      %579 = vmatpush.msra.mxu0 0.0
      %580 = vmatpush.msra.mxu0 0.0
      %581 = vmatpush.msra.mxu0 0.0
      %582 = vmatpush.msra.mxu0 0.0
      %583 = vmatpush.msra.mxu0 0.0
      %584 = vmatpush.msra.mxu0 %v549
      %585 = vmatpush.msra.mxu0 %v547
      %586 = vmatpush.msra.mxu0 %v533
      %587 = vmatpush.msra.mxu0 %v531
      %588 = vmatmul.f32.gmra.mxu0 %v567
      %v589 = vpop.f32.mrf.mxu0
      %v590 = vadd.f32 %v558, %v589
      %591 = vmatmul.f32.gmra.mxu0 %v570
      %v592 = vpop.f32.mrf.mxu0
      %v593 = vadd.f32 %v563, %v592
      %594 = vdwg.mxu0
      %595 = vmatpush.msra.mxu0 0.0
      %596 = vmatpush.msra.mxu0 0.0
      %597 = vmatpush.msra.mxu0 0.0
      %598 = vmatpush.msra.mxu0 0.0
      %599 = vmatpush.msra.mxu0 0.0
      %600 = vmatpush.msra.mxu0 0.0
      %601 = vmatpush.msra.mxu0 0.0
      %602 = vmatpush.msra.mxu0 0.0
      %603 = vmatpush.msra.mxu0 0.0
      %604 = vmatpush.msra.mxu0 0.0
      %605 = vmatpush.msra.mxu0 0.0
      %606 = vmatpush.msra.mxu0 0.0
      %607 = vmatpush.msra.mxu0 %v550
      %608 = vmatpush.msra.mxu0 %v548
      %609 = vmatpush.msra.mxu0 %v534
      %610 = vmatpush.msra.mxu0 %v532
      %611 = vmatmul.f32.gmra.mxu0 %v567
      %v612 = vpop.f32.mrf.mxu0
      %v613 = vadd.f32 %v558, %v612
      %614 = vmatmul.f32.gmra.mxu0 %v570
      %v615 = vpop.f32.mrf.mxu0
      %v616 = vadd.f32 %v563, %v615
      %617 = vdwg.mxu0
      %vm618 = vcmp.gt.f32.partialorder %v590, 0.0
      %vm619 = vcmp.gt.f32.partialorder %v613, 0.0
      %vm620 = vcmp.gt.f32.partialorder %v593, 0.0
      %vm621 = vcmp.gt.f32.partialorder %v616, 0.0
      %v622 = vmul.f32 %v590, 0.2
      %v623 = vmul.f32 %v613, 0.2
      %v624 = vmul.f32 %v593, 0.2
      %v625 = vmul.f32 %v616, 0.2
      %v626 = vsel %vm618, %v590, %v622
      %v627 = vsel %vm619, %v613, %v623
      %v628 = vsel %vm620, %v593, %v624
      %v629 = vsel %vm621, %v616, %v625
      %v630 = vadd.f32 %v531, %v626
      %v631 = vadd.f32 %v532, %v627
      %v632 = vadd.f32 %v533, %v628
      %v633 = vadd.f32 %v534, %v629
      %v634 = vadd.f32 %v630, 0.0
      %v635 = vadd.f32 %v631, 0.0
      %v636 = vadd.f32 %v632, 0.0
      %v637 = vadd.f32 %v633, 0.0
      %638 = vrot.lane.b32.xlu0 %v630, 126
      %v639 = vpop.permute.xlu0 %638
      %640 = vrot.lane.b32.xlu0 %v632, 126
      %v641 = vpop.permute.xlu0 %640
      %642 = vrot.lane.b32.xlu0 %v631, 126
      %v643 = vpop.permute.xlu0 %642
      %644 = vrot.lane.b32.xlu0 %v633, 126
      %v645 = vpop.permute.xlu0 %644
      %v646 = vsel %vm465, %v639, %v643
      %v647 = vsel %vm465, %v641, %v645
      %v648 = vsel %vm465, %v643, %v639
      %v649 = vsel %vm465, %v645, %v641
      %v650 = vsel %vm468, %v646, 0.0
      %v651 = vsel %vm469, %v648, 0.0
      %v652 = vsel %vm468, %v647, 0.0
      %v653 = vsel %vm469, %v649, 0.0
      %s654 = scalar_lea.vmem %s3, 16
      %v655 = vld [vmem:[%s654] sm:$0xff]
      %v656 = vld [vmem:[%s654 + $0x8] sm:$0xff]
      %s657 = scalar_lea.vmem %s4, 16
      %v658 = vld [vmem:[%s657] sm:$0xff]
      %v659 = vld [vmem:[%s657 + $0x8] sm:$0xff]
      %661 = vset.pattern.permute.xlu0 0
      %662 = vperm.xlu0 %661, %v658
      %v663 = vpop.permute.xlu0 %662
      %666 = vset.pattern.permute.xlu0 0
      %667 = vperm.xlu0 %666, %v659
      %v668 = vpop.permute.xlu0 %667
      %v671 = vsel %vm565, %v655, 0
      %v674 = vsel %vm565, %v656, 0
      %676 = vmatpush.msra.mxu0 0.0
      %677 = vmatpush.msra.mxu0 0.0
      %678 = vmatpush.msra.mxu0 0.0
      %679 = vmatpush.msra.mxu0 0.0
      %680 = vmatpush.msra.mxu0 0.0
      %681 = vmatpush.msra.mxu0 0.0
      %682 = vmatpush.msra.mxu0 0.0
      %683 = vmatpush.msra.mxu0 0.0
      %684 = vmatpush.msra.mxu0 0.0
      %685 = vmatpush.msra.mxu0 0.0
      %686 = vmatpush.msra.mxu0 0.0
      %687 = vmatpush.msra.mxu0 0.0
      %688 = vmatpush.msra.mxu0 %v652
      %689 = vmatpush.msra.mxu0 %v650
      %690 = vmatpush.msra.mxu0 %v632
      %691 = vmatpush.msra.mxu0 %v630
      %692 = vmatmul.f32.gmra.mxu0 %v671
      %v693 = vpop.f32.mrf.mxu0
      %v694 = vadd.f32 %v663, %v693
      %695 = vmatmul.f32.gmra.mxu0 %v674
      %v696 = vpop.f32.mrf.mxu0
      %v697 = vadd.f32 %v668, %v696
      %698 = vdwg.mxu0
      %699 = vmatpush.msra.mxu0 0.0
      %700 = vmatpush.msra.mxu0 0.0
      %701 = vmatpush.msra.mxu0 0.0
      %702 = vmatpush.msra.mxu0 0.0
      %703 = vmatpush.msra.mxu0 0.0
      %704 = vmatpush.msra.mxu0 0.0
      %705 = vmatpush.msra.mxu0 0.0
      %706 = vmatpush.msra.mxu0 0.0
      %707 = vmatpush.msra.mxu0 0.0
      %708 = vmatpush.msra.mxu0 0.0
      %709 = vmatpush.msra.mxu0 0.0
      %710 = vmatpush.msra.mxu0 0.0
      %711 = vmatpush.msra.mxu0 %v653
      %712 = vmatpush.msra.mxu0 %v651
      %713 = vmatpush.msra.mxu0 %v633
      %714 = vmatpush.msra.mxu0 %v631
      %715 = vmatmul.f32.gmra.mxu0 %v671
      %v716 = vpop.f32.mrf.mxu0
      %v717 = vadd.f32 %v663, %v716
      %718 = vmatmul.f32.gmra.mxu0 %v674
      %v719 = vpop.f32.mrf.mxu0
      %v720 = vadd.f32 %v668, %v719
      %721 = vdwg.mxu0
      %vm722 = vcmp.gt.f32.partialorder %v694, 0.0
      %vm723 = vcmp.gt.f32.partialorder %v717, 0.0
      %vm724 = vcmp.gt.f32.partialorder %v697, 0.0
      %vm725 = vcmp.gt.f32.partialorder %v720, 0.0
      %v726 = vmul.f32 %v694, 0.2
      %v727 = vmul.f32 %v717, 0.2
      %v728 = vmul.f32 %v697, 0.2
      %v729 = vmul.f32 %v720, 0.2
      %v730 = vsel %vm722, %v694, %v726
      %v731 = vsel %vm723, %v717, %v727
      %v732 = vsel %vm724, %v697, %v728
      %v733 = vsel %vm725, %v720, %v729
      %v734 = vadd.f32 %v630, %v730
      %v735 = vadd.f32 %v631, %v731
      %v736 = vadd.f32 %v632, %v732
      %v737 = vadd.f32 %v633, %v733
      %v738 = vadd.f32 %v634, %v734
      %v739 = vadd.f32 %v635, %v735
      %v740 = vadd.f32 %v636, %v736
      %v741 = vadd.f32 %v637, %v737
      %742 = vrot.lane.b32.xlu0 %v734, 124
      %v743 = vpop.permute.xlu0 %742
      %744 = vrot.lane.b32.xlu0 %v736, 124
      %v745 = vpop.permute.xlu0 %744
      %746 = vrot.lane.b32.xlu0 %v735, 124
      %v747 = vpop.permute.xlu0 %746
      %748 = vrot.lane.b32.xlu0 %v737, 124
      %v749 = vpop.permute.xlu0 %748
      %vm750 = vcmp.lt.s32.totalorder %v318, 124
      %v751 = vsel %vm750, %v743, %v747
      %v752 = vsel %vm750, %v745, %v749
      %v753 = vsel %vm750, %v747, %v743
      %v754 = vsel %vm750, %v749, %v745
      %vm755 = vcmp.lt.s32.totalorder %v318, 252
      %vm756 = vcmp.lt.s32.totalorder %v319, 252
      %v757 = vsel %vm755, %v751, 0.0
      %v758 = vsel %vm756, %v753, 0.0
      %v759 = vsel %vm755, %v752, 0.0
      %v760 = vsel %vm756, %v754, 0.0
      %s761 = scalar_lea.vmem %s3, 32
      %v762 = vld [vmem:[%s761] sm:$0xff]
      %v763 = vld [vmem:[%s761 + $0x8] sm:$0xff]
      %s764 = scalar_lea.vmem %s4, 32
      %v765 = vld [vmem:[%s764] sm:$0xff]
      %v766 = vld [vmem:[%s764 + $0x8] sm:$0xff]
      %768 = vset.pattern.permute.xlu0 0
      %769 = vperm.xlu0 %768, %v765
      %v770 = vpop.permute.xlu0 %769
      %773 = vset.pattern.permute.xlu0 0
      %774 = vperm.xlu0 %773, %v766
      %v775 = vpop.permute.xlu0 %774
      %v778 = vsel %vm565, %v762, 0
      %v781 = vsel %vm565, %v763, 0
      %783 = vmatpush.msra.mxu0 0.0
      %784 = vmatpush.msra.mxu0 0.0
      %785 = vmatpush.msra.mxu0 0.0
      %786 = vmatpush.msra.mxu0 0.0
      %787 = vmatpush.msra.mxu0 0.0
      %788 = vmatpush.msra.mxu0 0.0
      %789 = vmatpush.msra.mxu0 0.0
      %790 = vmatpush.msra.mxu0 0.0
      %791 = vmatpush.msra.mxu0 0.0
      %792 = vmatpush.msra.mxu0 0.0
      %793 = vmatpush.msra.mxu0 0.0
      %794 = vmatpush.msra.mxu0 0.0
      %795 = vmatpush.msra.mxu0 %v759
      %796 = vmatpush.msra.mxu0 %v757
      %797 = vmatpush.msra.mxu0 %v736
      %798 = vmatpush.msra.mxu0 %v734
      %799 = vmatmul.f32.gmra.mxu0 %v778
      %v800 = vpop.f32.mrf.mxu0
      %v801 = vadd.f32 %v770, %v800
      %802 = vmatmul.f32.gmra.mxu0 %v781
      %v803 = vpop.f32.mrf.mxu0
      %v804 = vadd.f32 %v775, %v803
      %805 = vdwg.mxu0
      %806 = vmatpush.msra.mxu0 0.0
      %807 = vmatpush.msra.mxu0 0.0
      %808 = vmatpush.msra.mxu0 0.0
      %809 = vmatpush.msra.mxu0 0.0
      %810 = vmatpush.msra.mxu0 0.0
      %811 = vmatpush.msra.mxu0 0.0
      %812 = vmatpush.msra.mxu0 0.0
      %813 = vmatpush.msra.mxu0 0.0
      %814 = vmatpush.msra.mxu0 0.0
      %815 = vmatpush.msra.mxu0 0.0
      %816 = vmatpush.msra.mxu0 0.0
      %817 = vmatpush.msra.mxu0 0.0
      %818 = vmatpush.msra.mxu0 %v760
      %819 = vmatpush.msra.mxu0 %v758
      %820 = vmatpush.msra.mxu0 %v737
      %821 = vmatpush.msra.mxu0 %v735
      %822 = vmatmul.f32.gmra.mxu0 %v778
      %v823 = vpop.f32.mrf.mxu0
      %v824 = vadd.f32 %v770, %v823
      %825 = vmatmul.f32.gmra.mxu0 %v781
      %v826 = vpop.f32.mrf.mxu0
      %v827 = vadd.f32 %v775, %v826
      %828 = vdwg.mxu0
      %vm829 = vcmp.gt.f32.partialorder %v801, 0.0
      %vm830 = vcmp.gt.f32.partialorder %v824, 0.0
      %vm831 = vcmp.gt.f32.partialorder %v804, 0.0
      %vm832 = vcmp.gt.f32.partialorder %v827, 0.0
      %v833 = vmul.f32 %v801, 0.2
      %v834 = vmul.f32 %v824, 0.2
      %v835 = vmul.f32 %v804, 0.2
      %v836 = vmul.f32 %v827, 0.2
      %v837 = vsel %vm829, %v801, %v833
      %v838 = vsel %vm830, %v824, %v834
      %v839 = vsel %vm831, %v804, %v835
      %v840 = vsel %vm832, %v827, %v836
      %v841 = vadd.f32 %v734, %v837
      %v842 = vadd.f32 %v735, %v838
      %v843 = vadd.f32 %v736, %v839
      %v844 = vadd.f32 %v737, %v840
      %v845 = vadd.f32 %v738, %v841
      %v846 = vadd.f32 %v739, %v842
      %v847 = vadd.f32 %v740, %v843
      %v848 = vadd.f32 %v741, %v844
      %849 = vrot.lane.b32.xlu0 %v841, 120
      %v850 = vpop.permute.xlu0 %849
      %851 = vrot.lane.b32.xlu0 %v843, 120
      %v852 = vpop.permute.xlu0 %851
      %853 = vrot.lane.b32.xlu0 %v842, 120
      %v854 = vpop.permute.xlu0 %853
      %855 = vrot.lane.b32.xlu0 %v844, 120
      %v856 = vpop.permute.xlu0 %855
      %vm857 = vcmp.lt.s32.totalorder %v318, 120
      %v858 = vsel %vm857, %v850, %v854
      %v859 = vsel %vm857, %v852, %v856
      %v860 = vsel %vm857, %v854, %v850
      %v861 = vsel %vm857, %v856, %v852
      %vm862 = vcmp.lt.s32.totalorder %v318, 248
      %vm863 = vcmp.lt.s32.totalorder %v319, 248
      %v864 = vsel %vm862, %v858, 0.0
      %v865 = vsel %vm863, %v860, 0.0
      %v866 = vsel %vm862, %v859, 0.0
      %v867 = vsel %vm863, %v861, 0.0
      %s868 = scalar_lea.vmem %s3, 48
      %v869 = vld [vmem:[%s868] sm:$0xff]
      %v870 = vld [vmem:[%s868 + $0x8] sm:$0xff]
      %s871 = scalar_lea.vmem %s4, 48
      %v872 = vld [vmem:[%s871] sm:$0xff]
      %v873 = vld [vmem:[%s871 + $0x8] sm:$0xff]
      %875 = vset.pattern.permute.xlu0 0
      %876 = vperm.xlu0 %875, %v872
      %v877 = vpop.permute.xlu0 %876
      %880 = vset.pattern.permute.xlu0 0
      %881 = vperm.xlu0 %880, %v873
      %v882 = vpop.permute.xlu0 %881
      %v885 = vsel %vm565, %v869, 0
      %v888 = vsel %vm565, %v870, 0
      %890 = vmatpush.msra.mxu0 0.0
      %891 = vmatpush.msra.mxu0 0.0
      %892 = vmatpush.msra.mxu0 0.0
      %893 = vmatpush.msra.mxu0 0.0
      %894 = vmatpush.msra.mxu0 0.0
      %895 = vmatpush.msra.mxu0 0.0
      %896 = vmatpush.msra.mxu0 0.0
      %897 = vmatpush.msra.mxu0 0.0
      %898 = vmatpush.msra.mxu0 0.0
      %899 = vmatpush.msra.mxu0 0.0
      %900 = vmatpush.msra.mxu0 0.0
      %901 = vmatpush.msra.mxu0 0.0
      %902 = vmatpush.msra.mxu0 %v866
      %903 = vmatpush.msra.mxu0 %v864
      %904 = vmatpush.msra.mxu0 %v843
      %905 = vmatpush.msra.mxu0 %v841
      %906 = vmatmul.f32.gmra.mxu0 %v885
      %v907 = vpop.f32.mrf.mxu0
      %v908 = vadd.f32 %v877, %v907
      %909 = vmatmul.f32.gmra.mxu0 %v888
      %v910 = vpop.f32.mrf.mxu0
      %v911 = vadd.f32 %v882, %v910
      %912 = vdwg.mxu0
      %913 = vmatpush.msra.mxu0 0.0
      %914 = vmatpush.msra.mxu0 0.0
      %915 = vmatpush.msra.mxu0 0.0
      %916 = vmatpush.msra.mxu0 0.0
      %917 = vmatpush.msra.mxu0 0.0
      %918 = vmatpush.msra.mxu0 0.0
      %919 = vmatpush.msra.mxu0 0.0
      %920 = vmatpush.msra.mxu0 0.0
      %921 = vmatpush.msra.mxu0 0.0
      %922 = vmatpush.msra.mxu0 0.0
      %923 = vmatpush.msra.mxu0 0.0
      %924 = vmatpush.msra.mxu0 0.0
      %925 = vmatpush.msra.mxu0 %v867
      %926 = vmatpush.msra.mxu0 %v865
      %927 = vmatpush.msra.mxu0 %v844
      %928 = vmatpush.msra.mxu0 %v842
      %929 = vmatmul.f32.gmra.mxu0 %v885
      %v930 = vpop.f32.mrf.mxu0
      %v931 = vadd.f32 %v877, %v930
      %932 = vmatmul.f32.gmra.mxu0 %v888
      %v933 = vpop.f32.mrf.mxu0
      %v934 = vadd.f32 %v882, %v933
      %935 = vdwg.mxu0
      %vm936 = vcmp.gt.f32.partialorder %v908, 0.0
      %vm937 = vcmp.gt.f32.partialorder %v931, 0.0
      %vm938 = vcmp.gt.f32.partialorder %v911, 0.0
      %vm939 = vcmp.gt.f32.partialorder %v934, 0.0
      %v940 = vmul.f32 %v908, 0.2
      %v941 = vmul.f32 %v931, 0.2
      %v942 = vmul.f32 %v911, 0.2
      %v943 = vmul.f32 %v934, 0.2
      %v944 = vsel %vm936, %v908, %v940
      %v945 = vsel %vm937, %v931, %v941
      %v946 = vsel %vm938, %v911, %v942
      %v947 = vsel %vm939, %v934, %v943
      %v948 = vadd.f32 %v841, %v944
      %v949 = vadd.f32 %v842, %v945
      %v950 = vadd.f32 %v843, %v946
      %v951 = vadd.f32 %v844, %v947
      %v952 = vadd.f32 %v845, %v948
      %v953 = vadd.f32 %v846, %v949
      %v954 = vadd.f32 %v847, %v950
      %v955 = vadd.f32 %v848, %v951
      %956 = vrot.lane.b32.xlu0 %v948, 112
      %v957 = vpop.permute.xlu0 %956
      %958 = vrot.lane.b32.xlu0 %v950, 112
      %v959 = vpop.permute.xlu0 %958
      %960 = vrot.lane.b32.xlu0 %v949, 112
      %v961 = vpop.permute.xlu0 %960
      %962 = vrot.lane.b32.xlu0 %v951, 112
      %v963 = vpop.permute.xlu0 %962
      %vm964 = vcmp.lt.s32.totalorder %v318, 112
      %v965 = vsel %vm964, %v957, %v961
      %v966 = vsel %vm964, %v959, %v963
      %v967 = vsel %vm964, %v961, %v957
      %v968 = vsel %vm964, %v963, %v959
      %vm969 = vcmp.lt.s32.totalorder %v318, 240
      %vm970 = vcmp.lt.s32.totalorder %v319, 240
      %v971 = vsel %vm969, %v965, 0.0
      %v972 = vsel %vm970, %v967, 0.0
      %v973 = vsel %vm969, %v966, 0.0
      %v974 = vsel %vm970, %v968, 0.0
      %s975 = scalar_lea.vmem %s3, 64
      %v976 = vld [vmem:[%s975] sm:$0xff]
      %v977 = vld [vmem:[%s975 + $0x8] sm:$0xff]
      %s978 = scalar_lea.vmem %s4, 64
      %v979 = vld [vmem:[%s978] sm:$0xff]
      %v980 = vld [vmem:[%s978 + $0x8] sm:$0xff]
      %982 = vset.pattern.permute.xlu0 0
      %983 = vperm.xlu0 %982, %v979
      %v984 = vpop.permute.xlu0 %983
      %987 = vset.pattern.permute.xlu0 0
      %988 = vperm.xlu0 %987, %v980
      %v989 = vpop.permute.xlu0 %988
      %v992 = vsel %vm565, %v976, 0
      %v995 = vsel %vm565, %v977, 0
      %997 = vmatpush.msra.mxu0 0.0
      %998 = vmatpush.msra.mxu0 0.0
      %999 = vmatpush.msra.mxu0 0.0
      %1000 = vmatpush.msra.mxu0 0.0
      %1001 = vmatpush.msra.mxu0 0.0
      %1002 = vmatpush.msra.mxu0 0.0
      %1003 = vmatpush.msra.mxu0 0.0
      %1004 = vmatpush.msra.mxu0 0.0
      %1005 = vmatpush.msra.mxu0 0.0
      %1006 = vmatpush.msra.mxu0 0.0
      %1007 = vmatpush.msra.mxu0 0.0
      %1008 = vmatpush.msra.mxu0 0.0
      %1009 = vmatpush.msra.mxu0 %v973
      %1010 = vmatpush.msra.mxu0 %v971
      %1011 = vmatpush.msra.mxu0 %v950
      %1012 = vmatpush.msra.mxu0 %v948
      %1013 = vmatmul.f32.gmra.mxu0 %v992
      %v1014 = vpop.f32.mrf.mxu0
      %v1015 = vadd.f32 %v984, %v1014
      %1016 = vmatmul.f32.gmra.mxu0 %v995
      %v1017 = vpop.f32.mrf.mxu0
      %v1018 = vadd.f32 %v989, %v1017
      %1019 = vdwg.mxu0
      %1020 = vmatpush.msra.mxu0 0.0
      %1021 = vmatpush.msra.mxu0 0.0
      %1022 = vmatpush.msra.mxu0 0.0
      %1023 = vmatpush.msra.mxu0 0.0
      %1024 = vmatpush.msra.mxu0 0.0
      %1025 = vmatpush.msra.mxu0 0.0
      %1026 = vmatpush.msra.mxu0 0.0
      %1027 = vmatpush.msra.mxu0 0.0
      %1028 = vmatpush.msra.mxu0 0.0
      %1029 = vmatpush.msra.mxu0 0.0
      %1030 = vmatpush.msra.mxu0 0.0
      %1031 = vmatpush.msra.mxu0 0.0
      %1032 = vmatpush.msra.mxu0 %v974
      %1033 = vmatpush.msra.mxu0 %v972
      %1034 = vmatpush.msra.mxu0 %v951
      %1035 = vmatpush.msra.mxu0 %v949
      %1036 = vmatmul.f32.gmra.mxu0 %v992
      %v1037 = vpop.f32.mrf.mxu0
      %v1038 = vadd.f32 %v984, %v1037
      %1039 = vmatmul.f32.gmra.mxu0 %v995
      %v1040 = vpop.f32.mrf.mxu0
      %v1041 = vadd.f32 %v989, %v1040
      %1042 = vdwg.mxu0
      %vm1043 = vcmp.gt.f32.partialorder %v1015, 0.0
      %vm1044 = vcmp.gt.f32.partialorder %v1038, 0.0
      %vm1045 = vcmp.gt.f32.partialorder %v1018, 0.0
      %vm1046 = vcmp.gt.f32.partialorder %v1041, 0.0
      %v1047 = vmul.f32 %v1015, 0.2
      %v1048 = vmul.f32 %v1038, 0.2
      %v1049 = vmul.f32 %v1018, 0.2
      %v1050 = vmul.f32 %v1041, 0.2
      %v1051 = vsel %vm1043, %v1015, %v1047
      %v1052 = vsel %vm1044, %v1038, %v1048
      %v1053 = vsel %vm1045, %v1018, %v1049
      %v1054 = vsel %vm1046, %v1041, %v1050
      %v1055 = vadd.f32 %v948, %v1051
      %v1056 = vadd.f32 %v949, %v1052
      %v1057 = vadd.f32 %v950, %v1053
      %v1058 = vadd.f32 %v951, %v1054
      %v1059 = vadd.f32 %v952, %v1055
      %v1060 = vadd.f32 %v953, %v1056
      %v1061 = vadd.f32 %v954, %v1057
      %v1062 = vadd.f32 %v955, %v1058
      %1063 = vrot.lane.b32.xlu0 %v1055, 96
      %v1064 = vpop.permute.xlu0 %1063
      %1065 = vrot.lane.b32.xlu0 %v1057, 96
      %v1066 = vpop.permute.xlu0 %1065
      %1067 = vrot.lane.b32.xlu0 %v1056, 96
      %v1068 = vpop.permute.xlu0 %1067
      %1069 = vrot.lane.b32.xlu0 %v1058, 96
      %v1070 = vpop.permute.xlu0 %1069
      %vm1071 = vcmp.lt.s32.totalorder %v318, 96
      %v1072 = vsel %vm1071, %v1064, %v1068
      %v1073 = vsel %vm1071, %v1066, %v1070
      %v1074 = vsel %vm1071, %v1068, %v1064
      %v1075 = vsel %vm1071, %v1070, %v1066
      %vm1076 = vcmp.lt.s32.totalorder %v318, 224
      %vm1077 = vcmp.lt.s32.totalorder %v319, 224
      %v1078 = vsel %vm1076, %v1072, 0.0
      %v1079 = vsel %vm1077, %v1074, 0.0
      %v1080 = vsel %vm1076, %v1073, 0.0
      %v1081 = vsel %vm1077, %v1075, 0.0
      %s1082 = scalar_lea.vmem %s3, 80
      %v1083 = vld [vmem:[%s1082] sm:$0xff]
      %v1084 = vld [vmem:[%s1082 + $0x8] sm:$0xff]
      %s1085 = scalar_lea.vmem %s4, 80
      %v1086 = vld [vmem:[%s1085] sm:$0xff]
      %v1087 = vld [vmem:[%s1085 + $0x8] sm:$0xff]
      %1089 = vset.pattern.permute.xlu0 0
      %1090 = vperm.xlu0 %1089, %v1086
      %v1091 = vpop.permute.xlu0 %1090
      %1094 = vset.pattern.permute.xlu0 0
      %1095 = vperm.xlu0 %1094, %v1087
      %v1096 = vpop.permute.xlu0 %1095
      %v1099 = vsel %vm565, %v1083, 0
      %v1102 = vsel %vm565, %v1084, 0
      %1104 = vmatpush.msra.mxu0 0.0
      %1105 = vmatpush.msra.mxu0 0.0
      %1106 = vmatpush.msra.mxu0 0.0
      %1107 = vmatpush.msra.mxu0 0.0
      %1108 = vmatpush.msra.mxu0 0.0
      %1109 = vmatpush.msra.mxu0 0.0
      %1110 = vmatpush.msra.mxu0 0.0
      %1111 = vmatpush.msra.mxu0 0.0
      %1112 = vmatpush.msra.mxu0 0.0
      %1113 = vmatpush.msra.mxu0 0.0
      %1114 = vmatpush.msra.mxu0 0.0
      %1115 = vmatpush.msra.mxu0 0.0
      %1116 = vmatpush.msra.mxu0 %v1080
      %1117 = vmatpush.msra.mxu0 %v1078
      %1118 = vmatpush.msra.mxu0 %v1057
      %1119 = vmatpush.msra.mxu0 %v1055
      %1120 = vmatmul.f32.gmra.mxu0 %v1099
      %v1121 = vpop.f32.mrf.mxu0
      %v1122 = vadd.f32 %v1091, %v1121
      %1123 = vmatmul.f32.gmra.mxu0 %v1102
      %v1124 = vpop.f32.mrf.mxu0
      %v1125 = vadd.f32 %v1096, %v1124
      %1126 = vdwg.mxu0
      %1127 = vmatpush.msra.mxu0 0.0
      %1128 = vmatpush.msra.mxu0 0.0
      %1129 = vmatpush.msra.mxu0 0.0
      %1130 = vmatpush.msra.mxu0 0.0
      %1131 = vmatpush.msra.mxu0 0.0
      %1132 = vmatpush.msra.mxu0 0.0
      %1133 = vmatpush.msra.mxu0 0.0
      %1134 = vmatpush.msra.mxu0 0.0
      %1135 = vmatpush.msra.mxu0 0.0
      %1136 = vmatpush.msra.mxu0 0.0
      %1137 = vmatpush.msra.mxu0 0.0
      %1138 = vmatpush.msra.mxu0 0.0
      %1139 = vmatpush.msra.mxu0 %v1081
      %1140 = vmatpush.msra.mxu0 %v1079
      %1141 = vmatpush.msra.mxu0 %v1058
      %1142 = vmatpush.msra.mxu0 %v1056
      %1143 = vmatmul.f32.gmra.mxu0 %v1099
      %v1144 = vpop.f32.mrf.mxu0
      %v1145 = vadd.f32 %v1091, %v1144
      %1146 = vmatmul.f32.gmra.mxu0 %v1102
      %v1147 = vpop.f32.mrf.mxu0
      %v1148 = vadd.f32 %v1096, %v1147
      %1149 = vdwg.mxu0
      %vm1150 = vcmp.gt.f32.partialorder %v1122, 0.0
      %vm1151 = vcmp.gt.f32.partialorder %v1145, 0.0
      %vm1152 = vcmp.gt.f32.partialorder %v1125, 0.0
      %vm1153 = vcmp.gt.f32.partialorder %v1148, 0.0
      %v1154 = vmul.f32 %v1122, 0.2
      %v1155 = vmul.f32 %v1145, 0.2
      %v1156 = vmul.f32 %v1125, 0.2
      %v1157 = vmul.f32 %v1148, 0.2
      %v1158 = vsel %vm1150, %v1122, %v1154
      %v1159 = vsel %vm1151, %v1145, %v1155
      %v1160 = vsel %vm1152, %v1125, %v1156
      %v1161 = vsel %vm1153, %v1148, %v1157
      %v1162 = vadd.f32 %v1055, %v1158
      %v1163 = vadd.f32 %v1056, %v1159
      %v1164 = vadd.f32 %v1057, %v1160
      %v1165 = vadd.f32 %v1058, %v1161
      %v1166 = vadd.f32 %v1059, %v1162
      %v1167 = vadd.f32 %v1060, %v1163
      %v1168 = vadd.f32 %v1061, %v1164
      %v1169 = vadd.f32 %v1062, %v1165
      %1170 = vrot.lane.b32.xlu0 %v1162, 64
      %v1171 = vpop.permute.xlu0 %1170
      %1172 = vrot.lane.b32.xlu0 %v1164, 64
      %v1173 = vpop.permute.xlu0 %1172
      %1174 = vrot.lane.b32.xlu0 %v1163, 64
      %v1175 = vpop.permute.xlu0 %1174
      %1176 = vrot.lane.b32.xlu0 %v1165, 64
      %v1177 = vpop.permute.xlu0 %1176
      %vm1178 = vcmp.lt.s32.totalorder %v318, 64
      %v1179 = vsel %vm1178, %v1171, %v1175
      %v1180 = vsel %vm1178, %v1173, %v1177
      %v1181 = vsel %vm1178, %v1175, %v1171
      %v1182 = vsel %vm1178, %v1177, %v1173
      %vm1183 = vcmp.lt.s32.totalorder %v318, 192
      %vm1184 = vcmp.lt.s32.totalorder %v319, 192
      %v1185 = vsel %vm1183, %v1179, 0.0
      %v1186 = vsel %vm1184, %v1181, 0.0
      %v1187 = vsel %vm1183, %v1180, 0.0
      %v1188 = vsel %vm1184, %v1182, 0.0
      %s1189 = scalar_lea.vmem %s3, 96
      %v1190 = vld [vmem:[%s1189] sm:$0xff]
      %v1191 = vld [vmem:[%s1189 + $0x8] sm:$0xff]
      %s1192 = scalar_lea.vmem %s4, 96
      %v1193 = vld [vmem:[%s1192] sm:$0xff]
      %v1194 = vld [vmem:[%s1192 + $0x8] sm:$0xff]
      %1196 = vset.pattern.permute.xlu0 0
      %1197 = vperm.xlu0 %1196, %v1193
      %v1198 = vpop.permute.xlu0 %1197
      %1201 = vset.pattern.permute.xlu0 0
      %1202 = vperm.xlu0 %1201, %v1194
      %v1203 = vpop.permute.xlu0 %1202
      %v1206 = vsel %vm565, %v1190, 0
      %v1209 = vsel %vm565, %v1191, 0
      %1211 = vmatpush.msra.mxu0 0.0
      %1212 = vmatpush.msra.mxu0 0.0
      %1213 = vmatpush.msra.mxu0 0.0
      %1214 = vmatpush.msra.mxu0 0.0
      %1215 = vmatpush.msra.mxu0 0.0
      %1216 = vmatpush.msra.mxu0 0.0
      %1217 = vmatpush.msra.mxu0 0.0
      %1218 = vmatpush.msra.mxu0 0.0
      %1219 = vmatpush.msra.mxu0 0.0
      %1220 = vmatpush.msra.mxu0 0.0
      %1221 = vmatpush.msra.mxu0 0.0
      %1222 = vmatpush.msra.mxu0 0.0
      %1223 = vmatpush.msra.mxu0 %v1187
      %1224 = vmatpush.msra.mxu0 %v1185
      %1225 = vmatpush.msra.mxu0 %v1164
      %1226 = vmatpush.msra.mxu0 %v1162
      %1227 = vmatmul.f32.gmra.mxu0 %v1206
      %v1228 = vpop.f32.mrf.mxu0
      %v1229 = vadd.f32 %v1198, %v1228
      %1230 = vmatmul.f32.gmra.mxu0 %v1209
      %v1231 = vpop.f32.mrf.mxu0
      %v1232 = vadd.f32 %v1203, %v1231
      %1233 = vdwg.mxu0
      %1234 = vmatpush.msra.mxu0 0.0
      %1235 = vmatpush.msra.mxu0 0.0
      %1236 = vmatpush.msra.mxu0 0.0
      %1237 = vmatpush.msra.mxu0 0.0
      %1238 = vmatpush.msra.mxu0 0.0
      %1239 = vmatpush.msra.mxu0 0.0
      %1240 = vmatpush.msra.mxu0 0.0
      %1241 = vmatpush.msra.mxu0 0.0
      %1242 = vmatpush.msra.mxu0 0.0
      %1243 = vmatpush.msra.mxu0 0.0
      %1244 = vmatpush.msra.mxu0 0.0
      %1245 = vmatpush.msra.mxu0 0.0
      %1246 = vmatpush.msra.mxu0 %v1188
      %1247 = vmatpush.msra.mxu0 %v1186
      %1248 = vmatpush.msra.mxu0 %v1165
      %1249 = vmatpush.msra.mxu0 %v1163
      %1250 = vmatmul.f32.gmra.mxu0 %v1206
      %v1251 = vpop.f32.mrf.mxu0
      %v1252 = vadd.f32 %v1198, %v1251
      %1253 = vmatmul.f32.gmra.mxu0 %v1209
      %v1254 = vpop.f32.mrf.mxu0
      %v1255 = vadd.f32 %v1203, %v1254
      %1256 = vdwg.mxu0
      %vm1257 = vcmp.gt.f32.partialorder %v1229, 0.0
      %vm1258 = vcmp.gt.f32.partialorder %v1252, 0.0
      %vm1259 = vcmp.gt.f32.partialorder %v1232, 0.0
      %vm1260 = vcmp.gt.f32.partialorder %v1255, 0.0
      %v1261 = vmul.f32 %v1229, 0.2
      %v1262 = vmul.f32 %v1252, 0.2
      %v1263 = vmul.f32 %v1232, 0.2
      %v1264 = vmul.f32 %v1255, 0.2
      %v1265 = vsel %vm1257, %v1229, %v1261
      %v1266 = vsel %vm1258, %v1252, %v1262
      %v1267 = vsel %vm1259, %v1232, %v1263
      %v1268 = vsel %vm1260, %v1255, %v1264
      %v1269 = vadd.f32 %v1162, %v1265
      %v1270 = vadd.f32 %v1163, %v1266
      %v1271 = vadd.f32 %v1164, %v1267
      %v1272 = vadd.f32 %v1165, %v1268
      %v1273 = vadd.f32 %v1166, %v1269
      %v1274 = vadd.f32 %v1167, %v1270
      %v1275 = vadd.f32 %v1168, %v1271
      %v1276 = vadd.f32 %v1169, %v1272
      %vm1277 = vcmp.lt.s32.totalorder %v318, 128
      %vm1278 = vcmp.lt.s32.totalorder %v319, 128
      %v1279 = vsel %vm1277, %v1270, 0.0
      %v1280 = vsel %vm1278, %v1269, 0.0
      %v1281 = vsel %vm1277, %v1272, 0.0
      %v1282 = vsel %vm1278, %v1271, 0.0
      %s1283 = scalar_lea.vmem %s3, 112
      %v1284 = vld [vmem:[%s1283] sm:$0xff]
      %v1285 = vld [vmem:[%s1283 + $0x8] sm:$0xff]
      %s1286 = scalar_lea.vmem %s4, 112
      %v1287 = vld [vmem:[%s1286] sm:$0xff]
      %v1288 = vld [vmem:[%s1286 + $0x8] sm:$0xff]
      %1290 = vset.pattern.permute.xlu0 0
      %1291 = vperm.xlu0 %1290, %v1287
      %v1292 = vpop.permute.xlu0 %1291
      %1295 = vset.pattern.permute.xlu0 0
      %1296 = vperm.xlu0 %1295, %v1288
      %v1297 = vpop.permute.xlu0 %1296
      %v1300 = vsel %vm565, %v1284, 0
      %v1303 = vsel %vm565, %v1285, 0
      %1305 = vmatpush.msra.mxu0 0.0
      %1306 = vmatpush.msra.mxu0 0.0
      %1307 = vmatpush.msra.mxu0 0.0
      %1308 = vmatpush.msra.mxu0 0.0
      %1309 = vmatpush.msra.mxu0 0.0
      %1310 = vmatpush.msra.mxu0 0.0
      %1311 = vmatpush.msra.mxu0 0.0
      %1312 = vmatpush.msra.mxu0 0.0
      %1313 = vmatpush.msra.mxu0 0.0
      %1314 = vmatpush.msra.mxu0 0.0
      %1315 = vmatpush.msra.mxu0 0.0
      %1316 = vmatpush.msra.mxu0 0.0
      %1317 = vmatpush.msra.mxu0 %v1281
      %1318 = vmatpush.msra.mxu0 %v1279
      %1319 = vmatpush.msra.mxu0 %v1271
      %1320 = vmatpush.msra.mxu0 %v1269
      %1321 = vmatmul.f32.gmra.mxu0 %v1300
      %v1322 = vpop.f32.mrf.mxu0
      %v1323 = vadd.f32 %v1292, %v1322
      %1324 = vmatmul.f32.gmra.mxu0 %v1303
      %v1325 = vpop.f32.mrf.mxu0
      %v1326 = vadd.f32 %v1297, %v1325
      %1327 = vdwg.mxu0
      %1328 = vmatpush.msra.mxu0 0.0
      %1329 = vmatpush.msra.mxu0 0.0
      %1330 = vmatpush.msra.mxu0 0.0
      %1331 = vmatpush.msra.mxu0 0.0
      %1332 = vmatpush.msra.mxu0 0.0
      %1333 = vmatpush.msra.mxu0 0.0
      %1334 = vmatpush.msra.mxu0 0.0
      %1335 = vmatpush.msra.mxu0 0.0
      %1336 = vmatpush.msra.mxu0 0.0
      %1337 = vmatpush.msra.mxu0 0.0
      %1338 = vmatpush.msra.mxu0 0.0
      %1339 = vmatpush.msra.mxu0 0.0
      %1340 = vmatpush.msra.mxu0 %v1282
      %1341 = vmatpush.msra.mxu0 %v1280
      %1342 = vmatpush.msra.mxu0 %v1272
      %1343 = vmatpush.msra.mxu0 %v1270
      %1344 = vmatmul.f32.gmra.mxu0 %v1300
      %v1345 = vpop.f32.mrf.mxu0
      %v1346 = vadd.f32 %v1292, %v1345
      %1347 = vmatmul.f32.gmra.mxu0 %v1303
      %v1348 = vpop.f32.mrf.mxu0
      %v1349 = vadd.f32 %v1297, %v1348
      %1350 = vdwg.mxu0
      %vm1351 = vcmp.gt.f32.partialorder %v1323, 0.0
      %vm1352 = vcmp.gt.f32.partialorder %v1346, 0.0
      %vm1353 = vcmp.gt.f32.partialorder %v1326, 0.0
      %vm1354 = vcmp.gt.f32.partialorder %v1349, 0.0
      %v1355 = vmul.f32 %v1323, 0.2
      %v1356 = vmul.f32 %v1346, 0.2
      %v1357 = vmul.f32 %v1326, 0.2
      %v1358 = vmul.f32 %v1349, 0.2
      %v1359 = vsel %vm1351, %v1323, %v1355
      %v1360 = vsel %vm1352, %v1346, %v1356
      %v1361 = vsel %vm1353, %v1326, %v1357
      %v1362 = vsel %vm1354, %v1349, %v1358
      %v1363 = vadd.f32 %v1269, %v1359
      %v1364 = vadd.f32 %v1270, %v1360
      %v1365 = vadd.f32 %v1271, %v1361
      %v1366 = vadd.f32 %v1272, %v1362
      %v1367 = vadd.f32 %v1273, %v1363
      %v1368 = vadd.f32 %v1274, %v1364
      %v1369 = vadd.f32 %v1275, %v1365
      %v1370 = vadd.f32 %v1276, %v1366
      %s1371 = scalar_lea.vmem %s3, 128
      %v1372 = vld [vmem:[%s1371] sm:$0xff]
      %v1373 = vld [vmem:[%s1371 + $0x8] sm:$0xff]
      %s1374 = scalar_lea.vmem %s4, 128
      %v1375 = vld [vmem:[%s1374] sm:$0xff]
      %v1376 = vld [vmem:[%s1374 + $0x8] sm:$0xff]
      %1378 = vset.pattern.permute.xlu0 0
      %1379 = vperm.xlu0 %1378, %v1375
      %v1380 = vpop.permute.xlu0 %1379
      %1383 = vset.pattern.permute.xlu0 0
      %1384 = vperm.xlu0 %1383, %v1376
      %v1385 = vpop.permute.xlu0 %1384
      %vm1387 = vcmask 130048
      %v1389 = vsel %vm1387, %v1372, 0
      %v1392 = vsel %vm1387, %v1373, 0
      %1394 = vmatpush.msra.mxu0 0.0
      %1395 = vmatpush.msra.mxu0 0.0
      %1396 = vmatpush.msra.mxu0 0.0
      %1397 = vmatpush.msra.mxu0 0.0
      %1398 = vmatpush.msra.mxu0 0.0
      %1399 = vmatpush.msra.mxu0 0.0
      %1400 = vmatpush.msra.mxu0 0.0
      %1401 = vmatpush.msra.mxu0 0.0
      %1402 = vmatpush.msra.mxu0 0.0
      %1403 = vmatpush.msra.mxu0 0.0
      %1404 = vmatpush.msra.mxu0 0.0
      %1405 = vmatpush.msra.mxu0 0.0
      %1406 = vmatpush.msra.mxu0 0.0
      %1407 = vmatpush.msra.mxu0 0.0
      %1408 = vmatpush.msra.mxu0 %v1365
      %1409 = vmatpush.msra.mxu0 %v1363
      %1410 = vmatmul.f32.gmra.mxu0 %v1389
      %v1411 = vpop.f32.mrf.mxu0
      %v1412 = vadd.f32 %v1380, %v1411
      %1413 = vmatmul.f32.gmra.mxu0 %v1392
      %v1414 = vpop.f32.mrf.mxu0
      %v1415 = vadd.f32 %v1385, %v1414
      %1416 = vdwg.mxu0
      %1417 = vmatpush.msra.mxu0 0.0
      %1418 = vmatpush.msra.mxu0 0.0
      %1419 = vmatpush.msra.mxu0 0.0
      %1420 = vmatpush.msra.mxu0 0.0
      %1421 = vmatpush.msra.mxu0 0.0
      %1422 = vmatpush.msra.mxu0 0.0
      %1423 = vmatpush.msra.mxu0 0.0
      %1424 = vmatpush.msra.mxu0 0.0
      %1425 = vmatpush.msra.mxu0 0.0
      %1426 = vmatpush.msra.mxu0 0.0
      %1427 = vmatpush.msra.mxu0 0.0
      %1428 = vmatpush.msra.mxu0 0.0
      %1429 = vmatpush.msra.mxu0 0.0
      %1430 = vmatpush.msra.mxu0 0.0
      %1431 = vmatpush.msra.mxu0 %v1366
      %1432 = vmatpush.msra.mxu0 %v1364
      %1433 = vmatmul.f32.gmra.mxu0 %v1389
      %v1434 = vpop.f32.mrf.mxu0
      %v1435 = vadd.f32 %v1380, %v1434
      %1436 = vmatmul.f32.gmra.mxu0 %v1392
      %v1437 = vpop.f32.mrf.mxu0
      %v1438 = vadd.f32 %v1385, %v1437
      %1439 = vdwg.mxu0
      %vm1440 = vcmp.gt.f32.partialorder %v1412, 0.0
      %vm1441 = vcmp.gt.f32.partialorder %v1435, 0.0
      %vm1442 = vcmp.gt.f32.partialorder %v1415, 0.0
      %vm1443 = vcmp.gt.f32.partialorder %v1438, 0.0
      %v1444 = vmul.f32 %v1412, 0.2
      %v1445 = vmul.f32 %v1435, 0.2
      %v1446 = vmul.f32 %v1415, 0.2
      %v1447 = vmul.f32 %v1438, 0.2
      %v1448 = vsel %vm1440, %v1412, %v1444
      %v1449 = vsel %vm1441, %v1435, %v1445
      %v1450 = vsel %vm1442, %v1415, %v1446
      %v1451 = vsel %vm1443, %v1438, %v1447
      %v1452 = vadd.f32 %v1363, %v1448
      %v1453 = vadd.f32 %v1364, %v1449
      %v1454 = vadd.f32 %v1365, %v1450
      %v1455 = vadd.f32 %v1366, %v1451
      %v1456 = vadd.f32 %v1367, %v1452
      %v1457 = vadd.f32 %v1368, %v1453
      %v1458 = vadd.f32 %v1369, %v1454
      %v1459 = vadd.f32 %v1370, %v1455
      %s1460 = scalar_lea.vmem %s3, 144
      %v1461 = vld [vmem:[%s1460] sm:$0xff]
      %v1462 = vld [vmem:[%s1460 + $0x8] sm:$0xff]
      %s1463 = scalar_lea.vmem %s4, 144
      %v1464 = vld [vmem:[%s1463] sm:$0xff]
      %v1465 = vld [vmem:[%s1463 + $0x8] sm:$0xff]
      %1467 = vset.pattern.permute.xlu0 0
      %1468 = vperm.xlu0 %1467, %v1464
      %v1469 = vpop.permute.xlu0 %1468
      %1472 = vset.pattern.permute.xlu0 0
      %1473 = vperm.xlu0 %1472, %v1465
      %v1474 = vpop.permute.xlu0 %1473
      %v1477 = vsel %vm1387, %v1461, 0
      %v1480 = vsel %vm1387, %v1462, 0
      %1482 = vmatpush.msra.mxu0 0.0
      %1483 = vmatpush.msra.mxu0 0.0
      %1484 = vmatpush.msra.mxu0 0.0
      %1485 = vmatpush.msra.mxu0 0.0
      %1486 = vmatpush.msra.mxu0 0.0
      %1487 = vmatpush.msra.mxu0 0.0
      %1488 = vmatpush.msra.mxu0 0.0
      %1489 = vmatpush.msra.mxu0 0.0
      %1490 = vmatpush.msra.mxu0 0.0
      %1491 = vmatpush.msra.mxu0 0.0
      %1492 = vmatpush.msra.mxu0 0.0
      %1493 = vmatpush.msra.mxu0 0.0
      %1494 = vmatpush.msra.mxu0 0.0
      %1495 = vmatpush.msra.mxu0 0.0
      %1496 = vmatpush.msra.mxu0 %v1454
      %1497 = vmatpush.msra.mxu0 %v1452
      %1498 = vmatmul.f32.gmra.mxu0 %v1477
      %v1499 = vpop.f32.mrf.mxu0
      %v1500 = vadd.f32 %v1469, %v1499
      %1501 = vmatmul.f32.gmra.mxu0 %v1480
      %v1502 = vpop.f32.mrf.mxu0
      %v1503 = vadd.f32 %v1474, %v1502
      %1504 = vdwg.mxu0
      %1505 = vmatpush.msra.mxu0 0.0
      %1506 = vmatpush.msra.mxu0 0.0
      %1507 = vmatpush.msra.mxu0 0.0
      %1508 = vmatpush.msra.mxu0 0.0
      %1509 = vmatpush.msra.mxu0 0.0
      %1510 = vmatpush.msra.mxu0 0.0
      %1511 = vmatpush.msra.mxu0 0.0
      %1512 = vmatpush.msra.mxu0 0.0
      %1513 = vmatpush.msra.mxu0 0.0
      %1514 = vmatpush.msra.mxu0 0.0
      %1515 = vmatpush.msra.mxu0 0.0
      %1516 = vmatpush.msra.mxu0 0.0
      %1517 = vmatpush.msra.mxu0 0.0
      %1518 = vmatpush.msra.mxu0 0.0
      %1519 = vmatpush.msra.mxu0 %v1455
      %1520 = vmatpush.msra.mxu0 %v1453
      %1521 = vmatmul.f32.gmra.mxu0 %v1477
      %v1522 = vpop.f32.mrf.mxu0
      %v1523 = vadd.f32 %v1469, %v1522
      %1524 = vmatmul.f32.gmra.mxu0 %v1480
      %v1525 = vpop.f32.mrf.mxu0
      %v1526 = vadd.f32 %v1474, %v1525
      %1527 = vdwg.mxu0
      %vm1528 = vcmp.gt.f32.partialorder %v1500, 0.0
      %vm1529 = vcmp.gt.f32.partialorder %v1523, 0.0
      %vm1530 = vcmp.gt.f32.partialorder %v1503, 0.0
      %vm1531 = vcmp.gt.f32.partialorder %v1526, 0.0
      %v1532 = vmul.f32 %v1500, 0.2
      %v1533 = vmul.f32 %v1523, 0.2
      %v1534 = vmul.f32 %v1503, 0.2
      %v1535 = vmul.f32 %v1526, 0.2
      %v1536 = vsel %vm1528, %v1500, %v1532
      %v1537 = vsel %vm1529, %v1523, %v1533
      %v1538 = vsel %vm1530, %v1503, %v1534
      %v1539 = vsel %vm1531, %v1526, %v1535
      %v1540 = vadd.f32 %v1452, %v1536
      %v1541 = vadd.f32 %v1453, %v1537
      %v1542 = vadd.f32 %v1454, %v1538
      %v1543 = vadd.f32 %v1455, %v1539
      %v1544 = vadd.f32 %v1456, %v1540
      %v1545 = vadd.f32 %v1457, %v1541
      %v1546 = vadd.f32 %v1458, %v1542
      %v1547 = vadd.f32 %v1459, %v1543
      %s1548 = scalar_lea.vmem %s3, 160
      %v1549 = vld [vmem:[%s1548] sm:$0xff]
      %v1550 = vld [vmem:[%s1548 + $0x8] sm:$0xff]
      %s1551 = scalar_lea.vmem %s4, 160
      %v1552 = vld [vmem:[%s1551] sm:$0xff]
      %v1553 = vld [vmem:[%s1551 + $0x8] sm:$0xff]
      %1555 = vset.pattern.permute.xlu0 0
      %1556 = vperm.xlu0 %1555, %v1552
      %v1557 = vpop.permute.xlu0 %1556
      %1560 = vset.pattern.permute.xlu0 0
      %1561 = vperm.xlu0 %1560, %v1553
      %v1562 = vpop.permute.xlu0 %1561
      %v1565 = vsel %vm1387, %v1549, 0
      %v1568 = vsel %vm1387, %v1550, 0
      %1570 = vmatpush.msra.mxu0 0.0
      %1571 = vmatpush.msra.mxu0 0.0
      %1572 = vmatpush.msra.mxu0 0.0
      %1573 = vmatpush.msra.mxu0 0.0
      %1574 = vmatpush.msra.mxu0 0.0
      %1575 = vmatpush.msra.mxu0 0.0
      %1576 = vmatpush.msra.mxu0 0.0
      %1577 = vmatpush.msra.mxu0 0.0
      %1578 = vmatpush.msra.mxu0 0.0
      %1579 = vmatpush.msra.mxu0 0.0
      %1580 = vmatpush.msra.mxu0 0.0
      %1581 = vmatpush.msra.mxu0 0.0
      %1582 = vmatpush.msra.mxu0 0.0
      %1583 = vmatpush.msra.mxu0 0.0
      %1584 = vmatpush.msra.mxu0 %v1542
      %1585 = vmatpush.msra.mxu0 %v1540
      %1586 = vmatmul.f32.gmra.mxu0 %v1565
      %v1587 = vpop.f32.mrf.mxu0
      %v1588 = vadd.f32 %v1557, %v1587
      %1589 = vmatmul.f32.gmra.mxu0 %v1568
      %v1590 = vpop.f32.mrf.mxu0
      %v1591 = vadd.f32 %v1562, %v1590
      %1592 = vdwg.mxu0
      %1593 = vmatpush.msra.mxu0 0.0
      %1594 = vmatpush.msra.mxu0 0.0
      %1595 = vmatpush.msra.mxu0 0.0
      %1596 = vmatpush.msra.mxu0 0.0
      %1597 = vmatpush.msra.mxu0 0.0
      %1598 = vmatpush.msra.mxu0 0.0
      %1599 = vmatpush.msra.mxu0 0.0
      %1600 = vmatpush.msra.mxu0 0.0
      %1601 = vmatpush.msra.mxu0 0.0
      %1602 = vmatpush.msra.mxu0 0.0
      %1603 = vmatpush.msra.mxu0 0.0
      %1604 = vmatpush.msra.mxu0 0.0
      %1605 = vmatpush.msra.mxu0 0.0
      %1606 = vmatpush.msra.mxu0 0.0
      %1607 = vmatpush.msra.mxu0 %v1543
      %1608 = vmatpush.msra.mxu0 %v1541
      %1609 = vmatmul.f32.gmra.mxu0 %v1565
      %v1610 = vpop.f32.mrf.mxu0
      %v1611 = vadd.f32 %v1557, %v1610
      %1612 = vmatmul.f32.gmra.mxu0 %v1568
      %v1613 = vpop.f32.mrf.mxu0
      %v1614 = vadd.f32 %v1562, %v1613
      %1615 = vdwg.mxu0
      %vm1616 = vcmp.gt.f32.partialorder %v1588, 0.0
      %vm1617 = vcmp.gt.f32.partialorder %v1611, 0.0
      %vm1618 = vcmp.gt.f32.partialorder %v1591, 0.0
      %vm1619 = vcmp.gt.f32.partialorder %v1614, 0.0
      %v1620 = vmul.f32 %v1588, 0.2
      %v1621 = vmul.f32 %v1611, 0.2
      %v1622 = vmul.f32 %v1591, 0.2
      %v1623 = vmul.f32 %v1614, 0.2
      %v1624 = vsel %vm1616, %v1588, %v1620
      %v1625 = vsel %vm1617, %v1611, %v1621
      %v1626 = vsel %vm1618, %v1591, %v1622
      %v1627 = vsel %vm1619, %v1614, %v1623
      %v1628 = vadd.f32 %v1540, %v1624
      %v1629 = vadd.f32 %v1541, %v1625
      %v1630 = vadd.f32 %v1542, %v1626
      %v1631 = vadd.f32 %v1543, %v1627
      %v1632 = vadd.f32 %v1544, %v1628
      %v1633 = vadd.f32 %v1545, %v1629
      %v1634 = vadd.f32 %v1546, %v1630
      %v1635 = vadd.f32 %v1547, %v1631
      %1636 = vrot.lane.b32.xlu0 %v1628, 127
      %v1637 = vpop.permute.xlu0 %1636
      %1638 = vrot.lane.b32.xlu0 %v1630, 127
      %v1639 = vpop.permute.xlu0 %1638
      %1640 = vrot.lane.b32.xlu0 %v1629, 127
      %v1641 = vpop.permute.xlu0 %1640
      %1642 = vrot.lane.b32.xlu0 %v1631, 127
      %v1643 = vpop.permute.xlu0 %1642
      %v1644 = vsel %vm436, %v1637, %v1641
      %v1645 = vsel %vm436, %v1639, %v1643
      %v1646 = vsel %vm436, %v1641, %v1637
      %v1647 = vsel %vm436, %v1643, %v1639
      %v1648 = vsel %vm439, %v1644, 0.0
      %v1649 = vsel %vm440, %v1646, 0.0
      %v1650 = vsel %vm439, %v1645, 0.0
      %v1651 = vsel %vm440, %v1647, 0.0
      %s1652 = scalar_lea.vmem %s3, 176
      %v1653 = vld [vmem:[%s1652] sm:$0xff]
      %v1654 = vld [vmem:[%s1652 + $0x8] sm:$0xff]
      %s1655 = scalar_lea.vmem %s4, 176
      %v1656 = vld [vmem:[%s1655] sm:$0xff]
      %v1657 = vld [vmem:[%s1655 + $0x8] sm:$0xff]
      %1659 = vset.pattern.permute.xlu0 0
      %1660 = vperm.xlu0 %1659, %v1656
      %v1661 = vpop.permute.xlu0 %1660
      %1664 = vset.pattern.permute.xlu0 0
      %1665 = vperm.xlu0 %1664, %v1657
      %v1666 = vpop.permute.xlu0 %1665
      %v1669 = vsel %vm565, %v1653, 0
      %v1672 = vsel %vm565, %v1654, 0
      %1674 = vmatpush.msra.mxu0 0.0
      %1675 = vmatpush.msra.mxu0 0.0
      %1676 = vmatpush.msra.mxu0 0.0
      %1677 = vmatpush.msra.mxu0 0.0
      %1678 = vmatpush.msra.mxu0 0.0
      %1679 = vmatpush.msra.mxu0 0.0
      %1680 = vmatpush.msra.mxu0 0.0
      %1681 = vmatpush.msra.mxu0 0.0
      %1682 = vmatpush.msra.mxu0 0.0
      %1683 = vmatpush.msra.mxu0 0.0
      %1684 = vmatpush.msra.mxu0 0.0
      %1685 = vmatpush.msra.mxu0 0.0
      %1686 = vmatpush.msra.mxu0 %v1650
      %1687 = vmatpush.msra.mxu0 %v1648
      %1688 = vmatpush.msra.mxu0 %v1630
      %1689 = vmatpush.msra.mxu0 %v1628
      %1690 = vmatmul.f32.gmra.mxu0 %v1669
      %v1691 = vpop.f32.mrf.mxu0
      %v1692 = vadd.f32 %v1661, %v1691
      %1693 = vmatmul.f32.gmra.mxu0 %v1672
      %v1694 = vpop.f32.mrf.mxu0
      %v1695 = vadd.f32 %v1666, %v1694
      %1696 = vdwg.mxu0
      %1697 = vmatpush.msra.mxu0 0.0
      %1698 = vmatpush.msra.mxu0 0.0
      %1699 = vmatpush.msra.mxu0 0.0
      %1700 = vmatpush.msra.mxu0 0.0
      %1701 = vmatpush.msra.mxu0 0.0
      %1702 = vmatpush.msra.mxu0 0.0
      %1703 = vmatpush.msra.mxu0 0.0
      %1704 = vmatpush.msra.mxu0 0.0
      %1705 = vmatpush.msra.mxu0 0.0
      %1706 = vmatpush.msra.mxu0 0.0
      %1707 = vmatpush.msra.mxu0 0.0
      %1708 = vmatpush.msra.mxu0 0.0
      %1709 = vmatpush.msra.mxu0 %v1651
      %1710 = vmatpush.msra.mxu0 %v1649
      %1711 = vmatpush.msra.mxu0 %v1631
      %1712 = vmatpush.msra.mxu0 %v1629
      %1713 = vmatmul.f32.gmra.mxu0 %v1669
      %v1714 = vpop.f32.mrf.mxu0
      %v1715 = vadd.f32 %v1661, %v1714
      %1716 = vmatmul.f32.gmra.mxu0 %v1672
      %v1717 = vpop.f32.mrf.mxu0
      %v1718 = vadd.f32 %v1666, %v1717
      %1719 = vdwg.mxu0
      %vm1720 = vcmp.gt.f32.partialorder %v1692, 0.0
      %vm1721 = vcmp.gt.f32.partialorder %v1715, 0.0
      %vm1722 = vcmp.gt.f32.partialorder %v1695, 0.0
      %vm1723 = vcmp.gt.f32.partialorder %v1718, 0.0
      %v1724 = vmul.f32 %v1692, 0.2
      %v1725 = vmul.f32 %v1715, 0.2
      %v1726 = vmul.f32 %v1695, 0.2
      %v1727 = vmul.f32 %v1718, 0.2
      %v1728 = vsel %vm1720, %v1692, %v1724
      %v1729 = vsel %vm1721, %v1715, %v1725
      %v1730 = vsel %vm1722, %v1695, %v1726
      %v1731 = vsel %vm1723, %v1718, %v1727
      %v1732 = vadd.f32 %v1628, %v1728
      %v1733 = vadd.f32 %v1629, %v1729
      %v1734 = vadd.f32 %v1630, %v1730
      %v1735 = vadd.f32 %v1631, %v1731
      %v1736 = vadd.f32 %v1632, %v1732
      %v1737 = vadd.f32 %v1633, %v1733
      %v1738 = vadd.f32 %v1634, %v1734
      %v1739 = vadd.f32 %v1635, %v1735
      %v1740 = vadd.f32 %v1736, %v1737
      %1741 = vadd.xlane.f32.xlu0 %v1740
      %v1742 = vpop.xlane.xlu0 %1741
      %v1743 = vadd.f32 %v1738, %v1739
      %1744 = vadd.xlane.f32.xlu0 %v1743
      %v1745 = vpop.xlane.xlu0 %1744
      %v1746 = vmul.f32 %v1742, 0.00390625
      %v1747 = vmul.f32 %v1745, 0.00390625
      %vm1748 = vcmask 7168
      %1749 = vst.msk [vmem:[%s310] sm:$0xff] %vm1748, %v1746
      %1750 = vst.msk [vmem:[%s310 + $0x8] sm:$0xff] %vm1748, %v1747
      %1751 = vrot.lane.b32.xlu0 %v1736, 3
      %v1752 = vpop.permute.xlu0 %1751
      %1753 = vrot.lane.b32.xlu0 %v1738, 3
      %v1754 = vpop.permute.xlu0 %1753
      %1755 = vrot.lane.b32.xlu0 %v1737, 3
      %v1756 = vpop.permute.xlu0 %1755
      %1757 = vrot.lane.b32.xlu0 %v1739, 3
      %v1758 = vpop.permute.xlu0 %1757
      %v1759 = vsel %vm331, %v1752, %v1756
      %v1760 = vsel %vm331, %v1754, %v1758
      %v1761 = vsel %vm331, %v1756, %v1752
      %v1762 = vsel %vm331, %v1758, %v1754
      %v1763 = vsel %vm334, %v1761, 0.0
      %v1764 = vsel %vm335, %v1759, 0.0
      %v1765 = vsel %vm334, %v1762, 0.0
      %v1766 = vsel %vm335, %v1760, 0.0
      %1767 = vrot.lane.b32.xlu0 %v1736, 2
      %v1768 = vpop.permute.xlu0 %1767
      %1769 = vrot.lane.b32.xlu0 %v1738, 2
      %v1770 = vpop.permute.xlu0 %1769
      %1771 = vrot.lane.b32.xlu0 %v1737, 2
      %v1772 = vpop.permute.xlu0 %1771
      %1773 = vrot.lane.b32.xlu0 %v1739, 2
      %v1774 = vpop.permute.xlu0 %1773
      %v1775 = vsel %vm362, %v1768, %v1772
      %v1776 = vsel %vm362, %v1770, %v1774
      %v1777 = vsel %vm362, %v1772, %v1768
      %v1778 = vsel %vm362, %v1774, %v1770
      %v1779 = vsel %vm365, %v1777, 0.0
      %v1780 = vsel %vm366, %v1775, 0.0
      %v1781 = vsel %vm365, %v1778, 0.0
      %v1782 = vsel %vm366, %v1776, 0.0
      %1783 = vrot.lane.b32.xlu0 %v1736, 1
      %v1784 = vpop.permute.xlu0 %1783
      %1785 = vrot.lane.b32.xlu0 %v1738, 1
      %v1786 = vpop.permute.xlu0 %1785
      %1787 = vrot.lane.b32.xlu0 %v1737, 1
      %v1788 = vpop.permute.xlu0 %1787
      %1789 = vrot.lane.b32.xlu0 %v1739, 1
      %v1790 = vpop.permute.xlu0 %1789
      %v1791 = vsel %vm391, %v1784, %v1788
      %v1792 = vsel %vm391, %v1786, %v1790
      %v1793 = vsel %vm391, %v1788, %v1784
      %v1794 = vsel %vm391, %v1790, %v1786
      %v1795 = vsel %vm394, %v1793, 0.0
      %v1796 = vsel %vm395, %v1791, 0.0
      %v1797 = vsel %vm394, %v1794, 0.0
      %v1798 = vsel %vm395, %v1792, 0.0
      %1799 = vrot.lane.b32.xlu0 %v1736, 127
      %v1800 = vpop.permute.xlu0 %1799
      %1801 = vrot.lane.b32.xlu0 %v1738, 127
      %v1802 = vpop.permute.xlu0 %1801
      %1803 = vrot.lane.b32.xlu0 %v1737, 127
      %v1804 = vpop.permute.xlu0 %1803
      %1805 = vrot.lane.b32.xlu0 %v1739, 127
      %v1806 = vpop.permute.xlu0 %1805
      %v1807 = vsel %vm436, %v1800, %v1804
      %v1808 = vsel %vm436, %v1802, %v1806
      %v1809 = vsel %vm436, %v1804, %v1800
      %v1810 = vsel %vm436, %v1806, %v1802
      %v1811 = vsel %vm439, %v1807, 0.0
      %v1812 = vsel %vm440, %v1809, 0.0
      %v1813 = vsel %vm439, %v1808, 0.0
      %v1814 = vsel %vm440, %v1810, 0.0
      %1815 = vrot.lane.b32.xlu0 %v1736, 126
      %v1816 = vpop.permute.xlu0 %1815
      %1817 = vrot.lane.b32.xlu0 %v1738, 126
      %v1818 = vpop.permute.xlu0 %1817
      %1819 = vrot.lane.b32.xlu0 %v1737, 126
      %v1820 = vpop.permute.xlu0 %1819
      %1821 = vrot.lane.b32.xlu0 %v1739, 126
      %v1822 = vpop.permute.xlu0 %1821
      %v1823 = vsel %vm465, %v1816, %v1820
      %v1824 = vsel %vm465, %v1818, %v1822
      %v1825 = vsel %vm465, %v1820, %v1816
      %v1826 = vsel %vm465, %v1822, %v1818
      %v1827 = vsel %vm468, %v1823, 0.0
      %v1828 = vsel %vm469, %v1825, 0.0
      %v1829 = vsel %vm468, %v1824, 0.0
      %v1830 = vsel %vm469, %v1826, 0.0
      %1831 = vrot.lane.b32.xlu0 %v1736, 125
      %v1832 = vpop.permute.xlu0 %1831
      %1833 = vrot.lane.b32.xlu0 %v1738, 125
      %v1834 = vpop.permute.xlu0 %1833
      %1835 = vrot.lane.b32.xlu0 %v1737, 125
      %v1836 = vpop.permute.xlu0 %1835
      %1837 = vrot.lane.b32.xlu0 %v1739, 125
      %v1838 = vpop.permute.xlu0 %1837
      %v1839 = vsel %vm494, %v1832, %v1836
      %v1840 = vsel %vm494, %v1834, %v1838
      %v1841 = vsel %vm494, %v1836, %v1832
      %v1842 = vsel %vm494, %v1838, %v1834
      %v1843 = vsel %vm497, %v1839, 0.0
      %v1844 = vsel %vm498, %v1841, 0.0
      %v1845 = vsel %vm497, %v1840, 0.0
      %v1846 = vsel %vm498, %v1842, 0.0
      %v1847 = vld [vmem:[%s5] sm:$0xff]
      %v1848 = vld [vmem:[%s6] sm:$0xff]
      %1850 = vset.pattern.permute.xlu0 0
      %1851 = vperm.xlu0 %1850, %v1848
      %v1852 = vpop.permute.xlu0 %1851
      %vm1854 = vcmask 916480
      %v1856 = vsel %vm1854, %v1847, 0
      %1858 = vmatpush.msra.mxu0 0.0
      %1859 = vmatpush.msra.mxu0 0.0
      %1860 = vmatpush.msra.mxu0 %v1845
      %1861 = vmatpush.msra.mxu0 %v1843
      %1862 = vmatpush.msra.mxu0 %v1829
      %1863 = vmatpush.msra.mxu0 %v1827
      %1864 = vmatpush.msra.mxu0 %v1813
      %1865 = vmatpush.msra.mxu0 %v1811
      %1866 = vmatpush.msra.mxu0 %v1738
      %1867 = vmatpush.msra.mxu0 %v1736
      %1868 = vmatpush.msra.mxu0 %v1797
      %1869 = vmatpush.msra.mxu0 %v1795
      %1870 = vmatpush.msra.mxu0 %v1781
      %1871 = vmatpush.msra.mxu0 %v1779
      %1872 = vmatpush.msra.mxu0 %v1765
      %1873 = vmatpush.msra.mxu0 %v1763
      %1874 = vmatmul.f32.gmra.mxu0 %v1856
      %v1875 = vpop.f32.mrf.mxu0
      %v1876 = vadd.f32 %v1852, %v1875
      %1877 = vdwg.mxu0
      %1878 = vmatpush.msra.mxu0 0.0
      %1879 = vmatpush.msra.mxu0 0.0
      %1880 = vmatpush.msra.mxu0 %v1846
      %1881 = vmatpush.msra.mxu0 %v1844
      %1882 = vmatpush.msra.mxu0 %v1830
      %1883 = vmatpush.msra.mxu0 %v1828
      %1884 = vmatpush.msra.mxu0 %v1814
      %1885 = vmatpush.msra.mxu0 %v1812
      %1886 = vmatpush.msra.mxu0 %v1739
      %1887 = vmatpush.msra.mxu0 %v1737
      %1888 = vmatpush.msra.mxu0 %v1798
      %1889 = vmatpush.msra.mxu0 %v1796
      %1890 = vmatpush.msra.mxu0 %v1782
      %1891 = vmatpush.msra.mxu0 %v1780
      %1892 = vmatpush.msra.mxu0 %v1766
      %1893 = vmatpush.msra.mxu0 %v1764
      %1894 = vmatmul.f32.gmra.mxu0 %v1856
      %v1895 = vpop.f32.mrf.mxu0
      %v1896 = vadd.f32 %v1852, %v1895
      %1897 = vdwg.mxu0
      %1898 = vst [vmem:[%s315] sm:$0xff] %v1876
      %1899 = vst [vmem:[%s315 + $0x8] sm:$0xff] %v1896
      %p1900 = scmp.lt.s32.totalorder %s20, 1
      %s1901 = scalar_select %p1900, %s20, 1
      %s1902 = smul.addr %s1901, 2
      %s1903 = smul.addr %s1902, 8
      %s1904 = scalar_lea.vmem %s7, %s1903
      %p1905 = scmp.lt.s32.totalorder %s20, 1
      %s1906 = scalar_select %p1905, %s20, 1
      %s1907 = smul.addr %s1906, 2
      %s1908 = smul.addr %s1907, 8
      %s1909 = scalar_lea.vmem %s8, %s1908
      // Predicated region
      $region49: #{model_forward.2} parent=47 // pred_check
        %p1910 = pneg %p190
      $region50: #{model_forward.2} parent=47 // pred_check_branch
        %1912 = sbr.rel (%p1910) target = $region52
      $region51: #{model_forward.2} parent=47 // pred_region
        _
      $region52: #{model_forward.2} parent=47 // pred_fallthru
        _
      // Predicated region
      $region53: #{model_forward.2} parent=47 // pred_check
        %p1913 = pneg %p216
      $region54: #{model_forward.2} parent=47 // pred_check_branch
        %1915 = sbr.rel (%p1913) target = $region56
      $region55: #{model_forward.2} parent=47 // pred_region
        _
      $region56: #{model_forward.2} parent=47 // pred_fallthru
        _
    $region48: #{model_forward.2} parent=5 // pred_fallthru
      _
    %p1916 = scmp.le.s32.totalorder 2, %s15
    // Predicated region
    $region57: #{model_forward.2} parent=5 // pred_check
      %p1917 = pneg %p1916
    $region58: #{model_forward.2} parent=5 // pred_check_branch
      %1919 = sbr.rel (%p1917) target = $region60
    $region59: #{model_forward.2} parent=5 // pred_region
      %s1920 = ssub.s32 %s15, 2
      // Predicated region
      $region61: #{model_forward.2} parent=59 // pred_check
        %p1921 = pneg %p196
      $region62: #{model_forward.2} parent=59 // pred_check_branch
        %1923 = sbr.rel (%p1921) target = $region64
      $region63: #{model_forward.2} parent=59 // pred_region
        %p1924 = scmp.lt.s32.totalorder %s21, 1
        %s1925 = scalar_select %p1924, %s21, 1
        %s1926 = smul.addr %s1925, 2
        %s1927 = smul.addr %s1926, 8
        %s1928 = scalar_lea.vmem %s7, %s1927
      $region64: #{model_forward.2} parent=59 // pred_fallthru
        _
      // Predicated region
      $region65: #{model_forward.2} parent=59 // pred_check
        %p1929 = pneg %p222
      $region66: #{model_forward.2} parent=59 // pred_check_branch
        %1931 = sbr.rel (%p1929) target = $region68
      $region67: #{model_forward.2} parent=59 // pred_region
        %p1932 = scmp.lt.s32.totalorder %s21, 1
        %s1933 = scalar_select %p1932, %s21, 1
        %s1934 = smul.addr %s1933, 2
        %s1935 = smul.addr %s1934, 8
        %s1936 = scalar_lea.vmem %s8, %s1935
      $region68: #{model_forward.2} parent=59 // pred_fallthru
        _
    $region60: #{model_forward.2} parent=5 // pred_fallthru
      _
  $region6: #{model_forward.2} parent=0 // loop_footer
    %s19 = sadd.s32 1, %s15
  $region7: #{model_forward.2} parent=0 // loop_footer_branch
    %14 = sbr.rel target = $region3
  $region8: #{model_forward.2} parent=0 // loop_exit
    _

// kernel: model_forward.3
$region0: #{model_forward.3}
  #allocation0 [shape = 'u32[]', space=smem, size = 0x4, offset = 0x4, fixed_abs, tag = 'smem constant byte address 0x4 - core index']
  #allocation1 [shape = 'u32[72,128]{1,0:T(1,128)}', space=vmem, size = 0x9000, scoped, tag = 'internal scratch']
  #allocation2 [shape = 's32[1]{0}', space=sflag, size = 0x4, scoped, tag = 'scoped memory for model_forward.3']
  #allocation3 [shape = 'u8[512]{0}', space=smem, size = 0x200, scoped, tag = 'prefetched SMEM operand 0']
  %s0 = inlined_call_operand.vmem [shape: f32[2], index: 0, kind: input, shape index: {}]
  %s1 = inlined_call_operand.vmem [shape: f32[2,8,256], index: 1, kind: input, shape index: {}]
  %s2 = inlined_call_operand.vmem [shape: f32[8,64], index: 2, kind: input, shape index: {}]
  %s3 = inlined_call_operand.hbm [shape: f32[2,8,256], index: 3, kind: output, shape index: {0}]
  %s4 = inlined_call_operand.vmem [shape: f32[2,1,256], index: 4, kind: output, shape index: {1}]
  %5 = xla_tuple %s3, %s4
  %s6 = sld [smem:[#allocation0]]
  $region49: #{model_forward.3} parent=0
    _
  %s8 = ssub.s32 1, %s6
  %s9 = scalar_select 0, %s8, %s6
  %s11 = sshll.u32 %s0, 4
  %s12 = int_to_ptr.vmem [resolvable:$true] %s11
  %14 = dma.vmem_to_smem %s12, 16, [#allocation3], [#allocation2]
  %16 = dma.done [#allocation2], 16
  %17 = sfence
  $region1: #{model_forward.3} parent=0
    #allocation4 [shape = 'u8[16384]{0}', space=vmem, size = 0x4000, scoped, tag = 'output window, operand 0']
    #allocation5 [shape = 's32[2]{0}', space=sflag, size = 0x8, scoped, tag = 'scoped memory for model_forward.3']
    %18 = vsyncpa [#allocation5], 0
    %s19 = scalar_lea.sflag [#allocation5], 1
    %20 = vsyncpa %s19, 0
    loop: start=0, step=1, limit=4
    $region2: #{model_forward.3} parent=1 // loop_pre_header
      _
    $region3: #{model_forward.3} parent=1 // loop_header
      %s22 = sphi 0, %s26
      %p23 = scmp.ge.s32.totalorder %s22, 4
      %s32 = sphi 0, %s34
      %s35 = sphi 0, %s32
      %s36 = sphi 0, %s35
      %s52 = sphi 0, %s36
      %s56 = sphi 0, %s56
      %s58 = sphi 0, %s56
      %s59 = sphi 0, %s58
      %s73 = sphi 0, %s59
      %s79 = sphi 0, %s81
      %s82 = sphi 0, %s79
      %s83 = sphi 0, %s82
      %s99 = sphi 0, %s83
      %s105 = sphi 0, %s107
      %s108 = sphi 0, %s105
      %s109 = sphi 0, %s108
      %s125 = sphi 0, %s109
    $region4: #{model_forward.3} parent=1 // loop_header_branch
      %25 = sbr.rel (%p23) target = $region8
    $region5: #{model_forward.3} parent=1 // loop_body
      %s27 = ssub.s32 %s22, 1
      %s28 = ssub.s32 %s22, 2
      %s29 = sadd.s32 %s22, 1
      %s30 = ssub.s32 %s22, %s29
      %p31 = scmp.eq.s32.totalorder %s30, 0
      %s33 = sadd.s32 %s32, 1
      %s34 = scalar_select %p31, %s32, %s33
      %p37 = pneg %p31
      %p38 = scmp.eq.s32.totalorder %s22, 1
      %p39 = por %p37, %p38
      %p40 = scmp.ne.s32.totalorder %s32, %s35
      %p41 = scmp.eq.s32.totalorder %s22, 0
      %p42 = por %p40, %p41
      %p43 = scmp.ne.s32.totalorder %s32, %s35
      %p44 = scmp.eq.s32.totalorder %s27, 1
      %p45 = por %p43, %p44
      %p46 = scmp.ne.s32.totalorder %s35, %s36
      %p47 = scmp.eq.s32.totalorder %s27, 0
      %p48 = por %p46, %p47
      %p49 = scmp.ne.s32.totalorder %s35, %s36
      %p50 = scmp.eq.s32.totalorder %s28, 1
      %p51 = por %p49, %p50
      %p53 = scmp.ne.s32.totalorder %s36, %s52
      %p54 = scmp.eq.s32.totalorder %s28, 0
      %p55 = por %p53, %p54
      %s57 = sadd.s32 %s56, 1
      %p60 = scmp.eq.s32.totalorder %s22, 1
      %p61 = scmp.ne.s32.totalorder %s56, %s58
      %p62 = scmp.eq.s32.totalorder %s22, 0
      %p63 = por %p61, %p62
      %p64 = scmp.ne.s32.totalorder %s56, %s58
      %p65 = scmp.eq.s32.totalorder %s27, 1
      %p66 = por %p64, %p65
      %p67 = scmp.ne.s32.totalorder %s58, %s59
      %p68 = scmp.eq.s32.totalorder %s27, 0
      %p69 = por %p67, %p68
      %p70 = scmp.ne.s32.totalorder %s58, %s59
      %p71 = scmp.eq.s32.totalorder %s28, 1
      %p72 = por %p70, %p71
      %p74 = scmp.ne.s32.totalorder %s59, %s73
      %p75 = scmp.eq.s32.totalorder %s28, 0
      %p76 = por %p74, %p75
      %s77 = ssub.s32 %s22, %s29
      %p78 = scmp.eq.s32.totalorder %s77, 0
      %s80 = sadd.s32 %s79, 1
      %s81 = scalar_select %p78, %s79, %s80
      %p84 = pneg %p78
      %p85 = scmp.eq.s32.totalorder %s22, 1
      %p86 = por %p84, %p85
      %p87 = scmp.ne.s32.totalorder %s79, %s82
      %p88 = scmp.eq.s32.totalorder %s22, 0
      %p89 = por %p87, %p88
      %p90 = scmp.ne.s32.totalorder %s79, %s82
      %p91 = scmp.eq.s32.totalorder %s27, 1
      %p92 = por %p90, %p91
      %p93 = scmp.ne.s32.totalorder %s82, %s83
      %p94 = scmp.eq.s32.totalorder %s27, 0
      %p95 = por %p93, %p94
      %p96 = scmp.ne.s32.totalorder %s82, %s83
      %p97 = scmp.eq.s32.totalorder %s28, 1
      %p98 = por %p96, %p97
      %p100 = scmp.ne.s32.totalorder %s83, %s99
      %p101 = scmp.eq.s32.totalorder %s28, 0
      %p102 = por %p100, %p101
      %s103 = ssub.s32 %s22, %s29
      %p104 = scmp.eq.s32.totalorder %s103, 0
      %s106 = sadd.s32 %s105, 1
      %s107 = scalar_select %p104, %s105, %s106
      %p110 = pneg %p104
      %p111 = scmp.eq.s32.totalorder %s22, 1
      %p112 = por %p110, %p111
      %p113 = scmp.ne.s32.totalorder %s105, %s108
      %p114 = scmp.eq.s32.totalorder %s22, 0
      %p115 = por %p113, %p114
      %p116 = scmp.ne.s32.totalorder %s105, %s108
      %p117 = scmp.eq.s32.totalorder %s27, 1
      %p118 = por %p116, %p117
      %p119 = scmp.ne.s32.totalorder %s108, %s109
      %p120 = scmp.eq.s32.totalorder %s27, 0
      %p121 = por %p119, %p120
      %p122 = scmp.ne.s32.totalorder %s108, %s109
      %p123 = scmp.eq.s32.totalorder %s28, 1
      %p124 = por %p122, %p123
      %p126 = scmp.ne.s32.totalorder %s109, %s125
      %p127 = scmp.eq.s32.totalorder %s28, 0
      %p128 = por %p126, %p127
      %p129 = scmp.le.s32.totalorder 1, %s22
      %p130 = scmp.lt.s32.totalorder %s22, 3
      %p131 = pnand %p129, %p130
      %p132 = pneg %p131
      // Predicated region
      $region9: #{model_forward.3} parent=5 // pred_check
        _
      $region10: #{model_forward.3} parent=5 // pred_check_branch
        %134 = sbr.rel (%p131) target = $region12
      $region11: #{model_forward.3} parent=5 // pred_region
        %s135 = ssub.s32 %s22, 1
        // Predicated region
        $region13: #{model_forward.3} parent=11 // pred_check
          %p136 = pneg %p69
        $region14: #{model_forward.3} parent=11 // pred_check_branch
          %138 = sbr.rel (%p136) target = $region16
        $region15: #{model_forward.3} parent=11 // pred_region
          _
        $region16: #{model_forward.3} parent=11 // pred_fallthru
          _
      $region12: #{model_forward.3} parent=5 // pred_fallthru
        _
      %p139 = scmp.lt.s32.totalorder %s22, 2
      // Predicated region
      $region17: #{model_forward.3} parent=5 // pred_check
        %p140 = pneg %p139
      $region18: #{model_forward.3} parent=5 // pred_check_branch
        %142 = sbr.rel (%p140) target = $region20
      $region19: #{model_forward.3} parent=5 // pred_region
        // Predicated region
        $region21: #{model_forward.3} parent=19 // pred_check
          %p143 = pneg %p42
        $region22: #{model_forward.3} parent=19 // pred_check_branch
          %145 = sbr.rel (%p143) target = $region24
        $region23: #{model_forward.3} parent=19 // pred_region
          %p146 = scmp.lt.s32.totalorder %s22, 1
          %s147 = scalar_select %p146, %s22, 1
          %s148 = smul.addr %s147, 2
          %s149 = smul.addr %s148, 8
          %s150 = scalar_lea.vmem %s1, %s149
        $region24: #{model_forward.3} parent=19 // pred_fallthru
          _
      $region20: #{model_forward.3} parent=5 // pred_fallthru
        _
      %p151 = scmp.le.s32.totalorder 1, %s22
      %p152 = scmp.lt.s32.totalorder %s22, 3
      %p153 = pnand %p151, %p152
      %p154 = pneg %p153
      // Predicated region
      $region25: #{model_forward.3} parent=5 // pred_check
        _
      $region26: #{model_forward.3} parent=5 // pred_check_branch
        %156 = sbr.rel (%p153) target = $region28
      $region27: #{model_forward.3} parent=5 // pred_region
        %s157 = ssub.s32 %s22, 1
        %p158 = scmp.lt.s32.totalorder %s27, 1
        %s159 = scalar_select %p158, %s27, 1
        %s160 = smul.addr %s159, 2
        %s161 = smul.addr %s160, 8
        %s162 = scalar_lea.vmem %s1, %s161
        %p163 = pneg %p48
        %p164 = pneg %p45
        %p165 = pneg %p69
        %p166 = pneg %p66
        %p167 = pneg %p95
        %p168 = pneg %p92
        %s169 = sand.u32 %s82, 1
        %s170 = scalar_lea.sflag [#allocation5], %s169
        %s171 = sand.u32 %s82, 1
        %s172 = smul.addr %s171, 16
        %s173 = scalar_lea.vmem [#allocation4], %s172
        %p174 = pneg %p121
        %p175 = pneg %p118
        %p176 = scmp.lt.s32.totalorder %s27, 1
        %s177 = scalar_select %p176, %s27, 1
        %s178 = smul.addr %s177, 2
        %s179 = scalar_lea.vmem %s4, %s178
        %p180 = scmp.lt.s32.totalorder %s27, 1
        %s181 = scalar_select %p180, %s27, 1
        %s182 = smul.addr %s181, 2
        %s183 = smul.addr %s182, 8
        %s184 = scalar_lea.vmem %s1, %s183
        %p185 = scmp.lt.s32.totalorder %s27, 1
        %s186 = scalar_select %p185, %s27, 1
        %s187 = smul.addr %s186, 2
        %s188 = scalar_lea.vmem %s4, %s187
        %s189 = sld [smem:[#allocation3 + %s27]]
        %v190 = vld [vmem:[%s184] sm:$0xff]
        %v191 = vld [vmem:[%s184 + $0x8] sm:$0xff]
        %v192 = vstv %s189
        %vm193 = vcmp.ge.f32.partialorder %v190, %v192
        %vm194 = vcmp.ge.f32.partialorder %v191, %v192
        %v195 = vsel %vm193, %v190, 0.0
        %v196 = vsel %vm194, %v191, 0.0
        %v197 = vmax.f32 %v195, 0.0
        %v198 = vmax.f32 %v196, 0.0
        %199 = vst [vmem:[%s173] sm:$0xff] %v197
        %200 = vst [vmem:[%s173 + $0x8] sm:$0xff] %v198
        %v201 = vld [vmem:[%s2] sm:$0xff]
        %202 = vxpose.xlu0.b32.start [1/16] %v201, 128
        %203 = vxpose.xlu0.b32.cont [2/16] 0.0, 128
        %204 = vxpose.xlu0.b32.cont [3/16] 0.0, 128
        %205 = vxpose.xlu0.b32.cont [4/16] 0.0, 128
        %206 = vxpose.xlu0.b32.cont [5/16] 0.0, 128
        %207 = vxpose.xlu0.b32.cont [6/16] 0.0, 128
        %208 = vxpose.xlu0.b32.cont [7/16] 0.0, 128
        %209 = vxpose.xlu0.b32.cont [8/16] 0.0, 128
        %210 = vxpose.xlu0.b32.cont [9/16] 0.0, 128
        %211 = vxpose.xlu0.b32.cont [10/16] 0.0, 128
        %212 = vxpose.xlu0.b32.cont [11/16] 0.0, 128
        %213 = vxpose.xlu0.b32.cont [12/16] 0.0, 128
        %214 = vxpose.xlu0.b32.cont [13/16] 0.0, 128
        %215 = vxpose.xlu0.b32.cont [14/16] 0.0, 128
        %216 = vxpose.xlu0.b32.cont [15/16] 0.0, 128
        %217 = vxpose.xlu0.b32.end [16/16] 0.0, 128
        %v218 = vpop.trf.xlu0
        %v219 = vpop.trf.xlu0
        %v220 = vpop.trf.xlu0
        %v221 = vpop.trf.xlu0
        %v222 = vpop.trf.xlu0
        %v223 = vpop.trf.xlu0
        %v224 = vpop.trf.xlu0
        %v225 = vpop.trf.xlu0
        %v226 = vpop.trf.xlu0
        %v227 = vpop.trf.xlu0
        %v228 = vpop.trf.xlu0
        %v229 = vpop.trf.xlu0
        %v230 = vpop.trf.xlu0
        %v231 = vpop.trf.xlu0
        %v232 = vpop.trf.xlu0
        %v233 = vpop.trf.xlu0
        %vm234 = vcmask 64512
        %v236 = vsel %vm234, %v218, 0
        %v239 = vsel %vm234, %v219, 0
        %v242 = vsel %vm234, %v220, 0
        %v245 = vsel %vm234, %v221, 0
        %v248 = vsel %vm234, %v222, 0
        %v251 = vsel %vm234, %v223, 0
        %v254 = vsel %vm234, %v224, 0
        %v257 = vsel %vm234, %v225, 0
        %259 = vmatpush.msra.mxu0 0.0
        %260 = vmatpush.msra.mxu0 0.0
        %261 = vmatpush.msra.mxu0 0.0
        %262 = vmatpush.msra.mxu0 0.0
        %263 = vmatpush.msra.mxu0 0.0
        %264 = vmatpush.msra.mxu0 0.0
        %265 = vmatpush.msra.mxu0 0.0
        %266 = vmatpush.msra.mxu0 0.0
        %267 = vmatpush.msra.mxu0 0.0
        %268 = vmatpush.msra.mxu0 0.0
        %269 = vmatpush.msra.mxu0 0.0
        %270 = vmatpush.msra.mxu0 0.0
        %271 = vmatpush.msra.mxu0 0.0
        %272 = vmatpush.msra.mxu0 0.0
        %273 = vmatpush.msra.mxu0 0.0
        %274 = vmatpush.msra.mxu0 %v197
        %275 = vmatmul.f32.gmra.mxu0 %v236
        %v276 = vpop.f32.mrf.mxu0
        %v277 = vadd.f32 0.0, %v276
        %278 = vmatmul.f32.gmra.mxu0 %v239
        %v279 = vpop.f32.mrf.mxu0
        %v280 = vadd.f32 0.0, %v279
        %281 = vmatmul.f32.gmra.mxu0 %v242
        %v282 = vpop.f32.mrf.mxu0
        %v283 = vadd.f32 0.0, %v282
        %284 = vmatmul.f32.gmra.mxu0 %v245
        %v285 = vpop.f32.mrf.mxu0
        %v286 = vadd.f32 0.0, %v285
        %287 = vmatmul.f32.gmra.mxu0 %v248
        %v288 = vpop.f32.mrf.mxu0
        %v289 = vadd.f32 0.0, %v288
        %290 = vmatmul.f32.gmra.mxu0 %v251
        %v291 = vpop.f32.mrf.mxu0
        %v292 = vadd.f32 0.0, %v291
        %293 = vmatmul.f32.gmra.mxu0 %v254
        %v294 = vpop.f32.mrf.mxu0
        %v295 = vadd.f32 0.0, %v294
        %296 = vmatmul.f32.gmra.mxu0 %v257
        %v297 = vpop.f32.mrf.mxu0
        %v298 = vadd.f32 0.0, %v297
        %299 = vdwg.mxu0
        %300 = vmatpush.msra.mxu0 0.0
        %301 = vmatpush.msra.mxu0 0.0
        %302 = vmatpush.msra.mxu0 0.0
        %303 = vmatpush.msra.mxu0 0.0
        %304 = vmatpush.msra.mxu0 0.0
        %305 = vmatpush.msra.mxu0 0.0
        %306 = vmatpush.msra.mxu0 0.0
        %307 = vmatpush.msra.mxu0 0.0
        %308 = vmatpush.msra.mxu0 0.0
        %309 = vmatpush.msra.mxu0 0.0
        %310 = vmatpush.msra.mxu0 0.0
        %311 = vmatpush.msra.mxu0 0.0
        %312 = vmatpush.msra.mxu0 0.0
        %313 = vmatpush.msra.mxu0 0.0
        %314 = vmatpush.msra.mxu0 0.0
        %315 = vmatpush.msra.mxu0 %v198
        %316 = vmatmul.f32.gmra.mxu0 %v236
        %v317 = vpop.f32.mrf.mxu0
        %v318 = vadd.f32 0.0, %v317
        %319 = vmatmul.f32.gmra.mxu0 %v239
        %v320 = vpop.f32.mrf.mxu0
        %v321 = vadd.f32 0.0, %v320
        %322 = vmatmul.f32.gmra.mxu0 %v242
        %v323 = vpop.f32.mrf.mxu0
        %v324 = vadd.f32 0.0, %v323
        %325 = vmatmul.f32.gmra.mxu0 %v245
        %v326 = vpop.f32.mrf.mxu0
        %v327 = vadd.f32 0.0, %v326
        %328 = vmatmul.f32.gmra.mxu0 %v248
        %v329 = vpop.f32.mrf.mxu0
        %v330 = vadd.f32 0.0, %v329
        %331 = vmatmul.f32.gmra.mxu0 %v251
        %v332 = vpop.f32.mrf.mxu0
        %v333 = vadd.f32 0.0, %v332
        %334 = vmatmul.f32.gmra.mxu0 %v254
        %v335 = vpop.f32.mrf.mxu0
        %v336 = vadd.f32 0.0, %v335
        %337 = vmatmul.f32.gmra.mxu0 %v257
        %v338 = vpop.f32.mrf.mxu0
        %v339 = vadd.f32 0.0, %v338
        %340 = vdwg.mxu0
        %342 = vrot.lane.b32.xlu0 %v277, 256
        %v343 = vpop.permute.xlu0 %342
        %345 = vrot.lane.b32.xlu0 %v318, 256
        %v346 = vpop.permute.xlu0 %345
        %v347 = vlaneseq
        %v348 = vshrl.u32 %v347, 7
        %v349 = vlaneseq
        %v350 = vand.u32 %v349, 127
        %vm351 = vcmp.lt.s32.totalorder %v350, %v348
        %v352 = vsel %vm351, %v343, %v346
        %v353 = vsel %vm351, %v346, %v343
        %s355 = sor.u32 256, 8
        %356 = vrot.lane.b32.xlu0 %v280, %s355
        %v357 = vpop.permute.xlu0 %356
        %s359 = sor.u32 256, 8
        %360 = vrot.lane.b32.xlu0 %v321, %s359
        %v361 = vpop.permute.xlu0 %360
        %v362 = vadd.s32 %v348, 8
        %vm363 = vcmp.lt.s32.totalorder %v350, %v362
        %v364 = vsel %vm363, %v357, %v361
        %v365 = vsel %vm363, %v361, %v357
        %s367 = sor.u32 256, 16
        %368 = vrot.lane.b32.xlu0 %v283, %s367
        %v369 = vpop.permute.xlu0 %368
        %s371 = sor.u32 256, 16
        %372 = vrot.lane.b32.xlu0 %v324, %s371
        %v373 = vpop.permute.xlu0 %372
        %v374 = vadd.s32 %v348, 16
        %vm375 = vcmp.lt.s32.totalorder %v350, %v374
        %v376 = vsel %vm375, %v369, %v373
        %v377 = vsel %vm375, %v373, %v369
        %s379 = sor.u32 256, 24
        %380 = vrot.lane.b32.xlu0 %v286, %s379
        %v381 = vpop.permute.xlu0 %380
        %s383 = sor.u32 256, 24
        %384 = vrot.lane.b32.xlu0 %v327, %s383
        %v385 = vpop.permute.xlu0 %384
        %v386 = vadd.s32 %v348, 24
        %vm387 = vcmp.lt.s32.totalorder %v350, %v386
        %v388 = vsel %vm387, %v381, %v385
        %v389 = vsel %vm387, %v385, %v381
        %s391 = sor.u32 256, 32
        %392 = vrot.lane.b32.xlu0 %v289, %s391
        %v393 = vpop.permute.xlu0 %392
        %s395 = sor.u32 256, 32
        %396 = vrot.lane.b32.xlu0 %v330, %s395
        %v397 = vpop.permute.xlu0 %396
        %v398 = vadd.s32 %v348, 32
        %vm399 = vcmp.lt.s32.totalorder %v350, %v398
        %v400 = vsel %vm399, %v393, %v397
        %v401 = vsel %vm399, %v397, %v393
        %s403 = sor.u32 256, 40
        %404 = vrot.lane.b32.xlu0 %v292, %s403
        %v405 = vpop.permute.xlu0 %404
        %s407 = sor.u32 256, 40
        %408 = vrot.lane.b32.xlu0 %v333, %s407
        %v409 = vpop.permute.xlu0 %408
        %v410 = vadd.s32 %v348, 40
        %vm411 = vcmp.lt.s32.totalorder %v350, %v410
        %v412 = vsel %vm411, %v405, %v409
        %v413 = vsel %vm411, %v409, %v405
        %s415 = sor.u32 256, 48
        %416 = vrot.lane.b32.xlu0 %v295, %s415
        %v417 = vpop.permute.xlu0 %416
        %s419 = sor.u32 256, 48
        %420 = vrot.lane.b32.xlu0 %v336, %s419
        %v421 = vpop.permute.xlu0 %420
        %v422 = vadd.s32 %v348, 48
        %vm423 = vcmp.lt.s32.totalorder %v350, %v422
        %v424 = vsel %vm423, %v417, %v421
        %v425 = vsel %vm423, %v421, %v417
        %s427 = sor.u32 256, 56
        %428 = vrot.lane.b32.xlu0 %v298, %s427
        %v429 = vpop.permute.xlu0 %428
        %s431 = sor.u32 256, 56
        %432 = vrot.lane.b32.xlu0 %v339, %s431
        %v433 = vpop.permute.xlu0 %432
        %v434 = vadd.s32 %v348, 56
        %vm435 = vcmp.lt.s32.totalorder %v350, %v434
        %v436 = vsel %vm435, %v429, %v433
        %v437 = vsel %vm435, %v433, %v429
        %v438 = vadd.s32 %v350, 128
        %vm439 = vcmp.ge.s32.totalorder %v350, %v348
        %vm440 = vcmp.ge.s32.totalorder %v438, %v348
        %vm441 = vcmp.ge.s32.totalorder %v350, %v362
        %vm442 = vcmp.ge.s32.totalorder %v438, %v362
        %vm443 = vcmp.ge.s32.totalorder %v350, %v374
        %vm444 = vcmp.ge.s32.totalorder %v438, %v374
        %vm445 = vcmp.ge.s32.totalorder %v350, %v386
        %vm446 = vcmp.ge.s32.totalorder %v438, %v386
        %vm447 = vcmp.ge.s32.totalorder %v350, %v398
        %vm448 = vcmp.ge.s32.totalorder %v438, %v398
        %vm449 = vcmp.ge.s32.totalorder %v350, %v410
        %vm450 = vcmp.ge.s32.totalorder %v438, %v410
        %vm451 = vcmp.ge.s32.totalorder %v350, %v422
        %vm452 = vcmp.ge.s32.totalorder %v438, %v422
        %vm453 = vcmp.ge.s32.totalorder %v350, %v434
        %vm454 = vcmp.ge.s32.totalorder %v438, %v434
        %v455 = vsel %vm439, %v353, 0.0
        %v456 = vsel %vm440, %v352, 0.0
        %v457 = vsel %vm441, %v365, 0.0
        %v458 = vsel %vm442, %v364, 0.0
        %v459 = vsel %vm443, %v377, 0.0
        %v460 = vsel %vm444, %v376, 0.0
        %v461 = vsel %vm445, %v389, 0.0
        %v462 = vsel %vm446, %v388, 0.0
        %v463 = vsel %vm447, %v401, 0.0
        %v464 = vsel %vm448, %v400, 0.0
        %v465 = vsel %vm449, %v413, 0.0
        %v466 = vsel %vm450, %v412, 0.0
        %v467 = vsel %vm451, %v425, 0.0
        %v468 = vsel %vm452, %v424, 0.0
        %v469 = vsel %vm453, %v437, 0.0
        %v470 = vsel %vm454, %v436, 0.0
        %v471 = vadd.f32 %v455, %v457
        %v472 = vadd.f32 %v471, %v459
        %v473 = vadd.f32 %v472, %v461
        %v474 = vadd.f32 %v473, %v463
        %v475 = vadd.f32 %v474, %v465
        %v476 = vadd.f32 %v475, %v467
        %v477 = vadd.f32 %v476, %v469
        %v478 = vrot.slane %v477, 4
        %v479 = vadd.f32 %v477, %v478
        %v480 = vrot.slane %v479, 2
        %v481 = vadd.f32 %v479, %v480
        %v482 = vrot.slane %v481, 1
        %v483 = vadd.f32 %v481, %v482
        %v484 = vadd.f32 %v456, %v458
        %v485 = vadd.f32 %v484, %v460
        %v486 = vadd.f32 %v485, %v462
        %v487 = vadd.f32 %v486, %v464
        %v488 = vadd.f32 %v487, %v466
        %v489 = vadd.f32 %v488, %v468
        %v490 = vadd.f32 %v489, %v470
        %v491 = vrot.slane %v490, 4
        %v492 = vadd.f32 %v490, %v491
        %v493 = vrot.slane %v492, 2
        %v494 = vadd.f32 %v492, %v493
        %v495 = vrot.slane %v494, 1
        %v496 = vadd.f32 %v494, %v495
        %v499 = vrot.slane %v496, 7
        %vm500 = vcmask 1040384
        %v501 = vsel %vm500, %v483, %v499
        %v503 = vlaneseq
        %vm504 = vcmp.ge.s32.totalorder %v503, 0
        %vm505 = vcmp.lt.s32.totalorder %v503, 256
        %vm506 = vmand %vm504, %vm505
        %507 = vst.msk [vmem:[%s188] sm:$0x3] %vm506, %v501
        %s508 = sand.u32 %s82, 1
        %s509 = scalar_lea.sflag [#allocation5], %s508
        %s510 = sand.u32 %s82, 1
        %s511 = smul.addr %s510, 16
        %s512 = scalar_lea.vmem [#allocation4], %s511
        %p513 = scmp.lt.s32.totalorder %s27, 1
        %s514 = scalar_select %p513, %s27, 1
        %s515 = smul.addr %s514, 2
        %s516 = scalar_lea.vmem %s4, %s515
        // Predicated region
        $region29: #{model_forward.3} parent=27 // pred_check
          %p517 = pneg %p92
        $region30: #{model_forward.3} parent=27 // pred_check_branch
          %519 = sbr.rel (%p517) target = $region32
        $region31: #{model_forward.3} parent=27 // pred_region
          %521 = vsyncadd %s509, 0
          %s522 = smul.addr %s27, 2
          %s523 = smul.addr %s522, 8
          %s524 = scalar_lea.hbm %s3, %s523
          %s526 = sshll.u32 %s512, 4
          %s527 = int_to_ptr.vmem [resolvable:$true] %s526
          %s528 = sshll.u32 %s524, 4
          %s529 = int_to_ptr.hbm [resolvable:$true] %s528
          %531 = dma.vmem_to_hbm [thread:$0]  %s527, 256, %s529, %s509
        $region32: #{model_forward.3} parent=27 // pred_fallthru
          _
        // Predicated region
        $region33: #{model_forward.3} parent=27 // pred_check
          %p532 = pneg %p118
        $region34: #{model_forward.3} parent=27 // pred_check_branch
          %534 = sbr.rel (%p532) target = $region36
        $region35: #{model_forward.3} parent=27 // pred_region
          _
        $region36: #{model_forward.3} parent=27 // pred_fallthru
          _
      $region28: #{model_forward.3} parent=5 // pred_fallthru
        _
      %p535 = scmp.le.s32.totalorder 2, %s22
      // Predicated region
      $region37: #{model_forward.3} parent=5 // pred_check
        %p536 = pneg %p535
      $region38: #{model_forward.3} parent=5 // pred_check_branch
        %538 = sbr.rel (%p536) target = $region40
      $region39: #{model_forward.3} parent=5 // pred_region
        %s539 = ssub.s32 %s22, 2
        // Predicated region
        $region41: #{model_forward.3} parent=39 // pred_check
          %p540 = pneg %p98
        $region42: #{model_forward.3} parent=39 // pred_check_branch
          %542 = sbr.rel (%p540) target = $region44
        $region43: #{model_forward.3} parent=39 // pred_region
          %s543 = sand.u32 %s83, 1
          %s544 = scalar_lea.sflag [#allocation5], %s543
          %s545 = sand.u32 %s83, 1
          %s546 = smul.addr %s545, 16
          %s547 = scalar_lea.vmem [#allocation4], %s546
          %549 = dma.done %s544, 256
        $region44: #{model_forward.3} parent=39 // pred_fallthru
          _
        // Predicated region
        $region45: #{model_forward.3} parent=39 // pred_check
          %p550 = pneg %p124
        $region46: #{model_forward.3} parent=39 // pred_check_branch
          %552 = sbr.rel (%p550) target = $region48
        $region47: #{model_forward.3} parent=39 // pred_region
          %p553 = scmp.lt.s32.totalorder %s28, 1
          %s554 = scalar_select %p553, %s28, 1
          %s555 = smul.addr %s554, 2
          %s556 = scalar_lea.vmem %s4, %s555
        $region48: #{model_forward.3} parent=39 // pred_fallthru
          _
      $region40: #{model_forward.3} parent=5 // pred_fallthru
        _
    $region6: #{model_forward.3} parent=1 // loop_footer
      %s26 = sadd.s32 1, %s22
    $region7: #{model_forward.3} parent=1 // loop_footer_branch
      %21 = sbr.rel target = $region3
    $region8: #{model_forward.3} parent=1 // loop_exit
      _
    %557 = vsyncpa [#allocation5], 1
    %s558 = scalar_lea.sflag [#allocation5], 1
    %559 = vsyncpa %s558, 1

// kernel: reverse.3
$region0: #{reverse.3}
  %s0 = inlined_call_operand.vmem [shape: f32[2,256], index: 0, kind: input, shape index: {}]
  %s1 = inlined_call_operand.vmem [shape: f32[2,256], index: 1, kind: output, shape index: {}]
  %v2 = vlaneseq
  %v3 = vsub.s32 127, %v2
  %4 = vset.pattern.permute.xlu0 %v3
  $region1: #{reverse.3} parent=0
    #allocation0 [shape = 'u8[4096]{0}', space=vmem, size = 0x1000, scoped, tag = 'operand span for operand 0']
    #allocation1 [shape = 'u8[2048]{0}', space=vmem, size = 0x800, scoped, tag = 'packed  for operand 0']
    #allocation2 [shape = 'u8[4096]{0}', space=vmem, size = 0x1000, scoped, tag = 'operand span for operand 1']
    #allocation3 [shape = 'u8[2048]{0}', space=vmem, size = 0x800, scoped, tag = 'packed  for operand 1']
    loop: start=0, step=1, limit=4
    $region2: #{reverse.3} parent=1 // loop_pre_header
      _
    $region3: #{reverse.3} parent=1 // loop_header
      %s6 = sphi 0, %s10
      %p7 = scmp.ge.s32.totalorder %s6, 4
      %s13 = sphi 0, %s25
      %s14 = sphi 0, %s21
      %s15 = sphi 0, %s13
      %s16 = sphi 0, %s14
      %s17 = sphi 0, %s15
      %s18 = sphi 0, %s16
    $region4: #{reverse.3} parent=1 // loop_header_branch
      %9 = sbr.rel (%p7) target = $region8
    $region5: #{reverse.3} parent=1 // loop_body
      %s11 = ssub.s32 %s6, 1
      %s12 = ssub.s32 %s6, 2
      %s19 = sadd.s32 1, %s14
      %p20 = scmp.ge.s32.totalorder %s19, 2
      %s21 = scalar_select %p20, 0, %s19
      %s22 = sadd.s32 1, %s13
      %s23 = scalar_select %p20, %s22, %s13
      %p24 = scmp.ge.s32.totalorder %s23, 1
      %s25 = scalar_select %p24, 0, %s23
      %p26 = scmp.le.s32.totalorder 1, %s6
      %p27 = scmp.lt.s32.totalorder %s6, 3
      %p28 = pnand %p26, %p27
      %p29 = pneg %p28
      // Predicated region
      $region9: #{reverse.3} parent=5 // pred_check
        _
      $region10: #{reverse.3} parent=5 // pred_check_branch
        %31 = sbr.rel (%p28) target = $region12
      $region11: #{reverse.3} parent=5 // pred_region
        %s32 = ssub.s32 %s6, 1
      $region12: #{reverse.3} parent=5 // pred_fallthru
        _
      %p33 = scmp.lt.s32.totalorder %s6, 2
      // Predicated region
      $region13: #{reverse.3} parent=5 // pred_check
        %p34 = pneg %p33
      $region14: #{reverse.3} parent=5 // pred_check_branch
        %36 = sbr.rel (%p34) target = $region16
      $region15: #{reverse.3} parent=5 // pred_region
        %s37 = sand.u32 %s6, 1
        %s38 = sand.u32 %s6, 1
        %s39 = smul.addr %s38, 2
        %s40 = scalar_lea.vmem [#allocation1], %s39
        %s41 = ssub.s32 1, %s14
        %s42 = smul.addr %s13, 2
        %s43 = sadd.s32 %s41, %s42
        %s44 = smul.addr %s43, 2
        %s45 = scalar_lea.vmem %s0, %s44
        // Predicated region
        $region17: #{reverse.3} parent=15 // pred_check
          _
        $region18: #{reverse.3} parent=15 // pred_check_branch
          %47 = sbr.rel (0) target = $region20
        $region19: #{reverse.3} parent=15 // pred_region
          // Predicated region
          $region21: #{reverse.3} parent=19 // pred_check
            _
          $region22: #{reverse.3} parent=19 // pred_check_branch
            %49 = sbr.rel target = $region24
          $region23: #{reverse.3} parent=19 // pred_region
            // Predicated region
            $region36: #{reverse.3} parent=23 // pred_check
              _
            $region37: #{reverse.3} parent=23 // pred_check_branch
              %65 = sbr.rel (0) target = $region39
            $region38: #{reverse.3} parent=23 // pred_region
              %s67 = ssub.s32 4, 1
              loop: start=0, step=1, limit=1
              $region40: #{reverse.3} parent=38 // loop_pre_header
                _
              $region41: #{reverse.3} parent=38 // loop_header
                %s69 = sphi 0, %s73
                %p70 = scmp.ge.s32.totalorder %s69, 1
                %s74 = sphi %s45, %s45
                %s75 = sphi %s40, %s40
              $region42: #{reverse.3} parent=38 // loop_header_branch
                %72 = sbr.rel (%p70) target = $region46
              $region43: #{reverse.3} parent=38 // loop_body
                %v76 = vld [vmem:[%s74] sm:%s67]
                %77 = vst [vmem:[%s75] sm:%s67] %v76
              $region44: #{reverse.3} parent=38 // loop_footer
                %s73 = sadd.s32 1, %s69
              $region45: #{reverse.3} parent=38 // loop_footer_branch
                %68 = sbr.rel target = $region41
              $region46: #{reverse.3} parent=38 // loop_exit
                _
            $region39: #{reverse.3} parent=23 // pred_fallthru
              _
          $region24: #{reverse.3} parent=19 // pred_fallthru
            _
          // Predicated region
          $region25: #{reverse.3} parent=19 // pred_check
            _
          $region26: #{reverse.3} parent=19 // pred_check_branch
            %51 = sbr.rel (0) target = $region28
          $region27: #{reverse.3} parent=19 // pred_region
            %s53 = ssub.s32 4, 1
            loop: start=0, step=1, limit=1
            $region29: #{reverse.3} parent=27 // loop_pre_header
              _
            $region30: #{reverse.3} parent=27 // loop_header
              %s55 = sphi 0, %s59
              %p56 = scmp.ge.s32.totalorder %s55, 1
              %s60 = sphi %s45, %s45
              %s61 = sphi %s40, %s40
            $region31: #{reverse.3} parent=27 // loop_header_branch
              %58 = sbr.rel (%p56) target = $region35
            $region32: #{reverse.3} parent=27 // loop_body
              %v62 = vld [vmem:[%s60] sm:%s53]
              %63 = vst [vmem:[%s61] sm:%s53] %v62
            $region33: #{reverse.3} parent=27 // loop_footer
              %s59 = sadd.s32 1, %s55
            $region34: #{reverse.3} parent=27 // loop_footer_branch
              %54 = sbr.rel target = $region30
            $region35: #{reverse.3} parent=27 // loop_exit
              _
          $region28: #{reverse.3} parent=19 // pred_fallthru
            _
        $region20: #{reverse.3} parent=15 // pred_fallthru
          _
        %78 = vnop
      $region16: #{reverse.3} parent=5 // pred_fallthru
        _
      %p79 = scmp.le.s32.totalorder 1, %s6
      %p80 = scmp.lt.s32.totalorder %s6, 3
      %p81 = pnand %p79, %p80
      %p82 = pneg %p81
      // Predicated region
      $region47: #{reverse.3} parent=5 // pred_check
        _
      $region48: #{reverse.3} parent=5 // pred_check_branch
        %84 = sbr.rel (%p81) target = $region50
      $region49: #{reverse.3} parent=5 // pred_region
        %s85 = ssub.s32 %s6, 1
        %s86 = sand.u32 %s11, 1
        %s87 = sand.u32 %s11, 1
        %s88 = smul.addr %s87, 2
        %s89 = scalar_lea.vmem [#allocation1], %s88
        %s90 = sand.u32 %s11, 1
        %s91 = sand.u32 %s11, 1
        %s92 = smul.addr %s91, 2
        %s93 = scalar_lea.vmem [#allocation1], %s92
        %s94 = sand.u32 %s11, 1
        %s95 = sand.u32 %s11, 1
        %s96 = smul.addr %s95, 2
        %s97 = scalar_lea.vmem [#allocation3], %s96
        %s99 = ssub.s32 4, 1
        %v100 = vld [vmem:[%s93] sm:%s99]
        %101 = vst [vmem:[#allocation0] sm:%s99] %v100
        %s102 = ssub.s32 1, %s16
        %v103 = vld [vmem:[#allocation0] sm:$0xff]
        %104 = vperm.xlu0 %4, %v103
        %v105 = vpop.permute.xlu0 %104
        %106 = vst [vmem:[#allocation2] sm:$0xff] %v105
        %s108 = ssub.s32 4, 1
        %v109 = vld [vmem:[#allocation2] sm:%s108]
        %s111 = ssub.s32 4, 1
        %112 = vst [vmem:[%s97] sm:%s111] %v109
        %s113 = sand.u32 %s11, 1
        %s114 = sand.u32 %s11, 1
        %s115 = smul.addr %s114, 2
        %s116 = scalar_lea.vmem [#allocation3], %s115
        %s117 = smul.addr %s15, 2
        %s118 = sadd.s32 %s16, %s117
        %s119 = smul.addr %s118, 2
        %s120 = scalar_lea.vmem %s1, %s119
        // Predicated region
        $region51: #{reverse.3} parent=49 // pred_check
          _
        $region52: #{reverse.3} parent=49 // pred_check_branch
          %122 = sbr.rel (0) target = $region54
        $region53: #{reverse.3} parent=49 // pred_region
          // Predicated region
          $region55: #{reverse.3} parent=53 // pred_check
            _
          $region56: #{reverse.3} parent=53 // pred_check_branch
            %124 = sbr.rel target = $region58
          $region57: #{reverse.3} parent=53 // pred_region
            // Predicated region
            $region70: #{reverse.3} parent=57 // pred_check
              _
            $region71: #{reverse.3} parent=57 // pred_check_branch
              %140 = sbr.rel (0) target = $region73
            $region72: #{reverse.3} parent=57 // pred_region
              %s142 = ssub.s32 4, 1
              loop: start=0, step=1, limit=1
              $region74: #{reverse.3} parent=72 // loop_pre_header
                _
              $region75: #{reverse.3} parent=72 // loop_header
                %s144 = sphi 0, %s148
                %p145 = scmp.ge.s32.totalorder %s144, 1
                %s149 = sphi %s116, %s116
                %s150 = sphi %s120, %s120
              $region76: #{reverse.3} parent=72 // loop_header_branch
                %147 = sbr.rel (%p145) target = $region80
              $region77: #{reverse.3} parent=72 // loop_body
                %v151 = vld [vmem:[%s149] sm:%s142]
                %152 = vst [vmem:[%s150] sm:%s142] %v151
              $region78: #{reverse.3} parent=72 // loop_footer
                %s148 = sadd.s32 1, %s144
              $region79: #{reverse.3} parent=72 // loop_footer_branch
                %143 = sbr.rel target = $region75
              $region80: #{reverse.3} parent=72 // loop_exit
                _
            $region73: #{reverse.3} parent=57 // pred_fallthru
              _
          $region58: #{reverse.3} parent=53 // pred_fallthru
            _
          // Predicated region
          $region59: #{reverse.3} parent=53 // pred_check
            _
          $region60: #{reverse.3} parent=53 // pred_check_branch
            %126 = sbr.rel (0) target = $region62
          $region61: #{reverse.3} parent=53 // pred_region
            %s128 = ssub.s32 4, 1
            loop: start=0, step=1, limit=1
            $region63: #{reverse.3} parent=61 // loop_pre_header
              _
            $region64: #{reverse.3} parent=61 // loop_header
              %s130 = sphi 0, %s134
              %p131 = scmp.ge.s32.totalorder %s130, 1
              %s135 = sphi %s116, %s116
              %s136 = sphi %s120, %s120
            $region65: #{reverse.3} parent=61 // loop_header_branch
              %133 = sbr.rel (%p131) target = $region69
            $region66: #{reverse.3} parent=61 // loop_body
              %v137 = vld [vmem:[%s135] sm:%s128]
              %138 = vst [vmem:[%s136] sm:%s128] %v137
            $region67: #{reverse.3} parent=61 // loop_footer
              %s134 = sadd.s32 1, %s130
            $region68: #{reverse.3} parent=61 // loop_footer_branch
              %129 = sbr.rel target = $region64
            $region69: #{reverse.3} parent=61 // loop_exit
              _
          $region62: #{reverse.3} parent=53 // pred_fallthru
            _
        $region54: #{reverse.3} parent=49 // pred_fallthru
          _
        %153 = vnop
      $region50: #{reverse.3} parent=5 // pred_fallthru
        _
      %p154 = scmp.le.s32.totalorder 2, %s6
      // Predicated region
      $region81: #{reverse.3} parent=5 // pred_check
        %p155 = pneg %p154
      $region82: #{reverse.3} parent=5 // pred_check_branch
        %157 = sbr.rel (%p155) target = $region84
      $region83: #{reverse.3} parent=5 // pred_region
        %s158 = ssub.s32 %s6, 2
        %s159 = sand.u32 %s12, 1
        %s160 = sand.u32 %s12, 1
        %s161 = smul.addr %s160, 2
        %s162 = scalar_lea.vmem [#allocation3], %s161
      $region84: #{reverse.3} parent=5 // pred_fallthru
        _
    $region6: #{reverse.3} parent=1 // loop_footer
      %s10 = sadd.s32 1, %s6
    $region7: #{reverse.3} parent=1 // loop_footer_branch
      %5 = sbr.rel target = $region3
    $region8: #{reverse.3} parent=1 // loop_exit
      _

</llo_original>
